<compile_context>
chip_gen: v6e
topology: v6e:2x2x1
jax: 0.10.0
libtpu: 0.0.40
codegen_flags: <defaults>
</compile_context>

<pallas_src>
import functools

import jax
import jax.numpy as jnp
from jax import lax
from jax.experimental import pallas as pl
from jax.experimental.pallas import tpu as pltpu

C1 = 64     # conv1 out channels
C2 = 128    # conv2 out channels
KH = KW = 3


def _brm_kernel(x_taps_ref, mask_ref, w1_ref, b1_ref, w2_ref, b2_ref,
                w3_ref, b3_ref, out_ref, *, H, W):
    # x_taps_ref: (9, L)     im2col of the zero-padded 1-channel input, L = nb*H*W
    # mask_ref:   (9, L)     0/1 validity mask per tap & pixel (zero padding)
    # w1_ref:     (64, 9)    conv1 weights, [cout, ky*3+kx]
    # b1_ref:     (64, 1)
    # w2_ref:     (128, 576) conv2 weights, [cout, (ky*3+kx)*64 + cin]
    # b2_ref:     (128, 1)
    # w3_ref:     (128, 1)   conv3 (1x1) weights
    # b3_ref:     (1, 1)
    # out_ref:    (1, L)     sigmoid output, lane-dense
    L = out_ref.shape[1]

    # ---- conv1 (1 -> 64, 3x3, pad 1) + ReLU: single MXU matmul over 9 taps ----
    h1 = jnp.dot(w1_ref[...], x_taps_ref[...],
                 preferred_element_type=jnp.float32)               # (64, L)
    h1 = jnp.maximum(h1 + b1_ref[...], 0.0)

    # ---- conv2 (64 -> 128, 3x3, pad 1) + ReLU ----
    # Build the 3x3 im2col of h1 with lane rolls + masks (wrapped / out-of-image
    # source pixels are exactly the masked ones), then one deep matmul (K=576).
    taps = []
    for ky in range(KH):
        for kx in range(KW):
            t = ky * KW + kx
            s = (ky - 1) * W + (kx - 1)       # flattened pixel shift of this tap
            if s == 0:
                rolled = h1
            else:
                rolled = pltpu.roll(h1, shift=(-s) % L, axis=1)    # out[p]=h1[p+s]
            taps.append(rolled * mask_ref[t:t + 1, :])
    patches = jnp.concatenate(taps, axis=0)                        # (576, L)

    h2 = jnp.dot(w2_ref[...], patches,
                 preferred_element_type=jnp.float32)               # (128, L)
    h2 = jnp.maximum(h2 + b2_ref[...], 0.0)

    # ---- conv3 (128 -> 1, 1x1) + sigmoid: VPU multiply + sublane reduce ----
    logits = jnp.sum(h2 * w3_ref[...], axis=0, keepdims=True) + b3_ref[...]
    out_ref[...] = jax.nn.sigmoid(logits).astype(out_ref.dtype)    # (1, L)


def boundary_refinement(x_nchw, params, *, batch_block=None):
    """x_nchw: (N, 1, H, W) float32 -> (N, 1, H, W) float32."""
    w1, b1, w2, b2, w3, b3 = params
    N, C, H, W = x_nchw.shape
    assert C == 1
    HW = H * W

    # Batch elements per grid step: big enough to amortize the ~0.35us/step
    # overhead and feed the MXU a wide N, small enough that the per-step
    # working set (~800 f32 values per pixel) stays well inside scoped VMEM on
    # every generation (v5e 16MiB default scoped, v7x 64MiB physical).
    if batch_block is None:
        budget_pixels = (6 << 20) // (800 * 4)          # ~6 MiB working set
        batch_block = max(1, min(N, budget_pixels // max(HW, 1)))
    nb = 0
    for b in range(min(batch_block, N), 0, -1):
        # keep output/input blocks lane-dense (multiple of 128 lanes) unless a
        # single block covers the whole array.
        if N % b == 0 and (b == N or (b * HW) % 128 == 0):
            nb = b
            break
    assert nb > 0
    L = nb * HW

    # im2col of the zero-padded 1-channel input (layout prep only; all conv
    # arithmetic happens inside the kernel).
    x = x_nchw[:, 0]                                     # (N, H, W)
    xp = jnp.pad(x, ((0, 0), (1, 1), (1, 1)))            # (N, H+2, W+2)
    x_taps = jnp.stack(
        [xp[:, ky:ky + H, kx:kx + W] for ky in range(KH) for kx in range(KW)],
        axis=0).reshape(KH * KW, N * HW)                 # (9, N*H*W)

    # 0/1 validity masks of the 9 conv2 taps (implements the zero padding),
    # tiled over the nb batch elements handled per grid step.
    hh = jnp.arange(H).reshape(H, 1)
    ww = jnp.arange(W).reshape(1, W)
    mask_rows = []
    for ky in range(KH):
        for kx in range(KW):
            dy, dx = ky - 1, kx - 1
            mask_rows.append((hh + dy >= 0) & (hh + dy < H) &
                             (ww + dx >= 0) & (ww + dx < W))
    mask = jnp.stack(mask_rows, axis=0).astype(jnp.float32).reshape(KH * KW, 1, HW)
    mask = jnp.tile(mask, (1, nb, 1)).reshape(KH * KW, L)

    # Weight layouts: output channels on sublanes, contraction dim on lanes.
    w1r = w1.reshape(KH * KW, C1).T                      # (64, 9)
    b1r = b1.reshape(C1, 1)
    w2r = w2.reshape(KH * KW * C1, C2).T                 # (128, 576)
    b2r = b2.reshape(C2, 1)
    w3r = w3.reshape(C2, 1)
    b3r = b3.reshape(1, 1)

    kernel = functools.partial(_brm_kernel, H=H, W=W)

    out = pl.pallas_call(
        kernel,
        out_shape=jax.ShapeDtypeStruct((1, N * HW), jnp.float32),
        grid_spec=pltpu.PrefetchScalarGridSpec(
            num_scalar_prefetch=0,
            grid=(N // nb,),
            in_specs=[
                pl.BlockSpec((KH * KW, L), lambda i: (0, i)),          # x taps
                pl.BlockSpec((KH * KW, L), lambda i: (0, 0)),          # masks
                pl.BlockSpec((C1, KH * KW), lambda i: (0, 0)),         # w1
                pl.BlockSpec((C1, 1), lambda i: (0, 0)),               # b1
                pl.BlockSpec((C2, KH * KW * C1), lambda i: (0, 0)),    # w2
                pl.BlockSpec((C2, 1), lambda i: (0, 0)),               # b2
                pl.BlockSpec((C2, 1), lambda i: (0, 0)),               # w3
                pl.BlockSpec((1, 1), lambda i: (0, 0)),                # b3
            ],
            out_specs=pl.BlockSpec((1, L), lambda i: (0, i)),
        ),
        compiler_params=pltpu.CompilerParams(
            dimension_semantics=("parallel",)),
    )(x_taps, mask, w1r, b1r, w2r, b2r, w3r, b3r)

    return out.reshape(N, H, W)[:, None, :, :]           # (N, 1, H, W)


def reference_forward(x_nchw, params):
    """Pure-JAX reference with the same math as the PyTorch module."""
    w1, b1, w2, b2, w3, b3 = params
    dn = ('NHWC', 'HWIO', 'NHWC')
    x = jnp.transpose(x_nchw, (0, 2, 3, 1))
    h = lax.conv_general_dilated(x, w1, (1, 1), 'SAME', dimension_numbers=dn)
    h = jax.nn.relu(h + b1)
    h = lax.conv_general_dilated(h, w2, (1, 1), 'SAME', dimension_numbers=dn)
    h = jax.nn.relu(h + b2)
    # 1x1 conv == per-pixel channel dot product (exact f32, same as the
    # kernel's VPU conv3, so the comparison tolerance can stay tight).
    h = jax.nn.sigmoid(jnp.sum(h * w3[:, 0], axis=-1, keepdims=True) + b3)
    return jnp.transpose(h, (0, 3, 1, 2))


if __name__ == "__main__":
    key = jax.random.PRNGKey(0)
    k1, k2, k3, k4, k5, k6, kx = jax.random.split(key, 7)

    # Deterministic synthetic parameters (HWIO layout for conv weights).
    w1 = jax.random.normal(k1, (KH, KW, 1, C1), jnp.float32) * 0.2
    b1 = jax.random.normal(k2, (C1,), jnp.float32) * 0.1
    w2 = jax.random.normal(k3, (KH, KW, C1, C2), jnp.float32) * 0.05
    b2 = jax.random.normal(k4, (C2,), jnp.float32) * 0.1
    w3 = jax.random.normal(k5, (C2, 1), jnp.float32) * 0.1
    b3 = jax.random.normal(k6, (1,), jnp.float32) * 0.1
    params = (w1, b1, w2, b2, w3, b3)

    x = jax.random.normal(kx, (2, 1, 16, 16), jnp.float32)

    y = jax.block_until_ready(boundary_refinement(x, params))
    y_ref = jax.block_until_ready(reference_forward(x, params))

    assert y.shape == (2, 1, 16, 16)
    # MXU matmuls run at the TPU default f32 dot precision (same path the conv
    # reference uses); tolerance leaves margin for accumulation-order diffs.
    assert jnp.allclose(y, y_ref, atol=1e-4, rtol=1e-4), (
        float(jnp.max(jnp.abs(y - y_ref))))

    print("KERNEL_OK")
</pallas_src>

<mosaic_0001>
module attributes {stable_mosaic.version = 11 : i64} {
  func.func @_brm_kernel(%arg0: i32, %arg1: memref<9x512xf32, #tpu.memory_space<vmem>>, %arg2: memref<9x512xf32, #tpu.memory_space<vmem>>, %arg3: memref<64x9xf32, #tpu.memory_space<vmem>>, %arg4: memref<64x1xf32, #tpu.memory_space<vmem>>, %arg5: memref<128x576xf32, #tpu.memory_space<vmem>>, %arg6: memref<128x1xf32, #tpu.memory_space<vmem>>, %arg7: memref<128x1xf32, #tpu.memory_space<vmem>>, %arg8: memref<1x1xf32, #tpu.memory_space<vmem>>, %arg9: memref<1x512xf32, #tpu.memory_space<vmem>>) attributes {dimension_semantics = [#tpu.dimension_semantics<parallel>], iteration_bounds = array<i64: 1>, scalar_prefetch = 0 : i64, scratch_operands = 0 : i64, tpu.core_type = #tpu.core_type<tc>, window_params = [{transform_indices = @transform_0, window_bounds = array<i64: 9, 512>}, {pipeline_mode = #tpu.pipeline_mode<synchronous>, transform_indices = @transform_1, window_bounds = array<i64: 9, 512>}, {pipeline_mode = #tpu.pipeline_mode<synchronous>, transform_indices = @transform_2, window_bounds = array<i64: 64, 9>}, {pipeline_mode = #tpu.pipeline_mode<synchronous>, transform_indices = @transform_3, window_bounds = array<i64: 64, 1>}, {pipeline_mode = #tpu.pipeline_mode<synchronous>, transform_indices = @transform_4, window_bounds = array<i64: 128, 576>}, {pipeline_mode = #tpu.pipeline_mode<synchronous>, transform_indices = @transform_5, window_bounds = array<i64: 128, 1>}, {pipeline_mode = #tpu.pipeline_mode<synchronous>, transform_indices = @transform_6, window_bounds = array<i64: 128, 1>}, {pipeline_mode = #tpu.pipeline_mode<synchronous>, transform_indices = @transform_7, window_bounds = array<i64: 1, 1>}, {transform_indices = @transform_8, window_bounds = array<i64: 1, 512>}]} {
    %c0 = arith.constant 0 : index
    %c0_0 = arith.constant 0 : index
    %0 = vector.load %arg3[%c0, %c0_0] : memref<64x9xf32, #tpu.memory_space<vmem>>, vector<64x9xf32>
    %c0_1 = arith.constant 0 : index
    %c0_2 = arith.constant 0 : index
    %1 = vector.load %arg1[%c0_1, %c0_2] : memref<9x512xf32, #tpu.memory_space<vmem>>, vector<9x512xf32>
    %cst = arith.constant dense<0.000000e+00> : vector<64x512xf32>
    %2 = tpu.matmul %0, %1, %cst {dimension_numbers = #tpu.dot_dimension_numbers<[1], [0], [0], [1], [0, 0, 1, 1], [], []>} : vector<64x9xf32>, vector<9x512xf32>, vector<64x512xf32> -> vector<64x512xf32>
    %c0_3 = arith.constant 0 : index
    %c0_4 = arith.constant 0 : index
    %3 = vector.load %arg4[%c0_3, %c0_4] : memref<64x1xf32, #tpu.memory_space<vmem>>, vector<64x1xf32>
    %4 = vector.broadcast %3 : vector<64x1xf32> to vector<64x512xf32>
    %5 = arith.addf %2, %4 : vector<64x512xf32>
    %cst_5 = arith.constant 0.000000e+00 : f32
    %6 = vector.broadcast %cst_5 : f32 to vector<64x512xf32>
    %7 = arith.maximumf %5, %6 : vector<64x512xf32>
    %c17_i32 = arith.constant 17 : i32
    %8 = tpu.dynamic_rotate %7 by %c17_i32 dim 1 : vector<64x512xf32>, i32 -> vector<64x512xf32>
    %c0_6 = arith.constant 0 : index
    %c0_7 = arith.constant 0 : index
    %9 = vector.load %arg2[%c0_6, %c0_7] : memref<9x512xf32, #tpu.memory_space<vmem>>, vector<1x512xf32>
    %10 = vector.broadcast %9 : vector<1x512xf32> to vector<64x512xf32>
    %11 = arith.mulf %8, %10 : vector<64x512xf32>
    %c16_i32 = arith.constant 16 : i32
    %12 = tpu.dynamic_rotate %7 by %c16_i32 dim 1 : vector<64x512xf32>, i32 -> vector<64x512xf32>
    %c1 = arith.constant 1 : index
    %c0_8 = arith.constant 0 : index
    %13 = vector.load %arg2[%c1, %c0_8] : memref<9x512xf32, #tpu.memory_space<vmem>>, vector<1x512xf32>
    %14 = vector.broadcast %13 : vector<1x512xf32> to vector<64x512xf32>
    %15 = arith.mulf %12, %14 : vector<64x512xf32>
    %c15_i32 = arith.constant 15 : i32
    %16 = tpu.dynamic_rotate %7 by %c15_i32 dim 1 : vector<64x512xf32>, i32 -> vector<64x512xf32>
    %c2 = arith.constant 2 : index
    %c0_9 = arith.constant 0 : index
    %17 = vector.load %arg2[%c2, %c0_9] : memref<9x512xf32, #tpu.memory_space<vmem>>, vector<1x512xf32>
    %18 = vector.broadcast %17 : vector<1x512xf32> to vector<64x512xf32>
    %19 = arith.mulf %16, %18 : vector<64x512xf32>
    %c1_i32 = arith.constant 1 : i32
    %20 = tpu.dynamic_rotate %7 by %c1_i32 dim 1 : vector<64x512xf32>, i32 -> vector<64x512xf32>
    %c3 = arith.constant 3 : index
    %c0_10 = arith.constant 0 : index
    %21 = vector.load %arg2[%c3, %c0_10] : memref<9x512xf32, #tpu.memory_space<vmem>>, vector<1x512xf32>
    %22 = vector.broadcast %21 : vector<1x512xf32> to vector<64x512xf32>
    %23 = arith.mulf %20, %22 : vector<64x512xf32>
    %c4 = arith.constant 4 : index
    %c0_11 = arith.constant 0 : index
    %24 = vector.load %arg2[%c4, %c0_11] : memref<9x512xf32, #tpu.memory_space<vmem>>, vector<1x512xf32>
    %25 = vector.broadcast %24 : vector<1x512xf32> to vector<64x512xf32>
    %26 = arith.mulf %7, %25 : vector<64x512xf32>
    %c511_i32 = arith.constant 511 : i32
    %27 = tpu.dynamic_rotate %7 by %c511_i32 dim 1 : vector<64x512xf32>, i32 -> vector<64x512xf32>
    %c5 = arith.constant 5 : index
    %c0_12 = arith.constant 0 : index
    %28 = vector.load %arg2[%c5, %c0_12] : memref<9x512xf32, #tpu.memory_space<vmem>>, vector<1x512xf32>
    %29 = vector.broadcast %28 : vector<1x512xf32> to vector<64x512xf32>
    %30 = arith.mulf %27, %29 : vector<64x512xf32>
    %c497_i32 = arith.constant 497 : i32
    %31 = tpu.dynamic_rotate %7 by %c497_i32 dim 1 : vector<64x512xf32>, i32 -> vector<64x512xf32>
    %c6 = arith.constant 6 : index
    %c0_13 = arith.constant 0 : index
    %32 = vector.load %arg2[%c6, %c0_13] : memref<9x512xf32, #tpu.memory_space<vmem>>, vector<1x512xf32>
    %33 = vector.broadcast %32 : vector<1x512xf32> to vector<64x512xf32>
    %34 = arith.mulf %31, %33 : vector<64x512xf32>
    %c496_i32 = arith.constant 496 : i32
    %35 = tpu.dynamic_rotate %7 by %c496_i32 dim 1 : vector<64x512xf32>, i32 -> vector<64x512xf32>
    %c7 = arith.constant 7 : index
    %c0_14 = arith.constant 0 : index
    %36 = vector.load %arg2[%c7, %c0_14] : memref<9x512xf32, #tpu.memory_space<vmem>>, vector<1x512xf32>
    %37 = vector.broadcast %36 : vector<1x512xf32> to vector<64x512xf32>
    %38 = arith.mulf %35, %37 : vector<64x512xf32>
    %c495_i32 = arith.constant 495 : i32
    %39 = tpu.dynamic_rotate %7 by %c495_i32 dim 1 : vector<64x512xf32>, i32 -> vector<64x512xf32>
    %c8 = arith.constant 8 : index
    %c0_15 = arith.constant 0 : index
    %40 = vector.load %arg2[%c8, %c0_15] : memref<9x512xf32, #tpu.memory_space<vmem>>, vector<1x512xf32>
    %41 = vector.broadcast %40 : vector<1x512xf32> to vector<64x512xf32>
    %42 = arith.mulf %39, %41 : vector<64x512xf32>
    %43 = tpu.concatenate %11, %15, %19, %23, %26, %30, %34, %38, %42 in 0 : vector<64x512xf32>, vector<64x512xf32>, vector<64x512xf32>, vector<64x512xf32>, vector<64x512xf32>, vector<64x512xf32>, vector<64x512xf32>, vector<64x512xf32>, vector<64x512xf32> -> vector<576x512xf32>
    %c0_16 = arith.constant 0 : index
    %c0_17 = arith.constant 0 : index
    %44 = vector.load %arg5[%c0_16, %c0_17] : memref<128x576xf32, #tpu.memory_space<vmem>>, vector<128x576xf32>
    %cst_18 = arith.constant dense<0.000000e+00> : vector<128x512xf32>
    %45 = tpu.matmul %44, %43, %cst_18 {dimension_numbers = #tpu.dot_dimension_numbers<[1], [0], [0], [1], [0, 0, 1, 1], [], []>} : vector<128x576xf32>, vector<576x512xf32>, vector<128x512xf32> -> vector<128x512xf32>
    %c0_19 = arith.constant 0 : index
    %c0_20 = arith.constant 0 : index
    %46 = vector.load %arg6[%c0_19, %c0_20] : memref<128x1xf32, #tpu.memory_space<vmem>>, vector<128x1xf32>
    %47 = vector.broadcast %46 : vector<128x1xf32> to vector<128x512xf32>
    %48 = arith.addf %45, %47 : vector<128x512xf32>
    %cst_21 = arith.constant 0.000000e+00 : f32
    %49 = vector.broadcast %cst_21 : f32 to vector<128x512xf32>
    %50 = arith.maximumf %48, %49 : vector<128x512xf32>
    %c0_22 = arith.constant 0 : index
    %c0_23 = arith.constant 0 : index
    %51 = vector.load %arg7[%c0_22, %c0_23] : memref<128x1xf32, #tpu.memory_space<vmem>>, vector<128x1xf32>
    %52 = vector.broadcast %51 : vector<128x1xf32> to vector<128x512xf32>
    %53 = arith.mulf %50, %52 : vector<128x512xf32>
    %cst_24 = arith.constant dense<0.000000e+00> : vector<512xf32>
    %54 = vector.multi_reduction <add>, %53, %cst_24 [0] : vector<128x512xf32> to vector<512xf32>
    %55 = vector.shape_cast %54 : vector<512xf32> to vector<1x512xf32>
    %c0_25 = arith.constant 0 : index
    %c0_26 = arith.constant 0 : index
    %56 = vector.load %arg8[%c0_25, %c0_26] : memref<1x1xf32, #tpu.memory_space<vmem>>, vector<1x1xf32>
    %57 = vector.broadcast %56 : vector<1x1xf32> to vector<1x512xf32>
    %58 = arith.addf %55, %57 : vector<1x512xf32>
    %59 = arith.negf %58 : vector<1x512xf32>
    %60 = math.exp %59 : vector<1x512xf32>
    %cst_27 = arith.constant 1.000000e+00 : f32
    %61 = vector.broadcast %cst_27 : f32 to vector<1x512xf32>
    %62 = arith.addf %61, %60 : vector<1x512xf32>
    %63 = arith.divf %61, %62 : vector<1x512xf32>
    %c0_28 = arith.constant 0 : index
    %c0_29 = arith.constant 0 : index
    %64 = vector.load %arg9[%c0_28, %c0_29] : memref<1x512xf32, #tpu.memory_space<vmem>>, vector<1x512xf32>
    tpu.vector_store %arg9[%c0_28, %c0_29], %63 {strides = array<i32>} : memref<1x512xf32, #tpu.memory_space<vmem>>, vector<1x512xf32>,
    return
  }
  func.func @transform_0(%arg0: i32) -> (i32, i32) {
    %c0_i32 = arith.constant 0 : i32
    %c0_i32_0 = arith.constant 0 : i32
    return %c0_i32, %arg0 : i32, i32
  }
  func.func @transform_1(%arg0: i32) -> (i32, i32) {
    %c0_i32 = arith.constant 0 : i32
    %c0_i32_0 = arith.constant 0 : i32
    %c0_i32_1 = arith.constant 0 : i32
    return %c0_i32, %c0_i32_0 : i32, i32
  }
  func.func @transform_2(%arg0: i32) -> (i32, i32) {
    %c0_i32 = arith.constant 0 : i32
    %c0_i32_0 = arith.constant 0 : i32
    %c0_i32_1 = arith.constant 0 : i32
    return %c0_i32, %c0_i32_0 : i32, i32
  }
  func.func @transform_3(%arg0: i32) -> (i32, i32) {
    %c0_i32 = arith.constant 0 : i32
    %c0_i32_0 = arith.constant 0 : i32
    %c0_i32_1 = arith.constant 0 : i32
    return %c0_i32, %c0_i32_0 : i32, i32
  }
  func.func @transform_4(%arg0: i32) -> (i32, i32) {
    %c0_i32 = arith.constant 0 : i32
    %c0_i32_0 = arith.constant 0 : i32
    %c0_i32_1 = arith.constant 0 : i32
    return %c0_i32, %c0_i32_0 : i32, i32
  }
  func.func @transform_5(%arg0: i32) -> (i32, i32) {
    %c0_i32 = arith.constant 0 : i32
    %c0_i32_0 = arith.constant 0 : i32
    %c0_i32_1 = arith.constant 0 : i32
    return %c0_i32, %c0_i32_0 : i32, i32
  }
  func.func @transform_6(%arg0: i32) -> (i32, i32) {
    %c0_i32 = arith.constant 0 : i32
    %c0_i32_0 = arith.constant 0 : i32
    %c0_i32_1 = arith.constant 0 : i32
    return %c0_i32, %c0_i32_0 : i32, i32
  }
  func.func @transform_7(%arg0: i32) -> (i32, i32) {
    %c0_i32 = arith.constant 0 : i32
    %c0_i32_0 = arith.constant 0 : i32
    %c0_i32_1 = arith.constant 0 : i32
    return %c0_i32, %c0_i32_0 : i32, i32
  }
  func.func @transform_8(%arg0: i32) -> (i32, i32) {
    %c0_i32 = arith.constant 0 : i32
    %c0_i32_0 = arith.constant 0 : i32
    return %c0_i32, %arg0 : i32, i32
  }
}

</mosaic_0001>

<llo_original>
// kernel: tpu_custom_call.1
$region0: #{tpu_custom_call.1}
  #allocation0 [shape = 'u32[]', space=smem, size = 0x4, offset = 0x4, fixed_abs, tag = 'smem constant byte address 0x4 - core index']
  #allocation1 [shape = 'u32[144,128]{1,0:T(1,128)}', space=vmem, size = 0x12000, scoped, tag = 'internal scratch']
  #allocation2 [shape = 'f32[1,1]{1,0:T(1,128)S(1)}', space=vmem, size = 0x200, scoped, tag = 'scoped memory for tpu_custom_call.1']
  %s0 = inlined_call_operand.vmem [shape: f32[9,512], index: 0, kind: input, shape index: {}]
  %s1 = inlined_call_operand.vmem [shape: f32[9,512], index: 1, kind: input, shape index: {}]
  %s2 = inlined_call_operand.vmem [shape: f32[64,9], index: 2, kind: input, shape index: {}]
  %s3 = inlined_call_operand.vmem [shape: f32[64,1], index: 3, kind: input, shape index: {}]
  %s4 = inlined_call_operand.vmem [shape: f32[128,576], index: 4, kind: input, shape index: {}]
  %s5 = inlined_call_operand.vmem [shape: f32[128,1], index: 5, kind: input, shape index: {}]
  %s6 = inlined_call_operand.vmem [shape: f32[128,1], index: 6, kind: input, shape index: {}]
  %s7 = inlined_call_operand.<no memory space> [shape: f32[1,1], index: 7, kind: input, shape index: {}]
  %s8 = inlined_call_operand.hbm [shape: f32[1,512], index: 8, kind: output, shape index: {}]
  %s9 = sld [smem:[#allocation0]]
  $region42: #{tpu_custom_call.1} parent=0
    _
  %s11 = ssub.s32 1, %s9
  %s12 = scalar_select 0, %s11, %s9
  %v13 = vstv %s7
  %14 = vst [vmem:[#allocation2] sm:$0x1] %v13
  $region1: #{tpu_custom_call.1} parent=0
    #allocation3 [shape = 'u8[2048]{0}', space=vmem, size = 0x800, scoped, tag = 'output window, operand 0, single buffered']
    #allocation4 [shape = 's32[1]{0}', space=sflag, size = 0x4, scoped, tag = 'scoped memory for tpu_custom_call.1']
    %15 = vsyncpa [#allocation4], 0
    // Predicated region
    $region2: #{tpu_custom_call.1} parent=1 // pred_check
      _
    $region3: #{tpu_custom_call.1} parent=1 // pred_check_branch
      %17 = sbr.rel (0) target = $region5
    $region4: #{tpu_custom_call.1} parent=1 // pred_region
      _
    $region5: #{tpu_custom_call.1} parent=1 // pred_fallthru
      _
    // Predicated region
    $region6: #{tpu_custom_call.1} parent=1 // pred_check
      _
    $region7: #{tpu_custom_call.1} parent=1 // pred_check_branch
      %19 = sbr.rel (0) target = $region9
    $region8: #{tpu_custom_call.1} parent=1 // pred_region
      _
    $region9: #{tpu_custom_call.1} parent=1 // pred_fallthru
      _
    // Predicated region
    $region10: #{tpu_custom_call.1} parent=1 // pred_check
      _
    $region11: #{tpu_custom_call.1} parent=1 // pred_check_branch
      %21 = sbr.rel (0) target = $region13
    $region12: #{tpu_custom_call.1} parent=1 // pred_region
      _
    $region13: #{tpu_custom_call.1} parent=1 // pred_fallthru
      _
    // Predicated region
    $region14: #{tpu_custom_call.1} parent=1 // pred_check
      _
    $region15: #{tpu_custom_call.1} parent=1 // pred_check_branch
      %23 = sbr.rel (0) target = $region17
    $region16: #{tpu_custom_call.1} parent=1 // pred_region
      _
    $region17: #{tpu_custom_call.1} parent=1 // pred_fallthru
      _
    // Predicated region
    $region18: #{tpu_custom_call.1} parent=1 // pred_check
      _
    $region19: #{tpu_custom_call.1} parent=1 // pred_check_branch
      %25 = sbr.rel (0) target = $region21
    $region20: #{tpu_custom_call.1} parent=1 // pred_region
      _
    $region21: #{tpu_custom_call.1} parent=1 // pred_fallthru
      _
    // Predicated region
    $region22: #{tpu_custom_call.1} parent=1 // pred_check
      _
    $region23: #{tpu_custom_call.1} parent=1 // pred_check_branch
      %27 = sbr.rel (0) target = $region25
    $region24: #{tpu_custom_call.1} parent=1 // pred_region
      _
    $region25: #{tpu_custom_call.1} parent=1 // pred_fallthru
      _
    // Predicated region
    $region26: #{tpu_custom_call.1} parent=1 // pred_check
      _
    $region27: #{tpu_custom_call.1} parent=1 // pred_check_branch
      %29 = sbr.rel (0) target = $region29
    $region28: #{tpu_custom_call.1} parent=1 // pred_region
      _
    $region29: #{tpu_custom_call.1} parent=1 // pred_fallthru
      _
    // Predicated region
    $region30: #{tpu_custom_call.1} parent=1 // pred_check
      _
    $region31: #{tpu_custom_call.1} parent=1 // pred_check_branch
      %31 = sbr.rel (0) target = $region33
    $region32: #{tpu_custom_call.1} parent=1 // pred_region
      _
    $region33: #{tpu_custom_call.1} parent=1 // pred_fallthru
      _
    %v32 = vld [vmem:[%s2] sm:$0xff]
    %v33 = vld [vmem:[%s2 + $0x8] sm:$0xff]
    %v34 = vld [vmem:[%s2 + $0x10] sm:$0xff]
    %v35 = vld [vmem:[%s2 + $0x18] sm:$0xff]
    %v36 = vld [vmem:[%s2 + $0x20] sm:$0xff]
    %v37 = vld [vmem:[%s2 + $0x28] sm:$0xff]
    %v38 = vld [vmem:[%s2 + $0x30] sm:$0xff]
    %v39 = vld [vmem:[%s2 + $0x38] sm:$0xff]
    %v40 = vld [vmem:[%s0] sm:$0xff]
    %v41 = vld [vmem:[%s0 + $0x8] sm:$0xff]
    %v42 = vld [vmem:[%s0 + $0x10] sm:$0xff]
    %v43 = vld [vmem:[%s0 + $0x18] sm:$0xff]
    %v44 = vld [vmem:[%s0 + $0x20] sm:$0x1]
    %v45 = vld [vmem:[%s0 + $0x28] sm:$0x1]
    %v46 = vld [vmem:[%s0 + $0x30] sm:$0x1]
    %v47 = vld [vmem:[%s0 + $0x38] sm:$0x1]
    %v48 = vld [vmem:[%s3] sm:$0xff]
    %v49 = vld [vmem:[%s3 + $0x8] sm:$0xff]
    %v50 = vld [vmem:[%s3 + $0x10] sm:$0xff]
    %v51 = vld [vmem:[%s3 + $0x18] sm:$0xff]
    %v52 = vld [vmem:[%s3 + $0x20] sm:$0xff]
    %v53 = vld [vmem:[%s3 + $0x28] sm:$0xff]
    %v54 = vld [vmem:[%s3 + $0x30] sm:$0xff]
    %v55 = vld [vmem:[%s3 + $0x38] sm:$0xff]
    %57 = vset.pattern.permute.xlu0 0
    %58 = vperm.xlu0 %57, %v48
    %v59 = vpop.permute.xlu0 %58
    %62 = vset.pattern.permute.xlu0 0
    %63 = vperm.xlu0 %62, %v49
    %v64 = vpop.permute.xlu0 %63
    %67 = vset.pattern.permute.xlu0 0
    %68 = vperm.xlu0 %67, %v50
    %v69 = vpop.permute.xlu0 %68
    %72 = vset.pattern.permute.xlu0 0
    %73 = vperm.xlu0 %72, %v51
    %v74 = vpop.permute.xlu0 %73
    %77 = vset.pattern.permute.xlu0 0
    %78 = vperm.xlu0 %77, %v52
    %v79 = vpop.permute.xlu0 %78
    %82 = vset.pattern.permute.xlu0 0
    %83 = vperm.xlu0 %82, %v53
    %v84 = vpop.permute.xlu0 %83
    %87 = vset.pattern.permute.xlu0 0
    %88 = vperm.xlu0 %87, %v54
    %v89 = vpop.permute.xlu0 %88
    %92 = vset.pattern.permute.xlu0 0
    %93 = vperm.xlu0 %92, %v55
    %v94 = vpop.permute.xlu0 %93
    %vm96 = vcmask 72704
    %v98 = vsel %vm96, %v32, 0
    %v101 = vsel %vm96, %v33, 0
    %v104 = vsel %vm96, %v34, 0
    %v107 = vsel %vm96, %v35, 0
    %v110 = vsel %vm96, %v36, 0
    %v113 = vsel %vm96, %v37, 0
    %v116 = vsel %vm96, %v38, 0
    %v119 = vsel %vm96, %v39, 0
    %vm121 = vcmask 1040384
    %v123 = vsel %vm121, %v44, 0
    %v126 = vsel %vm121, %v45, 0
    %v129 = vsel %vm121, %v46, 0
    %v132 = vsel %vm121, %v47, 0
    %134 = vmatprep.subr.mxu0 0.0
    %135 = vmatpush1.msra.mxu0 0.0
    %136 = vmatprep.subr.mxu0 0.0
    %137 = vmatpush1.msra.mxu0 0.0
    %138 = vmatprep.subr.mxu0 0.0
    %139 = vmatpush1.msra.mxu0 0.0
    %140 = vmatprep.subr.mxu0 0.0
    %141 = vmatpush1.msra.mxu0 0.0
    %142 = vmatprep.subr.mxu0 0.0
    %143 = vmatpush1.msra.mxu0 0.0
    %144 = vmatprep.subr.mxu0 0.0
    %145 = vmatpush1.msra.mxu0 0.0
    %146 = vmatprep.subr.mxu0 0.0
    %147 = vmatpush1.msra.mxu0 0.0
    %148 = vmatprep.subr.mxu0 0.0
    %149 = vmatpush1.msra.mxu0 0.0
    %150 = vmatprep.subr.mxu0 0.0
    %151 = vmatpush1.msra.mxu0 0.0
    %152 = vmatprep.subr.mxu0 0.0
    %153 = vmatpush1.msra.mxu0 0.0
    %154 = vmatprep.subr.mxu0 0.0
    %155 = vmatpush1.msra.mxu0 0.0
    %156 = vmatprep.subr.mxu0 0.0
    %157 = vmatpush1.msra.mxu0 0.0
    %158 = vmatprep.subr.mxu0 0.0
    %159 = vmatpush1.msra.mxu0 0.0
    %160 = vmatprep.subr.mxu0 0.0
    %161 = vmatpush1.msra.mxu0 0.0
    %162 = vmatprep.subr.mxu0 %v126
    %163 = vmatpush1.msra.mxu0 %v123
    %164 = vmatprep.subr.mxu0 %v41
    %165 = vmatpush1.msra.mxu0 %v40
    %166 = vmatprep.subr.mxu0 0.0
    %167 = vmatpush2.msra.mxu0 0.0
    %168 = vmatprep.subr.mxu0 0.0
    %169 = vmatpush2.msra.mxu0 0.0
    %170 = vmatprep.subr.mxu0 0.0
    %171 = vmatpush2.msra.mxu0 0.0
    %172 = vmatprep.subr.mxu0 0.0
    %173 = vmatpush2.msra.mxu0 0.0
    %174 = vmatprep.subr.mxu0 0.0
    %175 = vmatpush2.msra.mxu0 0.0
    %176 = vmatprep.subr.mxu0 0.0
    %177 = vmatpush2.msra.mxu0 0.0
    %178 = vmatprep.subr.mxu0 0.0
    %179 = vmatpush2.msra.mxu0 0.0
    %180 = vmatprep.subr.mxu0 0.0
    %181 = vmatpush2.msra.mxu0 0.0
    %182 = vmatprep.subr.mxu0 0.0
    %183 = vmatpush2.msra.mxu0 0.0
    %184 = vmatprep.subr.mxu0 0.0
    %185 = vmatpush2.msra.mxu0 0.0
    %186 = vmatprep.subr.mxu0 0.0
    %187 = vmatpush2.msra.mxu0 0.0
    %188 = vmatprep.subr.mxu0 0.0
    %189 = vmatpush2.msra.mxu0 0.0
    %190 = vmatprep.subr.mxu0 0.0
    %191 = vmatpush2.msra.mxu0 0.0
    %192 = vmatprep.subr.mxu0 0.0
    %193 = vmatpush2.msra.mxu0 0.0
    %194 = vmatprep.subr.mxu0 0.0
    %195 = vmatpush2.msra.mxu0 0.0
    %196 = vmatprep.subr.mxu0 0.0
    %197 = vmatpush2.msra.mxu0 0.0
    %198 = vmatprep.mubr.f32.mxu0 0.0
    %199 = vmatmul.mubr.f32.gmra.mxu0 %v98
    %v200 = vpop.f32.mrf.mxu0
    %v201 = vadd.f32 %v59, %v200
    %v202 = vpop.f32.mrf.mxu0
    %v203 = vadd.f32 %v59, %v202
    %204 = vmatprep.mubr.f32.mxu0 0.0
    %205 = vmatmul.mubr.f32.gmra.mxu0 %v101
    %v206 = vpop.f32.mrf.mxu0
    %v207 = vadd.f32 %v64, %v206
    %v208 = vpop.f32.mrf.mxu0
    %v209 = vadd.f32 %v64, %v208
    %210 = vmatprep.mubr.f32.mxu0 0.0
    %211 = vmatmul.mubr.f32.gmra.mxu0 %v104
    %v212 = vpop.f32.mrf.mxu0
    %v213 = vadd.f32 %v69, %v212
    %v214 = vpop.f32.mrf.mxu0
    %v215 = vadd.f32 %v69, %v214
    %216 = vmatprep.mubr.f32.mxu0 0.0
    %217 = vmatmul.mubr.f32.gmra.mxu0 %v107
    %v218 = vpop.f32.mrf.mxu0
    %v219 = vadd.f32 %v74, %v218
    %v220 = vpop.f32.mrf.mxu0
    %v221 = vadd.f32 %v74, %v220
    %222 = vmatprep.mubr.f32.mxu0 0.0
    %223 = vmatmul.mubr.f32.gmra.mxu0 %v110
    %v224 = vpop.f32.mrf.mxu0
    %v225 = vadd.f32 %v79, %v224
    %v226 = vpop.f32.mrf.mxu0
    %v227 = vadd.f32 %v79, %v226
    %228 = vmatprep.mubr.f32.mxu0 0.0
    %229 = vmatmul.mubr.f32.gmra.mxu0 %v113
    %v230 = vpop.f32.mrf.mxu0
    %v231 = vadd.f32 %v84, %v230
    %v232 = vpop.f32.mrf.mxu0
    %v233 = vadd.f32 %v84, %v232
    %234 = vmatprep.mubr.f32.mxu0 0.0
    %235 = vmatmul.mubr.f32.gmra.mxu0 %v116
    %v236 = vpop.f32.mrf.mxu0
    %v237 = vadd.f32 %v89, %v236
    %v238 = vpop.f32.mrf.mxu0
    %v239 = vadd.f32 %v89, %v238
    %240 = vmatprep.mubr.f32.mxu0 0.0
    %241 = vmatmul.mubr.f32.gmra.mxu0 %v119
    %v242 = vpop.f32.mrf.mxu0
    %v243 = vadd.f32 %v94, %v242
    %v244 = vpop.f32.mrf.mxu0
    %v245 = vadd.f32 %v94, %v244
    %246 = vdwg.mxu0
    %247 = vmatprep.subr.mxu0 0.0
    %248 = vmatpush1.msra.mxu0 0.0
    %249 = vmatprep.subr.mxu0 0.0
    %250 = vmatpush1.msra.mxu0 0.0
    %251 = vmatprep.subr.mxu0 0.0
    %252 = vmatpush1.msra.mxu0 0.0
    %253 = vmatprep.subr.mxu0 0.0
    %254 = vmatpush1.msra.mxu0 0.0
    %255 = vmatprep.subr.mxu0 0.0
    %256 = vmatpush1.msra.mxu0 0.0
    %257 = vmatprep.subr.mxu0 0.0
    %258 = vmatpush1.msra.mxu0 0.0
    %259 = vmatprep.subr.mxu0 0.0
    %260 = vmatpush1.msra.mxu0 0.0
    %261 = vmatprep.subr.mxu0 0.0
    %262 = vmatpush1.msra.mxu0 0.0
    %263 = vmatprep.subr.mxu0 0.0
    %264 = vmatpush1.msra.mxu0 0.0
    %265 = vmatprep.subr.mxu0 0.0
    %266 = vmatpush1.msra.mxu0 0.0
    %267 = vmatprep.subr.mxu0 0.0
    %268 = vmatpush1.msra.mxu0 0.0
    %269 = vmatprep.subr.mxu0 0.0
    %270 = vmatpush1.msra.mxu0 0.0
    %271 = vmatprep.subr.mxu0 0.0
    %272 = vmatpush1.msra.mxu0 0.0
    %273 = vmatprep.subr.mxu0 0.0
    %274 = vmatpush1.msra.mxu0 0.0
    %275 = vmatprep.subr.mxu0 %v132
    %276 = vmatpush1.msra.mxu0 %v129
    %277 = vmatprep.subr.mxu0 %v43
    %278 = vmatpush1.msra.mxu0 %v42
    %279 = vmatprep.subr.mxu0 0.0
    %280 = vmatpush2.msra.mxu0 0.0
    %281 = vmatprep.subr.mxu0 0.0
    %282 = vmatpush2.msra.mxu0 0.0
    %283 = vmatprep.subr.mxu0 0.0
    %284 = vmatpush2.msra.mxu0 0.0
    %285 = vmatprep.subr.mxu0 0.0
    %286 = vmatpush2.msra.mxu0 0.0
    %287 = vmatprep.subr.mxu0 0.0
    %288 = vmatpush2.msra.mxu0 0.0
    %289 = vmatprep.subr.mxu0 0.0
    %290 = vmatpush2.msra.mxu0 0.0
    %291 = vmatprep.subr.mxu0 0.0
    %292 = vmatpush2.msra.mxu0 0.0
    %293 = vmatprep.subr.mxu0 0.0
    %294 = vmatpush2.msra.mxu0 0.0
    %295 = vmatprep.subr.mxu0 0.0
    %296 = vmatpush2.msra.mxu0 0.0
    %297 = vmatprep.subr.mxu0 0.0
    %298 = vmatpush2.msra.mxu0 0.0
    %299 = vmatprep.subr.mxu0 0.0
    %300 = vmatpush2.msra.mxu0 0.0
    %301 = vmatprep.subr.mxu0 0.0
    %302 = vmatpush2.msra.mxu0 0.0
    %303 = vmatprep.subr.mxu0 0.0
    %304 = vmatpush2.msra.mxu0 0.0
    %305 = vmatprep.subr.mxu0 0.0
    %306 = vmatpush2.msra.mxu0 0.0
    %307 = vmatprep.subr.mxu0 0.0
    %308 = vmatpush2.msra.mxu0 0.0
    %309 = vmatprep.subr.mxu0 0.0
    %310 = vmatpush2.msra.mxu0 0.0
    %311 = vmatprep.mubr.f32.mxu0 0.0
    %312 = vmatmul.mubr.f32.gmra.mxu0 %v98
    %v313 = vpop.f32.mrf.mxu0
    %v314 = vadd.f32 %v59, %v313
    %v315 = vpop.f32.mrf.mxu0
    %v316 = vadd.f32 %v59, %v315
    %317 = vmatprep.mubr.f32.mxu0 0.0
    %318 = vmatmul.mubr.f32.gmra.mxu0 %v101
    %v319 = vpop.f32.mrf.mxu0
    %v320 = vadd.f32 %v64, %v319
    %v321 = vpop.f32.mrf.mxu0
    %v322 = vadd.f32 %v64, %v321
    %323 = vmatprep.mubr.f32.mxu0 0.0
    %324 = vmatmul.mubr.f32.gmra.mxu0 %v104
    %v325 = vpop.f32.mrf.mxu0
    %v326 = vadd.f32 %v69, %v325
    %v327 = vpop.f32.mrf.mxu0
    %v328 = vadd.f32 %v69, %v327
    %329 = vmatprep.mubr.f32.mxu0 0.0
    %330 = vmatmul.mubr.f32.gmra.mxu0 %v107
    %v331 = vpop.f32.mrf.mxu0
    %v332 = vadd.f32 %v74, %v331
    %v333 = vpop.f32.mrf.mxu0
    %v334 = vadd.f32 %v74, %v333
    %335 = vmatprep.mubr.f32.mxu0 0.0
    %336 = vmatmul.mubr.f32.gmra.mxu0 %v110
    %v337 = vpop.f32.mrf.mxu0
    %v338 = vadd.f32 %v79, %v337
    %v339 = vpop.f32.mrf.mxu0
    %v340 = vadd.f32 %v79, %v339
    %341 = vmatprep.mubr.f32.mxu0 0.0
    %342 = vmatmul.mubr.f32.gmra.mxu0 %v113
    %v343 = vpop.f32.mrf.mxu0
    %v344 = vadd.f32 %v84, %v343
    %v345 = vpop.f32.mrf.mxu0
    %v346 = vadd.f32 %v84, %v345
    %347 = vmatprep.mubr.f32.mxu0 0.0
    %348 = vmatmul.mubr.f32.gmra.mxu0 %v116
    %v349 = vpop.f32.mrf.mxu0
    %v350 = vadd.f32 %v89, %v349
    %v351 = vpop.f32.mrf.mxu0
    %v352 = vadd.f32 %v89, %v351
    %353 = vmatprep.mubr.f32.mxu0 0.0
    %354 = vmatmul.mubr.f32.gmra.mxu0 %v119
    %v355 = vpop.f32.mrf.mxu0
    %v356 = vadd.f32 %v94, %v355
    %v357 = vpop.f32.mrf.mxu0
    %v358 = vadd.f32 %v94, %v357
    %359 = vdwg.mxu0
    %v360 = vmax.f32 %v201, 0.0
    %v361 = vmax.f32 %v203, 0.0
    %v362 = vmax.f32 %v314, 0.0
    %v363 = vmax.f32 %v316, 0.0
    %v364 = vmax.f32 %v207, 0.0
    %v365 = vmax.f32 %v209, 0.0
    %v366 = vmax.f32 %v320, 0.0
    %v367 = vmax.f32 %v322, 0.0
    %v368 = vmax.f32 %v213, 0.0
    %v369 = vmax.f32 %v215, 0.0
    %v370 = vmax.f32 %v326, 0.0
    %v371 = vmax.f32 %v328, 0.0
    %v372 = vmax.f32 %v219, 0.0
    %v373 = vmax.f32 %v221, 0.0
    %v374 = vmax.f32 %v332, 0.0
    %v375 = vmax.f32 %v334, 0.0
    %v376 = vmax.f32 %v225, 0.0
    %v377 = vmax.f32 %v227, 0.0
    %v378 = vmax.f32 %v338, 0.0
    %v379 = vmax.f32 %v340, 0.0
    %v380 = vmax.f32 %v231, 0.0
    %v381 = vmax.f32 %v233, 0.0
    %v382 = vmax.f32 %v344, 0.0
    %v383 = vmax.f32 %v346, 0.0
    %v384 = vmax.f32 %v237, 0.0
    %v385 = vmax.f32 %v239, 0.0
    %v386 = vmax.f32 %v350, 0.0
    %v387 = vmax.f32 %v352, 0.0
    %v388 = vmax.f32 %v243, 0.0
    %v389 = vmax.f32 %v245, 0.0
    %v390 = vmax.f32 %v356, 0.0
    %v391 = vmax.f32 %v358, 0.0
    %392 = vrot.lane.b32.xlu0 %v360, 17
    %v393 = vpop.permute.xlu0 %392
    %394 = vrot.lane.b32.xlu0 %v364, 17
    %v395 = vpop.permute.xlu0 %394
    %396 = vrot.lane.b32.xlu0 %v368, 17
    %v397 = vpop.permute.xlu0 %396
    %398 = vrot.lane.b32.xlu0 %v372, 17
    %v399 = vpop.permute.xlu0 %398
    %400 = vrot.lane.b32.xlu0 %v376, 17
    %v401 = vpop.permute.xlu0 %400
    %402 = vrot.lane.b32.xlu0 %v380, 17
    %v403 = vpop.permute.xlu0 %402
    %404 = vrot.lane.b32.xlu0 %v384, 17
    %v405 = vpop.permute.xlu0 %404
    %406 = vrot.lane.b32.xlu0 %v388, 17
    %v407 = vpop.permute.xlu0 %406
    %408 = vrot.lane.b32.xlu0 %v361, 17
    %v409 = vpop.permute.xlu0 %408
    %410 = vrot.lane.b32.xlu0 %v365, 17
    %v411 = vpop.permute.xlu0 %410
    %412 = vrot.lane.b32.xlu0 %v369, 17
    %v413 = vpop.permute.xlu0 %412
    %414 = vrot.lane.b32.xlu0 %v373, 17
    %v415 = vpop.permute.xlu0 %414
    %416 = vrot.lane.b32.xlu0 %v377, 17
    %v417 = vpop.permute.xlu0 %416
    %418 = vrot.lane.b32.xlu0 %v381, 17
    %v419 = vpop.permute.xlu0 %418
    %420 = vrot.lane.b32.xlu0 %v385, 17
    %v421 = vpop.permute.xlu0 %420
    %422 = vrot.lane.b32.xlu0 %v389, 17
    %v423 = vpop.permute.xlu0 %422
    %424 = vrot.lane.b32.xlu0 %v362, 17
    %v425 = vpop.permute.xlu0 %424
    %426 = vrot.lane.b32.xlu0 %v366, 17
    %v427 = vpop.permute.xlu0 %426
    %428 = vrot.lane.b32.xlu0 %v370, 17
    %v429 = vpop.permute.xlu0 %428
    %430 = vrot.lane.b32.xlu0 %v374, 17
    %v431 = vpop.permute.xlu0 %430
    %432 = vrot.lane.b32.xlu0 %v378, 17
    %v433 = vpop.permute.xlu0 %432
    %434 = vrot.lane.b32.xlu0 %v382, 17
    %v435 = vpop.permute.xlu0 %434
    %436 = vrot.lane.b32.xlu0 %v386, 17
    %v437 = vpop.permute.xlu0 %436
    %438 = vrot.lane.b32.xlu0 %v390, 17
    %v439 = vpop.permute.xlu0 %438
    %440 = vrot.lane.b32.xlu0 %v363, 17
    %v441 = vpop.permute.xlu0 %440
    %442 = vrot.lane.b32.xlu0 %v367, 17
    %v443 = vpop.permute.xlu0 %442
    %444 = vrot.lane.b32.xlu0 %v371, 17
    %v445 = vpop.permute.xlu0 %444
    %446 = vrot.lane.b32.xlu0 %v375, 17
    %v447 = vpop.permute.xlu0 %446
    %448 = vrot.lane.b32.xlu0 %v379, 17
    %v449 = vpop.permute.xlu0 %448
    %450 = vrot.lane.b32.xlu0 %v383, 17
    %v451 = vpop.permute.xlu0 %450
    %452 = vrot.lane.b32.xlu0 %v387, 17
    %v453 = vpop.permute.xlu0 %452
    %454 = vrot.lane.b32.xlu0 %v391, 17
    %v455 = vpop.permute.xlu0 %454
    %v456 = vlaneseq
    %v457 = vand.u32 %v456, 127
    %vm458 = vcmp.lt.s32.totalorder %v457, 17
    %v459 = vsel %vm458, %v425, %v441
    %v460 = vsel %vm458, %v427, %v443
    %v461 = vsel %vm458, %v429, %v445
    %v462 = vsel %vm458, %v431, %v447
    %v463 = vsel %vm458, %v433, %v449
    %v464 = vsel %vm458, %v435, %v451
    %v465 = vsel %vm458, %v437, %v453
    %v466 = vsel %vm458, %v439, %v455
    %v467 = vsel %vm458, %v409, %v425
    %v468 = vsel %vm458, %v411, %v427
    %v469 = vsel %vm458, %v413, %v429
    %v470 = vsel %vm458, %v415, %v431
    %v471 = vsel %vm458, %v417, %v433
    %v472 = vsel %vm458, %v419, %v435
    %v473 = vsel %vm458, %v421, %v437
    %v474 = vsel %vm458, %v423, %v439
    %v475 = vsel %vm458, %v393, %v409
    %v476 = vsel %vm458, %v395, %v411
    %v477 = vsel %vm458, %v397, %v413
    %v478 = vsel %vm458, %v399, %v415
    %v479 = vsel %vm458, %v401, %v417
    %v480 = vsel %vm458, %v403, %v419
    %v481 = vsel %vm458, %v405, %v421
    %v482 = vsel %vm458, %v407, %v423
    %v483 = vsel %vm458, %v441, %v393
    %v484 = vsel %vm458, %v443, %v395
    %v485 = vsel %vm458, %v445, %v397
    %v486 = vsel %vm458, %v447, %v399
    %v487 = vsel %vm458, %v449, %v401
    %v488 = vsel %vm458, %v451, %v403
    %v489 = vsel %vm458, %v453, %v405
    %v490 = vsel %vm458, %v455, %v407
    %v491 = vld [vmem:[%s1] ss:$8 sm:$0xf]
    %v493 = vlaneseq
    %v494 = vshrl.u32 %v493, 7
    %v495 = vsub.s32 0, %v494
    %v496 = vrot.slane %v491, %v495
    %v497 = vlaneseq
    %v498 = vshrl.u32 %v497, 7
    %v499 = vsub.s32 1, %v498
    %v500 = vrot.slane %v491, %v499
    %v501 = vlaneseq
    %v502 = vshrl.u32 %v501, 7
    %v503 = vsub.s32 2, %v502
    %v504 = vrot.slane %v491, %v503
    %v505 = vlaneseq
    %v506 = vshrl.u32 %v505, 7
    %v507 = vsub.s32 3, %v506
    %v508 = vrot.slane %v491, %v507
    %v513 = vmul.f32 %v483, %v496
    %v514 = vmul.f32 %v475, %v500
    %v515 = vmul.f32 %v467, %v504
    %v516 = vmul.f32 %v459, %v508
    %v517 = vmul.f32 %v484, %v496
    %v518 = vmul.f32 %v476, %v500
    %v519 = vmul.f32 %v468, %v504
    %v520 = vmul.f32 %v460, %v508
    %v521 = vmul.f32 %v485, %v496
    %v522 = vmul.f32 %v477, %v500
    %v523 = vmul.f32 %v469, %v504
    %v524 = vmul.f32 %v461, %v508
    %v525 = vmul.f32 %v486, %v496
    %v526 = vmul.f32 %v478, %v500
    %v527 = vmul.f32 %v470, %v504
    %v528 = vmul.f32 %v462, %v508
    %v529 = vmul.f32 %v487, %v496
    %v530 = vmul.f32 %v479, %v500
    %v531 = vmul.f32 %v471, %v504
    %v532 = vmul.f32 %v463, %v508
    %v533 = vmul.f32 %v488, %v496
    %v534 = vmul.f32 %v480, %v500
    %v535 = vmul.f32 %v472, %v504
    %v536 = vmul.f32 %v464, %v508
    %v537 = vmul.f32 %v489, %v496
    %v538 = vmul.f32 %v481, %v500
    %v539 = vmul.f32 %v473, %v504
    %v540 = vmul.f32 %v465, %v508
    %v541 = vmul.f32 %v490, %v496
    %v542 = vmul.f32 %v482, %v500
    %v543 = vmul.f32 %v474, %v504
    %v544 = vmul.f32 %v466, %v508
    %545 = vrot.lane.b32.xlu0 %v360, 16
    %v546 = vpop.permute.xlu0 %545
    %547 = vrot.lane.b32.xlu0 %v364, 16
    %v548 = vpop.permute.xlu0 %547
    %549 = vrot.lane.b32.xlu0 %v368, 16
    %v550 = vpop.permute.xlu0 %549
    %551 = vrot.lane.b32.xlu0 %v372, 16
    %v552 = vpop.permute.xlu0 %551
    %553 = vrot.lane.b32.xlu0 %v376, 16
    %v554 = vpop.permute.xlu0 %553
    %555 = vrot.lane.b32.xlu0 %v380, 16
    %v556 = vpop.permute.xlu0 %555
    %557 = vrot.lane.b32.xlu0 %v384, 16
    %v558 = vpop.permute.xlu0 %557
    %559 = vrot.lane.b32.xlu0 %v388, 16
    %v560 = vpop.permute.xlu0 %559
    %561 = vrot.lane.b32.xlu0 %v361, 16
    %v562 = vpop.permute.xlu0 %561
    %563 = vrot.lane.b32.xlu0 %v365, 16
    %v564 = vpop.permute.xlu0 %563
    %565 = vrot.lane.b32.xlu0 %v369, 16
    %v566 = vpop.permute.xlu0 %565
    %567 = vrot.lane.b32.xlu0 %v373, 16
    %v568 = vpop.permute.xlu0 %567
    %569 = vrot.lane.b32.xlu0 %v377, 16
    %v570 = vpop.permute.xlu0 %569
    %571 = vrot.lane.b32.xlu0 %v381, 16
    %v572 = vpop.permute.xlu0 %571
    %573 = vrot.lane.b32.xlu0 %v385, 16
    %v574 = vpop.permute.xlu0 %573
    %575 = vrot.lane.b32.xlu0 %v389, 16
    %v576 = vpop.permute.xlu0 %575
    %577 = vrot.lane.b32.xlu0 %v362, 16
    %v578 = vpop.permute.xlu0 %577
    %579 = vrot.lane.b32.xlu0 %v366, 16
    %v580 = vpop.permute.xlu0 %579
    %581 = vrot.lane.b32.xlu0 %v370, 16
    %v582 = vpop.permute.xlu0 %581
    %583 = vrot.lane.b32.xlu0 %v374, 16
    %v584 = vpop.permute.xlu0 %583
    %585 = vrot.lane.b32.xlu0 %v378, 16
    %v586 = vpop.permute.xlu0 %585
    %587 = vrot.lane.b32.xlu0 %v382, 16
    %v588 = vpop.permute.xlu0 %587
    %589 = vrot.lane.b32.xlu0 %v386, 16
    %v590 = vpop.permute.xlu0 %589
    %591 = vrot.lane.b32.xlu0 %v390, 16
    %v592 = vpop.permute.xlu0 %591
    %593 = vrot.lane.b32.xlu0 %v363, 16
    %v594 = vpop.permute.xlu0 %593
    %595 = vrot.lane.b32.xlu0 %v367, 16
    %v596 = vpop.permute.xlu0 %595
    %597 = vrot.lane.b32.xlu0 %v371, 16
    %v598 = vpop.permute.xlu0 %597
    %599 = vrot.lane.b32.xlu0 %v375, 16
    %v600 = vpop.permute.xlu0 %599
    %601 = vrot.lane.b32.xlu0 %v379, 16
    %v602 = vpop.permute.xlu0 %601
    %603 = vrot.lane.b32.xlu0 %v383, 16
    %v604 = vpop.permute.xlu0 %603
    %605 = vrot.lane.b32.xlu0 %v387, 16
    %v606 = vpop.permute.xlu0 %605
    %607 = vrot.lane.b32.xlu0 %v391, 16
    %v608 = vpop.permute.xlu0 %607
    %vm609 = vcmp.lt.s32.totalorder %v457, 16
    %v610 = vsel %vm609, %v578, %v594
    %v611 = vsel %vm609, %v580, %v596
    %v612 = vsel %vm609, %v582, %v598
    %v613 = vsel %vm609, %v584, %v600
    %v614 = vsel %vm609, %v586, %v602
    %v615 = vsel %vm609, %v588, %v604
    %v616 = vsel %vm609, %v590, %v606
    %v617 = vsel %vm609, %v592, %v608
    %v618 = vsel %vm609, %v562, %v578
    %v619 = vsel %vm609, %v564, %v580
    %v620 = vsel %vm609, %v566, %v582
    %v621 = vsel %vm609, %v568, %v584
    %v622 = vsel %vm609, %v570, %v586
    %v623 = vsel %vm609, %v572, %v588
    %v624 = vsel %vm609, %v574, %v590
    %v625 = vsel %vm609, %v576, %v592
    %v626 = vsel %vm609, %v546, %v562
    %v627 = vsel %vm609, %v548, %v564
    %v628 = vsel %vm609, %v550, %v566
    %v629 = vsel %vm609, %v552, %v568
    %v630 = vsel %vm609, %v554, %v570
    %v631 = vsel %vm609, %v556, %v572
    %v632 = vsel %vm609, %v558, %v574
    %v633 = vsel %vm609, %v560, %v576
    %v634 = vsel %vm609, %v594, %v546
    %v635 = vsel %vm609, %v596, %v548
    %v636 = vsel %vm609, %v598, %v550
    %v637 = vsel %vm609, %v600, %v552
    %v638 = vsel %vm609, %v602, %v554
    %v639 = vsel %vm609, %v604, %v556
    %v640 = vsel %vm609, %v606, %v558
    %v641 = vsel %vm609, %v608, %v560
    %s642 = scalar_lea.vmem %s1, 1
    %v643 = vld [vmem:[%s642] ss:$8 sm:$0xf]
    %v645 = vlaneseq
    %v646 = vshrl.u32 %v645, 7
    %v647 = vsub.s32 0, %v646
    %v648 = vrot.slane %v643, %v647
    %v649 = vlaneseq
    %v650 = vshrl.u32 %v649, 7
    %v651 = vsub.s32 1, %v650
    %v652 = vrot.slane %v643, %v651
    %v653 = vlaneseq
    %v654 = vshrl.u32 %v653, 7
    %v655 = vsub.s32 2, %v654
    %v656 = vrot.slane %v643, %v655
    %v657 = vlaneseq
    %v658 = vshrl.u32 %v657, 7
    %v659 = vsub.s32 3, %v658
    %v660 = vrot.slane %v643, %v659
    %v665 = vmul.f32 %v634, %v648
    %v666 = vmul.f32 %v626, %v652
    %v667 = vmul.f32 %v618, %v656
    %v668 = vmul.f32 %v610, %v660
    %v669 = vmul.f32 %v635, %v648
    %v670 = vmul.f32 %v627, %v652
    %v671 = vmul.f32 %v619, %v656
    %v672 = vmul.f32 %v611, %v660
    %v673 = vmul.f32 %v636, %v648
    %v674 = vmul.f32 %v628, %v652
    %v675 = vmul.f32 %v620, %v656
    %v676 = vmul.f32 %v612, %v660
    %v677 = vmul.f32 %v637, %v648
    %v678 = vmul.f32 %v629, %v652
    %v679 = vmul.f32 %v621, %v656
    %v680 = vmul.f32 %v613, %v660
    %v681 = vmul.f32 %v638, %v648
    %v682 = vmul.f32 %v630, %v652
    %v683 = vmul.f32 %v622, %v656
    %v684 = vmul.f32 %v614, %v660
    %v685 = vmul.f32 %v639, %v648
    %v686 = vmul.f32 %v631, %v652
    %v687 = vmul.f32 %v623, %v656
    %v688 = vmul.f32 %v615, %v660
    %v689 = vmul.f32 %v640, %v648
    %v690 = vmul.f32 %v632, %v652
    %v691 = vmul.f32 %v624, %v656
    %v692 = vmul.f32 %v616, %v660
    %v693 = vmul.f32 %v641, %v648
    %v694 = vmul.f32 %v633, %v652
    %v695 = vmul.f32 %v625, %v656
    %v696 = vmul.f32 %v617, %v660
    %697 = vrot.lane.b32.xlu0 %v360, 15
    %v698 = vpop.permute.xlu0 %697
    %699 = vrot.lane.b32.xlu0 %v364, 15
    %v700 = vpop.permute.xlu0 %699
    %701 = vrot.lane.b32.xlu0 %v368, 15
    %v702 = vpop.permute.xlu0 %701
    %703 = vrot.lane.b32.xlu0 %v372, 15
    %v704 = vpop.permute.xlu0 %703
    %705 = vrot.lane.b32.xlu0 %v376, 15
    %v706 = vpop.permute.xlu0 %705
    %707 = vrot.lane.b32.xlu0 %v380, 15
    %v708 = vpop.permute.xlu0 %707
    %709 = vrot.lane.b32.xlu0 %v384, 15
    %v710 = vpop.permute.xlu0 %709
    %711 = vrot.lane.b32.xlu0 %v388, 15
    %v712 = vpop.permute.xlu0 %711
    %713 = vrot.lane.b32.xlu0 %v361, 15
    %v714 = vpop.permute.xlu0 %713
    %715 = vrot.lane.b32.xlu0 %v365, 15
    %v716 = vpop.permute.xlu0 %715
    %717 = vrot.lane.b32.xlu0 %v369, 15
    %v718 = vpop.permute.xlu0 %717
    %719 = vrot.lane.b32.xlu0 %v373, 15
    %v720 = vpop.permute.xlu0 %719
    %721 = vrot.lane.b32.xlu0 %v377, 15
    %v722 = vpop.permute.xlu0 %721
    %723 = vrot.lane.b32.xlu0 %v381, 15
    %v724 = vpop.permute.xlu0 %723
    %725 = vrot.lane.b32.xlu0 %v385, 15
    %v726 = vpop.permute.xlu0 %725
    %727 = vrot.lane.b32.xlu0 %v389, 15
    %v728 = vpop.permute.xlu0 %727
    %729 = vrot.lane.b32.xlu0 %v362, 15
    %v730 = vpop.permute.xlu0 %729
    %731 = vrot.lane.b32.xlu0 %v366, 15
    %v732 = vpop.permute.xlu0 %731
    %733 = vrot.lane.b32.xlu0 %v370, 15
    %v734 = vpop.permute.xlu0 %733
    %735 = vrot.lane.b32.xlu0 %v374, 15
    %v736 = vpop.permute.xlu0 %735
    %737 = vrot.lane.b32.xlu0 %v378, 15
    %v738 = vpop.permute.xlu0 %737
    %739 = vrot.lane.b32.xlu0 %v382, 15
    %v740 = vpop.permute.xlu0 %739
    %741 = vrot.lane.b32.xlu0 %v386, 15
    %v742 = vpop.permute.xlu0 %741
    %743 = vrot.lane.b32.xlu0 %v390, 15
    %v744 = vpop.permute.xlu0 %743
    %745 = vrot.lane.b32.xlu0 %v363, 15
    %v746 = vpop.permute.xlu0 %745
    %747 = vrot.lane.b32.xlu0 %v367, 15
    %v748 = vpop.permute.xlu0 %747
    %749 = vrot.lane.b32.xlu0 %v371, 15
    %v750 = vpop.permute.xlu0 %749
    %751 = vrot.lane.b32.xlu0 %v375, 15
    %v752 = vpop.permute.xlu0 %751
    %753 = vrot.lane.b32.xlu0 %v379, 15
    %v754 = vpop.permute.xlu0 %753
    %755 = vrot.lane.b32.xlu0 %v383, 15
    %v756 = vpop.permute.xlu0 %755
    %757 = vrot.lane.b32.xlu0 %v387, 15
    %v758 = vpop.permute.xlu0 %757
    %759 = vrot.lane.b32.xlu0 %v391, 15
    %v760 = vpop.permute.xlu0 %759
    %vm761 = vcmp.lt.s32.totalorder %v457, 15
    %v762 = vsel %vm761, %v730, %v746
    %v763 = vsel %vm761, %v732, %v748
    %v764 = vsel %vm761, %v734, %v750
    %v765 = vsel %vm761, %v736, %v752
    %v766 = vsel %vm761, %v738, %v754
    %v767 = vsel %vm761, %v740, %v756
    %v768 = vsel %vm761, %v742, %v758
    %v769 = vsel %vm761, %v744, %v760
    %v770 = vsel %vm761, %v714, %v730
    %v771 = vsel %vm761, %v716, %v732
    %v772 = vsel %vm761, %v718, %v734
    %v773 = vsel %vm761, %v720, %v736
    %v774 = vsel %vm761, %v722, %v738
    %v775 = vsel %vm761, %v724, %v740
    %v776 = vsel %vm761, %v726, %v742
    %v777 = vsel %vm761, %v728, %v744
    %v778 = vsel %vm761, %v698, %v714
    %v779 = vsel %vm761, %v700, %v716
    %v780 = vsel %vm761, %v702, %v718
    %v781 = vsel %vm761, %v704, %v720
    %v782 = vsel %vm761, %v706, %v722
    %v783 = vsel %vm761, %v708, %v724
    %v784 = vsel %vm761, %v710, %v726
    %v785 = vsel %vm761, %v712, %v728
    %v786 = vsel %vm761, %v746, %v698
    %v787 = vsel %vm761, %v748, %v700
    %v788 = vsel %vm761, %v750, %v702
    %v789 = vsel %vm761, %v752, %v704
    %v790 = vsel %vm761, %v754, %v706
    %v791 = vsel %vm761, %v756, %v708
    %v792 = vsel %vm761, %v758, %v710
    %v793 = vsel %vm761, %v760, %v712
    %s794 = scalar_lea.vmem %s1, 2
    %v795 = vld [vmem:[%s794] ss:$8 sm:$0xf]
    %v797 = vlaneseq
    %v798 = vshrl.u32 %v797, 7
    %v799 = vsub.s32 0, %v798
    %v800 = vrot.slane %v795, %v799
    %v801 = vlaneseq
    %v802 = vshrl.u32 %v801, 7
    %v803 = vsub.s32 1, %v802
    %v804 = vrot.slane %v795, %v803
    %v805 = vlaneseq
    %v806 = vshrl.u32 %v805, 7
    %v807 = vsub.s32 2, %v806
    %v808 = vrot.slane %v795, %v807
    %v809 = vlaneseq
    %v810 = vshrl.u32 %v809, 7
    %v811 = vsub.s32 3, %v810
    %v812 = vrot.slane %v795, %v811
    %v817 = vmul.f32 %v786, %v800
    %v818 = vmul.f32 %v778, %v804
    %v819 = vmul.f32 %v770, %v808
    %v820 = vmul.f32 %v762, %v812
    %v821 = vmul.f32 %v787, %v800
    %v822 = vmul.f32 %v779, %v804
    %v823 = vmul.f32 %v771, %v808
    %v824 = vmul.f32 %v763, %v812
    %v825 = vmul.f32 %v788, %v800
    %v826 = vmul.f32 %v780, %v804
    %v827 = vmul.f32 %v772, %v808
    %v828 = vmul.f32 %v764, %v812
    %v829 = vmul.f32 %v789, %v800
    %v830 = vmul.f32 %v781, %v804
    %v831 = vmul.f32 %v773, %v808
    %v832 = vmul.f32 %v765, %v812
    %v833 = vmul.f32 %v790, %v800
    %v834 = vmul.f32 %v782, %v804
    %v835 = vmul.f32 %v774, %v808
    %v836 = vmul.f32 %v766, %v812
    %v837 = vmul.f32 %v791, %v800
    %v838 = vmul.f32 %v783, %v804
    %v839 = vmul.f32 %v775, %v808
    %v840 = vmul.f32 %v767, %v812
    %v841 = vmul.f32 %v792, %v800
    %v842 = vmul.f32 %v784, %v804
    %v843 = vmul.f32 %v776, %v808
    %v844 = vmul.f32 %v768, %v812
    %v845 = vmul.f32 %v793, %v800
    %v846 = vmul.f32 %v785, %v804
    %v847 = vmul.f32 %v777, %v808
    %v848 = vmul.f32 %v769, %v812
    %849 = vrot.lane.b32.xlu0 %v360, 1
    %v850 = vpop.permute.xlu0 %849
    %851 = vrot.lane.b32.xlu0 %v364, 1
    %v852 = vpop.permute.xlu0 %851
    %853 = vrot.lane.b32.xlu0 %v368, 1
    %v854 = vpop.permute.xlu0 %853
    %855 = vrot.lane.b32.xlu0 %v372, 1
    %v856 = vpop.permute.xlu0 %855
    %857 = vrot.lane.b32.xlu0 %v376, 1
    %v858 = vpop.permute.xlu0 %857
    %859 = vrot.lane.b32.xlu0 %v380, 1
    %v860 = vpop.permute.xlu0 %859
    %861 = vrot.lane.b32.xlu0 %v384, 1
    %v862 = vpop.permute.xlu0 %861
    %863 = vrot.lane.b32.xlu0 %v388, 1
    %v864 = vpop.permute.xlu0 %863
    %865 = vrot.lane.b32.xlu0 %v361, 1
    %v866 = vpop.permute.xlu0 %865
    %867 = vrot.lane.b32.xlu0 %v365, 1
    %v868 = vpop.permute.xlu0 %867
    %869 = vrot.lane.b32.xlu0 %v369, 1
    %v870 = vpop.permute.xlu0 %869
    %871 = vrot.lane.b32.xlu0 %v373, 1
    %v872 = vpop.permute.xlu0 %871
    %873 = vrot.lane.b32.xlu0 %v377, 1
    %v874 = vpop.permute.xlu0 %873
    %875 = vrot.lane.b32.xlu0 %v381, 1
    %v876 = vpop.permute.xlu0 %875
    %877 = vrot.lane.b32.xlu0 %v385, 1
    %v878 = vpop.permute.xlu0 %877
    %879 = vrot.lane.b32.xlu0 %v389, 1
    %v880 = vpop.permute.xlu0 %879
    %881 = vrot.lane.b32.xlu0 %v362, 1
    %v882 = vpop.permute.xlu0 %881
    %883 = vrot.lane.b32.xlu0 %v366, 1
    %v884 = vpop.permute.xlu0 %883
    %885 = vrot.lane.b32.xlu0 %v370, 1
    %v886 = vpop.permute.xlu0 %885
    %887 = vrot.lane.b32.xlu0 %v374, 1
    %v888 = vpop.permute.xlu0 %887
    %889 = vrot.lane.b32.xlu0 %v378, 1
    %v890 = vpop.permute.xlu0 %889
    %891 = vrot.lane.b32.xlu0 %v382, 1
    %v892 = vpop.permute.xlu0 %891
    %893 = vrot.lane.b32.xlu0 %v386, 1
    %v894 = vpop.permute.xlu0 %893
    %895 = vrot.lane.b32.xlu0 %v390, 1
    %v896 = vpop.permute.xlu0 %895
    %897 = vrot.lane.b32.xlu0 %v363, 1
    %v898 = vpop.permute.xlu0 %897
    %899 = vrot.lane.b32.xlu0 %v367, 1
    %v900 = vpop.permute.xlu0 %899
    %901 = vrot.lane.b32.xlu0 %v371, 1
    %v902 = vpop.permute.xlu0 %901
    %903 = vrot.lane.b32.xlu0 %v375, 1
    %v904 = vpop.permute.xlu0 %903
    %905 = vrot.lane.b32.xlu0 %v379, 1
    %v906 = vpop.permute.xlu0 %905
    %907 = vrot.lane.b32.xlu0 %v383, 1
    %v908 = vpop.permute.xlu0 %907
    %909 = vrot.lane.b32.xlu0 %v387, 1
    %v910 = vpop.permute.xlu0 %909
    %911 = vrot.lane.b32.xlu0 %v391, 1
    %v912 = vpop.permute.xlu0 %911
    %vm913 = vcmp.lt.s32.totalorder %v457, 1
    %v914 = vsel %vm913, %v882, %v898
    %v915 = vsel %vm913, %v884, %v900
    %v916 = vsel %vm913, %v886, %v902
    %v917 = vsel %vm913, %v888, %v904
    %v918 = vsel %vm913, %v890, %v906
    %v919 = vsel %vm913, %v892, %v908
    %v920 = vsel %vm913, %v894, %v910
    %v921 = vsel %vm913, %v896, %v912
    %v922 = vsel %vm913, %v866, %v882
    %v923 = vsel %vm913, %v868, %v884
    %v924 = vsel %vm913, %v870, %v886
    %v925 = vsel %vm913, %v872, %v888
    %v926 = vsel %vm913, %v874, %v890
    %v927 = vsel %vm913, %v876, %v892
    %v928 = vsel %vm913, %v878, %v894
    %v929 = vsel %vm913, %v880, %v896
    %v930 = vsel %vm913, %v850, %v866
    %v931 = vsel %vm913, %v852, %v868
    %v932 = vsel %vm913, %v854, %v870
    %v933 = vsel %vm913, %v856, %v872
    %v934 = vsel %vm913, %v858, %v874
    %v935 = vsel %vm913, %v860, %v876
    %v936 = vsel %vm913, %v862, %v878
    %v937 = vsel %vm913, %v864, %v880
    %v938 = vsel %vm913, %v898, %v850
    %v939 = vsel %vm913, %v900, %v852
    %v940 = vsel %vm913, %v902, %v854
    %v941 = vsel %vm913, %v904, %v856
    %v942 = vsel %vm913, %v906, %v858
    %v943 = vsel %vm913, %v908, %v860
    %v944 = vsel %vm913, %v910, %v862
    %v945 = vsel %vm913, %v912, %v864
    %s946 = scalar_lea.vmem %s1, 3
    %v947 = vld [vmem:[%s946] ss:$8 sm:$0xf]
    %v949 = vlaneseq
    %v950 = vshrl.u32 %v949, 7
    %v951 = vsub.s32 0, %v950
    %v952 = vrot.slane %v947, %v951
    %v953 = vlaneseq
    %v954 = vshrl.u32 %v953, 7
    %v955 = vsub.s32 1, %v954
    %v956 = vrot.slane %v947, %v955
    %v957 = vlaneseq
    %v958 = vshrl.u32 %v957, 7
    %v959 = vsub.s32 2, %v958
    %v960 = vrot.slane %v947, %v959
    %v961 = vlaneseq
    %v962 = vshrl.u32 %v961, 7
    %v963 = vsub.s32 3, %v962
    %v964 = vrot.slane %v947, %v963
    %v969 = vmul.f32 %v938, %v952
    %v970 = vmul.f32 %v930, %v956
    %v971 = vmul.f32 %v922, %v960
    %v972 = vmul.f32 %v914, %v964
    %v973 = vmul.f32 %v939, %v952
    %v974 = vmul.f32 %v931, %v956
    %v975 = vmul.f32 %v923, %v960
    %v976 = vmul.f32 %v915, %v964
    %v977 = vmul.f32 %v940, %v952
    %v978 = vmul.f32 %v932, %v956
    %v979 = vmul.f32 %v924, %v960
    %v980 = vmul.f32 %v916, %v964
    %v981 = vmul.f32 %v941, %v952
    %v982 = vmul.f32 %v933, %v956
    %v983 = vmul.f32 %v925, %v960
    %v984 = vmul.f32 %v917, %v964
    %v985 = vmul.f32 %v942, %v952
    %v986 = vmul.f32 %v934, %v956
    %v987 = vmul.f32 %v926, %v960
    %v988 = vmul.f32 %v918, %v964
    %v989 = vmul.f32 %v943, %v952
    %v990 = vmul.f32 %v935, %v956
    %v991 = vmul.f32 %v927, %v960
    %v992 = vmul.f32 %v919, %v964
    %v993 = vmul.f32 %v944, %v952
    %v994 = vmul.f32 %v936, %v956
    %v995 = vmul.f32 %v928, %v960
    %v996 = vmul.f32 %v920, %v964
    %v997 = vmul.f32 %v945, %v952
    %v998 = vmul.f32 %v937, %v956
    %v999 = vmul.f32 %v929, %v960
    %v1000 = vmul.f32 %v921, %v964
    %s1001 = scalar_lea.vmem %s1, 4
    %v1002 = vld [vmem:[%s1001] ss:$8 sm:$0xf]
    %v1004 = vlaneseq
    %v1005 = vshrl.u32 %v1004, 7
    %v1006 = vsub.s32 0, %v1005
    %v1007 = vrot.slane %v1002, %v1006
    %v1008 = vlaneseq
    %v1009 = vshrl.u32 %v1008, 7
    %v1010 = vsub.s32 1, %v1009
    %v1011 = vrot.slane %v1002, %v1010
    %v1012 = vlaneseq
    %v1013 = vshrl.u32 %v1012, 7
    %v1014 = vsub.s32 2, %v1013
    %v1015 = vrot.slane %v1002, %v1014
    %v1016 = vlaneseq
    %v1017 = vshrl.u32 %v1016, 7
    %v1018 = vsub.s32 3, %v1017
    %v1019 = vrot.slane %v1002, %v1018
    %v1024 = vmul.f32 %v360, %v1007
    %v1025 = vmul.f32 %v361, %v1011
    %v1026 = vmul.f32 %v362, %v1015
    %v1027 = vmul.f32 %v363, %v1019
    %v1028 = vmul.f32 %v364, %v1007
    %v1029 = vmul.f32 %v365, %v1011
    %v1030 = vmul.f32 %v366, %v1015
    %v1031 = vmul.f32 %v367, %v1019
    %v1032 = vmul.f32 %v368, %v1007
    %v1033 = vmul.f32 %v369, %v1011
    %v1034 = vmul.f32 %v370, %v1015
    %v1035 = vmul.f32 %v371, %v1019
    %v1036 = vmul.f32 %v372, %v1007
    %v1037 = vmul.f32 %v373, %v1011
    %v1038 = vmul.f32 %v374, %v1015
    %v1039 = vmul.f32 %v375, %v1019
    %v1040 = vmul.f32 %v376, %v1007
    %v1041 = vmul.f32 %v377, %v1011
    %v1042 = vmul.f32 %v378, %v1015
    %v1043 = vmul.f32 %v379, %v1019
    %v1044 = vmul.f32 %v380, %v1007
    %v1045 = vmul.f32 %v381, %v1011
    %v1046 = vmul.f32 %v382, %v1015
    %v1047 = vmul.f32 %v383, %v1019
    %v1048 = vmul.f32 %v384, %v1007
    %v1049 = vmul.f32 %v385, %v1011
    %v1050 = vmul.f32 %v386, %v1015
    %v1051 = vmul.f32 %v387, %v1019
    %v1052 = vmul.f32 %v388, %v1007
    %v1053 = vmul.f32 %v389, %v1011
    %v1054 = vmul.f32 %v390, %v1015
    %v1055 = vmul.f32 %v391, %v1019
    %1056 = vrot.lane.b32.xlu0 %v360, 127
    %v1057 = vpop.permute.xlu0 %1056
    %1058 = vrot.lane.b32.xlu0 %v364, 127
    %v1059 = vpop.permute.xlu0 %1058
    %1060 = vrot.lane.b32.xlu0 %v368, 127
    %v1061 = vpop.permute.xlu0 %1060
    %1062 = vrot.lane.b32.xlu0 %v372, 127
    %v1063 = vpop.permute.xlu0 %1062
    %1064 = vrot.lane.b32.xlu0 %v376, 127
    %v1065 = vpop.permute.xlu0 %1064
    %1066 = vrot.lane.b32.xlu0 %v380, 127
    %v1067 = vpop.permute.xlu0 %1066
    %1068 = vrot.lane.b32.xlu0 %v384, 127
    %v1069 = vpop.permute.xlu0 %1068
    %1070 = vrot.lane.b32.xlu0 %v388, 127
    %v1071 = vpop.permute.xlu0 %1070
    %1072 = vrot.lane.b32.xlu0 %v361, 127
    %v1073 = vpop.permute.xlu0 %1072
    %1074 = vrot.lane.b32.xlu0 %v365, 127
    %v1075 = vpop.permute.xlu0 %1074
    %1076 = vrot.lane.b32.xlu0 %v369, 127
    %v1077 = vpop.permute.xlu0 %1076
    %1078 = vrot.lane.b32.xlu0 %v373, 127
    %v1079 = vpop.permute.xlu0 %1078
    %1080 = vrot.lane.b32.xlu0 %v377, 127
    %v1081 = vpop.permute.xlu0 %1080
    %1082 = vrot.lane.b32.xlu0 %v381, 127
    %v1083 = vpop.permute.xlu0 %1082
    %1084 = vrot.lane.b32.xlu0 %v385, 127
    %v1085 = vpop.permute.xlu0 %1084
    %1086 = vrot.lane.b32.xlu0 %v389, 127
    %v1087 = vpop.permute.xlu0 %1086
    %1088 = vrot.lane.b32.xlu0 %v362, 127
    %v1089 = vpop.permute.xlu0 %1088
    %1090 = vrot.lane.b32.xlu0 %v366, 127
    %v1091 = vpop.permute.xlu0 %1090
    %1092 = vrot.lane.b32.xlu0 %v370, 127
    %v1093 = vpop.permute.xlu0 %1092
    %1094 = vrot.lane.b32.xlu0 %v374, 127
    %v1095 = vpop.permute.xlu0 %1094
    %1096 = vrot.lane.b32.xlu0 %v378, 127
    %v1097 = vpop.permute.xlu0 %1096
    %1098 = vrot.lane.b32.xlu0 %v382, 127
    %v1099 = vpop.permute.xlu0 %1098
    %1100 = vrot.lane.b32.xlu0 %v386, 127
    %v1101 = vpop.permute.xlu0 %1100
    %1102 = vrot.lane.b32.xlu0 %v390, 127
    %v1103 = vpop.permute.xlu0 %1102
    %1104 = vrot.lane.b32.xlu0 %v363, 127
    %v1105 = vpop.permute.xlu0 %1104
    %1106 = vrot.lane.b32.xlu0 %v367, 127
    %v1107 = vpop.permute.xlu0 %1106
    %1108 = vrot.lane.b32.xlu0 %v371, 127
    %v1109 = vpop.permute.xlu0 %1108
    %1110 = vrot.lane.b32.xlu0 %v375, 127
    %v1111 = vpop.permute.xlu0 %1110
    %1112 = vrot.lane.b32.xlu0 %v379, 127
    %v1113 = vpop.permute.xlu0 %1112
    %1114 = vrot.lane.b32.xlu0 %v383, 127
    %v1115 = vpop.permute.xlu0 %1114
    %1116 = vrot.lane.b32.xlu0 %v387, 127
    %v1117 = vpop.permute.xlu0 %1116
    %1118 = vrot.lane.b32.xlu0 %v391, 127
    %v1119 = vpop.permute.xlu0 %1118
    %vm1120 = vcmp.lt.s32.totalorder %v457, 127
    %v1121 = vsel %vm1120, %v1089, %v1105
    %v1122 = vsel %vm1120, %v1091, %v1107
    %v1123 = vsel %vm1120, %v1093, %v1109
    %v1124 = vsel %vm1120, %v1095, %v1111
    %v1125 = vsel %vm1120, %v1097, %v1113
    %v1126 = vsel %vm1120, %v1099, %v1115
    %v1127 = vsel %vm1120, %v1101, %v1117
    %v1128 = vsel %vm1120, %v1103, %v1119
    %v1129 = vsel %vm1120, %v1073, %v1089
    %v1130 = vsel %vm1120, %v1075, %v1091
    %v1131 = vsel %vm1120, %v1077, %v1093
    %v1132 = vsel %vm1120, %v1079, %v1095
    %v1133 = vsel %vm1120, %v1081, %v1097
    %v1134 = vsel %vm1120, %v1083, %v1099
    %v1135 = vsel %vm1120, %v1085, %v1101
    %v1136 = vsel %vm1120, %v1087, %v1103
    %v1137 = vsel %vm1120, %v1057, %v1073
    %v1138 = vsel %vm1120, %v1059, %v1075
    %v1139 = vsel %vm1120, %v1061, %v1077
    %v1140 = vsel %vm1120, %v1063, %v1079
    %v1141 = vsel %vm1120, %v1065, %v1081
    %v1142 = vsel %vm1120, %v1067, %v1083
    %v1143 = vsel %vm1120, %v1069, %v1085
    %v1144 = vsel %vm1120, %v1071, %v1087
    %v1145 = vsel %vm1120, %v1105, %v1057
    %v1146 = vsel %vm1120, %v1107, %v1059
    %v1147 = vsel %vm1120, %v1109, %v1061
    %v1148 = vsel %vm1120, %v1111, %v1063
    %v1149 = vsel %vm1120, %v1113, %v1065
    %v1150 = vsel %vm1120, %v1115, %v1067
    %v1151 = vsel %vm1120, %v1117, %v1069
    %v1152 = vsel %vm1120, %v1119, %v1071
    %s1153 = scalar_lea.vmem %s1, 5
    %v1154 = vld [vmem:[%s1153] ss:$8 sm:$0xf]
    %v1156 = vlaneseq
    %v1157 = vshrl.u32 %v1156, 7
    %v1158 = vsub.s32 0, %v1157
    %v1159 = vrot.slane %v1154, %v1158
    %v1160 = vlaneseq
    %v1161 = vshrl.u32 %v1160, 7
    %v1162 = vsub.s32 1, %v1161
    %v1163 = vrot.slane %v1154, %v1162
    %v1164 = vlaneseq
    %v1165 = vshrl.u32 %v1164, 7
    %v1166 = vsub.s32 2, %v1165
    %v1167 = vrot.slane %v1154, %v1166
    %v1168 = vlaneseq
    %v1169 = vshrl.u32 %v1168, 7
    %v1170 = vsub.s32 3, %v1169
    %v1171 = vrot.slane %v1154, %v1170
    %v1176 = vmul.f32 %v1137, %v1159
    %v1177 = vmul.f32 %v1129, %v1163
    %v1178 = vmul.f32 %v1121, %v1167
    %v1179 = vmul.f32 %v1145, %v1171
    %v1180 = vmul.f32 %v1138, %v1159
    %v1181 = vmul.f32 %v1130, %v1163
    %v1182 = vmul.f32 %v1122, %v1167
    %v1183 = vmul.f32 %v1146, %v1171
    %v1184 = vmul.f32 %v1139, %v1159
    %v1185 = vmul.f32 %v1131, %v1163
    %v1186 = vmul.f32 %v1123, %v1167
    %v1187 = vmul.f32 %v1147, %v1171
    %v1188 = vmul.f32 %v1140, %v1159
    %v1189 = vmul.f32 %v1132, %v1163
    %v1190 = vmul.f32 %v1124, %v1167
    %v1191 = vmul.f32 %v1148, %v1171
    %v1192 = vmul.f32 %v1141, %v1159
    %v1193 = vmul.f32 %v1133, %v1163
    %v1194 = vmul.f32 %v1125, %v1167
    %v1195 = vmul.f32 %v1149, %v1171
    %v1196 = vmul.f32 %v1142, %v1159
    %v1197 = vmul.f32 %v1134, %v1163
    %v1198 = vmul.f32 %v1126, %v1167
    %v1199 = vmul.f32 %v1150, %v1171
    %v1200 = vmul.f32 %v1143, %v1159
    %v1201 = vmul.f32 %v1135, %v1163
    %v1202 = vmul.f32 %v1127, %v1167
    %v1203 = vmul.f32 %v1151, %v1171
    %v1204 = vmul.f32 %v1144, %v1159
    %v1205 = vmul.f32 %v1136, %v1163
    %v1206 = vmul.f32 %v1128, %v1167
    %v1207 = vmul.f32 %v1152, %v1171
    %1208 = vrot.lane.b32.xlu0 %v360, 113
    %v1209 = vpop.permute.xlu0 %1208
    %1210 = vrot.lane.b32.xlu0 %v364, 113
    %v1211 = vpop.permute.xlu0 %1210
    %1212 = vrot.lane.b32.xlu0 %v368, 113
    %v1213 = vpop.permute.xlu0 %1212
    %1214 = vrot.lane.b32.xlu0 %v372, 113
    %v1215 = vpop.permute.xlu0 %1214
    %1216 = vrot.lane.b32.xlu0 %v376, 113
    %v1217 = vpop.permute.xlu0 %1216
    %1218 = vrot.lane.b32.xlu0 %v380, 113
    %v1219 = vpop.permute.xlu0 %1218
    %1220 = vrot.lane.b32.xlu0 %v384, 113
    %v1221 = vpop.permute.xlu0 %1220
    %1222 = vrot.lane.b32.xlu0 %v388, 113
    %v1223 = vpop.permute.xlu0 %1222
    %1224 = vrot.lane.b32.xlu0 %v361, 113
    %v1225 = vpop.permute.xlu0 %1224
    %1226 = vrot.lane.b32.xlu0 %v365, 113
    %v1227 = vpop.permute.xlu0 %1226
    %1228 = vrot.lane.b32.xlu0 %v369, 113
    %v1229 = vpop.permute.xlu0 %1228
    %1230 = vrot.lane.b32.xlu0 %v373, 113
    %v1231 = vpop.permute.xlu0 %1230
    %1232 = vrot.lane.b32.xlu0 %v377, 113
    %v1233 = vpop.permute.xlu0 %1232
    %1234 = vrot.lane.b32.xlu0 %v381, 113
    %v1235 = vpop.permute.xlu0 %1234
    %1236 = vrot.lane.b32.xlu0 %v385, 113
    %v1237 = vpop.permute.xlu0 %1236
    %1238 = vrot.lane.b32.xlu0 %v389, 113
    %v1239 = vpop.permute.xlu0 %1238
    %1240 = vrot.lane.b32.xlu0 %v362, 113
    %v1241 = vpop.permute.xlu0 %1240
    %1242 = vrot.lane.b32.xlu0 %v366, 113
    %v1243 = vpop.permute.xlu0 %1242
    %1244 = vrot.lane.b32.xlu0 %v370, 113
    %v1245 = vpop.permute.xlu0 %1244
    %1246 = vrot.lane.b32.xlu0 %v374, 113
    %v1247 = vpop.permute.xlu0 %1246
    %1248 = vrot.lane.b32.xlu0 %v378, 113
    %v1249 = vpop.permute.xlu0 %1248
    %1250 = vrot.lane.b32.xlu0 %v382, 113
    %v1251 = vpop.permute.xlu0 %1250
    %1252 = vrot.lane.b32.xlu0 %v386, 113
    %v1253 = vpop.permute.xlu0 %1252
    %1254 = vrot.lane.b32.xlu0 %v390, 113
    %v1255 = vpop.permute.xlu0 %1254
    %1256 = vrot.lane.b32.xlu0 %v363, 113
    %v1257 = vpop.permute.xlu0 %1256
    %1258 = vrot.lane.b32.xlu0 %v367, 113
    %v1259 = vpop.permute.xlu0 %1258
    %1260 = vrot.lane.b32.xlu0 %v371, 113
    %v1261 = vpop.permute.xlu0 %1260
    %1262 = vrot.lane.b32.xlu0 %v375, 113
    %v1263 = vpop.permute.xlu0 %1262
    %1264 = vrot.lane.b32.xlu0 %v379, 113
    %v1265 = vpop.permute.xlu0 %1264
    %1266 = vrot.lane.b32.xlu0 %v383, 113
    %v1267 = vpop.permute.xlu0 %1266
    %1268 = vrot.lane.b32.xlu0 %v387, 113
    %v1269 = vpop.permute.xlu0 %1268
    %1270 = vrot.lane.b32.xlu0 %v391, 113
    %v1271 = vpop.permute.xlu0 %1270
    %vm1272 = vcmp.lt.s32.totalorder %v457, 113
    %v1273 = vsel %vm1272, %v1241, %v1257
    %v1274 = vsel %vm1272, %v1243, %v1259
    %v1275 = vsel %vm1272, %v1245, %v1261
    %v1276 = vsel %vm1272, %v1247, %v1263
    %v1277 = vsel %vm1272, %v1249, %v1265
    %v1278 = vsel %vm1272, %v1251, %v1267
    %v1279 = vsel %vm1272, %v1253, %v1269
    %v1280 = vsel %vm1272, %v1255, %v1271
    %v1281 = vsel %vm1272, %v1225, %v1241
    %v1282 = vsel %vm1272, %v1227, %v1243
    %v1283 = vsel %vm1272, %v1229, %v1245
    %v1284 = vsel %vm1272, %v1231, %v1247
    %v1285 = vsel %vm1272, %v1233, %v1249
    %v1286 = vsel %vm1272, %v1235, %v1251
    %v1287 = vsel %vm1272, %v1237, %v1253
    %v1288 = vsel %vm1272, %v1239, %v1255
    %v1289 = vsel %vm1272, %v1209, %v1225
    %v1290 = vsel %vm1272, %v1211, %v1227
    %v1291 = vsel %vm1272, %v1213, %v1229
    %v1292 = vsel %vm1272, %v1215, %v1231
    %v1293 = vsel %vm1272, %v1217, %v1233
    %v1294 = vsel %vm1272, %v1219, %v1235
    %v1295 = vsel %vm1272, %v1221, %v1237
    %v1296 = vsel %vm1272, %v1223, %v1239
    %v1297 = vsel %vm1272, %v1257, %v1209
    %v1298 = vsel %vm1272, %v1259, %v1211
    %v1299 = vsel %vm1272, %v1261, %v1213
    %v1300 = vsel %vm1272, %v1263, %v1215
    %v1301 = vsel %vm1272, %v1265, %v1217
    %v1302 = vsel %vm1272, %v1267, %v1219
    %v1303 = vsel %vm1272, %v1269, %v1221
    %v1304 = vsel %vm1272, %v1271, %v1223
    %s1305 = scalar_lea.vmem %s1, 6
    %v1306 = vld [vmem:[%s1305] ss:$8 sm:$0xf]
    %v1308 = vlaneseq
    %v1309 = vshrl.u32 %v1308, 7
    %v1310 = vsub.s32 0, %v1309
    %v1311 = vrot.slane %v1306, %v1310
    %v1312 = vlaneseq
    %v1313 = vshrl.u32 %v1312, 7
    %v1314 = vsub.s32 1, %v1313
    %v1315 = vrot.slane %v1306, %v1314
    %v1316 = vlaneseq
    %v1317 = vshrl.u32 %v1316, 7
    %v1318 = vsub.s32 2, %v1317
    %v1319 = vrot.slane %v1306, %v1318
    %v1320 = vlaneseq
    %v1321 = vshrl.u32 %v1320, 7
    %v1322 = vsub.s32 3, %v1321
    %v1323 = vrot.slane %v1306, %v1322
    %v1328 = vmul.f32 %v1289, %v1311
    %v1329 = vmul.f32 %v1281, %v1315
    %v1330 = vmul.f32 %v1273, %v1319
    %v1331 = vmul.f32 %v1297, %v1323
    %v1332 = vmul.f32 %v1290, %v1311
    %v1333 = vmul.f32 %v1282, %v1315
    %v1334 = vmul.f32 %v1274, %v1319
    %v1335 = vmul.f32 %v1298, %v1323
    %v1336 = vmul.f32 %v1291, %v1311
    %v1337 = vmul.f32 %v1283, %v1315
    %v1338 = vmul.f32 %v1275, %v1319
    %v1339 = vmul.f32 %v1299, %v1323
    %v1340 = vmul.f32 %v1292, %v1311
    %v1341 = vmul.f32 %v1284, %v1315
    %v1342 = vmul.f32 %v1276, %v1319
    %v1343 = vmul.f32 %v1300, %v1323
    %v1344 = vmul.f32 %v1293, %v1311
    %v1345 = vmul.f32 %v1285, %v1315
    %v1346 = vmul.f32 %v1277, %v1319
    %v1347 = vmul.f32 %v1301, %v1323
    %v1348 = vmul.f32 %v1294, %v1311
    %v1349 = vmul.f32 %v1286, %v1315
    %v1350 = vmul.f32 %v1278, %v1319
    %v1351 = vmul.f32 %v1302, %v1323
    %v1352 = vmul.f32 %v1295, %v1311
    %v1353 = vmul.f32 %v1287, %v1315
    %v1354 = vmul.f32 %v1279, %v1319
    %v1355 = vmul.f32 %v1303, %v1323
    %v1356 = vmul.f32 %v1296, %v1311
    %v1357 = vmul.f32 %v1288, %v1315
    %v1358 = vmul.f32 %v1280, %v1319
    %v1359 = vmul.f32 %v1304, %v1323
    %1360 = vrot.lane.b32.xlu0 %v360, 112
    %v1361 = vpop.permute.xlu0 %1360
    %1362 = vrot.lane.b32.xlu0 %v364, 112
    %v1363 = vpop.permute.xlu0 %1362
    %1364 = vrot.lane.b32.xlu0 %v368, 112
    %v1365 = vpop.permute.xlu0 %1364
    %1366 = vrot.lane.b32.xlu0 %v372, 112
    %v1367 = vpop.permute.xlu0 %1366
    %1368 = vrot.lane.b32.xlu0 %v376, 112
    %v1369 = vpop.permute.xlu0 %1368
    %1370 = vrot.lane.b32.xlu0 %v380, 112
    %v1371 = vpop.permute.xlu0 %1370
    %1372 = vrot.lane.b32.xlu0 %v384, 112
    %v1373 = vpop.permute.xlu0 %1372
    %1374 = vrot.lane.b32.xlu0 %v388, 112
    %v1375 = vpop.permute.xlu0 %1374
    %1376 = vrot.lane.b32.xlu0 %v361, 112
    %v1377 = vpop.permute.xlu0 %1376
    %1378 = vrot.lane.b32.xlu0 %v365, 112
    %v1379 = vpop.permute.xlu0 %1378
    %1380 = vrot.lane.b32.xlu0 %v369, 112
    %v1381 = vpop.permute.xlu0 %1380
    %1382 = vrot.lane.b32.xlu0 %v373, 112
    %v1383 = vpop.permute.xlu0 %1382
    %1384 = vrot.lane.b32.xlu0 %v377, 112
    %v1385 = vpop.permute.xlu0 %1384
    %1386 = vrot.lane.b32.xlu0 %v381, 112
    %v1387 = vpop.permute.xlu0 %1386
    %1388 = vrot.lane.b32.xlu0 %v385, 112
    %v1389 = vpop.permute.xlu0 %1388
    %1390 = vrot.lane.b32.xlu0 %v389, 112
    %v1391 = vpop.permute.xlu0 %1390
    %1392 = vrot.lane.b32.xlu0 %v362, 112
    %v1393 = vpop.permute.xlu0 %1392
    %1394 = vrot.lane.b32.xlu0 %v366, 112
    %v1395 = vpop.permute.xlu0 %1394
    %1396 = vrot.lane.b32.xlu0 %v370, 112
    %v1397 = vpop.permute.xlu0 %1396
    %1398 = vrot.lane.b32.xlu0 %v374, 112
    %v1399 = vpop.permute.xlu0 %1398
    %1400 = vrot.lane.b32.xlu0 %v378, 112
    %v1401 = vpop.permute.xlu0 %1400
    %1402 = vrot.lane.b32.xlu0 %v382, 112
    %v1403 = vpop.permute.xlu0 %1402
    %1404 = vrot.lane.b32.xlu0 %v386, 112
    %v1405 = vpop.permute.xlu0 %1404
    %1406 = vrot.lane.b32.xlu0 %v390, 112
    %v1407 = vpop.permute.xlu0 %1406
    %1408 = vrot.lane.b32.xlu0 %v363, 112
    %v1409 = vpop.permute.xlu0 %1408
    %1410 = vrot.lane.b32.xlu0 %v367, 112
    %v1411 = vpop.permute.xlu0 %1410
    %1412 = vrot.lane.b32.xlu0 %v371, 112
    %v1413 = vpop.permute.xlu0 %1412
    %1414 = vrot.lane.b32.xlu0 %v375, 112
    %v1415 = vpop.permute.xlu0 %1414
    %1416 = vrot.lane.b32.xlu0 %v379, 112
    %v1417 = vpop.permute.xlu0 %1416
    %1418 = vrot.lane.b32.xlu0 %v383, 112
    %v1419 = vpop.permute.xlu0 %1418
    %1420 = vrot.lane.b32.xlu0 %v387, 112
    %v1421 = vpop.permute.xlu0 %1420
    %1422 = vrot.lane.b32.xlu0 %v391, 112
    %v1423 = vpop.permute.xlu0 %1422
    %vm1424 = vcmp.lt.s32.totalorder %v457, 112
    %v1425 = vsel %vm1424, %v1393, %v1409
    %v1426 = vsel %vm1424, %v1395, %v1411
    %v1427 = vsel %vm1424, %v1397, %v1413
    %v1428 = vsel %vm1424, %v1399, %v1415
    %v1429 = vsel %vm1424, %v1401, %v1417
    %v1430 = vsel %vm1424, %v1403, %v1419
    %v1431 = vsel %vm1424, %v1405, %v1421
    %v1432 = vsel %vm1424, %v1407, %v1423
    %v1433 = vsel %vm1424, %v1377, %v1393
    %v1434 = vsel %vm1424, %v1379, %v1395
    %v1435 = vsel %vm1424, %v1381, %v1397
    %v1436 = vsel %vm1424, %v1383, %v1399
    %v1437 = vsel %vm1424, %v1385, %v1401
    %v1438 = vsel %vm1424, %v1387, %v1403
    %v1439 = vsel %vm1424, %v1389, %v1405
    %v1440 = vsel %vm1424, %v1391, %v1407
    %v1441 = vsel %vm1424, %v1361, %v1377
    %v1442 = vsel %vm1424, %v1363, %v1379
    %v1443 = vsel %vm1424, %v1365, %v1381
    %v1444 = vsel %vm1424, %v1367, %v1383
    %v1445 = vsel %vm1424, %v1369, %v1385
    %v1446 = vsel %vm1424, %v1371, %v1387
    %v1447 = vsel %vm1424, %v1373, %v1389
    %v1448 = vsel %vm1424, %v1375, %v1391
    %v1449 = vsel %vm1424, %v1409, %v1361
    %v1450 = vsel %vm1424, %v1411, %v1363
    %v1451 = vsel %vm1424, %v1413, %v1365
    %v1452 = vsel %vm1424, %v1415, %v1367
    %v1453 = vsel %vm1424, %v1417, %v1369
    %v1454 = vsel %vm1424, %v1419, %v1371
    %v1455 = vsel %vm1424, %v1421, %v1373
    %v1456 = vsel %vm1424, %v1423, %v1375
    %s1457 = scalar_lea.vmem %s1, 7
    %v1458 = vld [vmem:[%s1457] ss:$8 sm:$0xf]
    %v1460 = vlaneseq
    %v1461 = vshrl.u32 %v1460, 7
    %v1462 = vsub.s32 0, %v1461
    %v1463 = vrot.slane %v1458, %v1462
    %v1464 = vlaneseq
    %v1465 = vshrl.u32 %v1464, 7
    %v1466 = vsub.s32 1, %v1465
    %v1467 = vrot.slane %v1458, %v1466
    %v1468 = vlaneseq
    %v1469 = vshrl.u32 %v1468, 7
    %v1470 = vsub.s32 2, %v1469
    %v1471 = vrot.slane %v1458, %v1470
    %v1472 = vlaneseq
    %v1473 = vshrl.u32 %v1472, 7
    %v1474 = vsub.s32 3, %v1473
    %v1475 = vrot.slane %v1458, %v1474
    %v1480 = vmul.f32 %v1441, %v1463
    %v1481 = vmul.f32 %v1433, %v1467
    %v1482 = vmul.f32 %v1425, %v1471
    %v1483 = vmul.f32 %v1449, %v1475
    %v1484 = vmul.f32 %v1442, %v1463
    %v1485 = vmul.f32 %v1434, %v1467
    %v1486 = vmul.f32 %v1426, %v1471
    %v1487 = vmul.f32 %v1450, %v1475
    %v1488 = vmul.f32 %v1443, %v1463
    %v1489 = vmul.f32 %v1435, %v1467
    %v1490 = vmul.f32 %v1427, %v1471
    %v1491 = vmul.f32 %v1451, %v1475
    %v1492 = vmul.f32 %v1444, %v1463
    %v1493 = vmul.f32 %v1436, %v1467
    %v1494 = vmul.f32 %v1428, %v1471
    %v1495 = vmul.f32 %v1452, %v1475
    %v1496 = vmul.f32 %v1445, %v1463
    %v1497 = vmul.f32 %v1437, %v1467
    %v1498 = vmul.f32 %v1429, %v1471
    %v1499 = vmul.f32 %v1453, %v1475
    %v1500 = vmul.f32 %v1446, %v1463
    %v1501 = vmul.f32 %v1438, %v1467
    %v1502 = vmul.f32 %v1430, %v1471
    %v1503 = vmul.f32 %v1454, %v1475
    %v1504 = vmul.f32 %v1447, %v1463
    %v1505 = vmul.f32 %v1439, %v1467
    %v1506 = vmul.f32 %v1431, %v1471
    %v1507 = vmul.f32 %v1455, %v1475
    %v1508 = vmul.f32 %v1448, %v1463
    %v1509 = vmul.f32 %v1440, %v1467
    %v1510 = vmul.f32 %v1432, %v1471
    %v1511 = vmul.f32 %v1456, %v1475
    %1512 = vrot.lane.b32.xlu0 %v360, 111
    %v1513 = vpop.permute.xlu0 %1512
    %1514 = vrot.lane.b32.xlu0 %v364, 111
    %v1515 = vpop.permute.xlu0 %1514
    %1516 = vrot.lane.b32.xlu0 %v368, 111
    %v1517 = vpop.permute.xlu0 %1516
    %1518 = vrot.lane.b32.xlu0 %v372, 111
    %v1519 = vpop.permute.xlu0 %1518
    %1520 = vrot.lane.b32.xlu0 %v376, 111
    %v1521 = vpop.permute.xlu0 %1520
    %1522 = vrot.lane.b32.xlu0 %v380, 111
    %v1523 = vpop.permute.xlu0 %1522
    %1524 = vrot.lane.b32.xlu0 %v384, 111
    %v1525 = vpop.permute.xlu0 %1524
    %1526 = vrot.lane.b32.xlu0 %v388, 111
    %v1527 = vpop.permute.xlu0 %1526
    %1528 = vrot.lane.b32.xlu0 %v361, 111
    %v1529 = vpop.permute.xlu0 %1528
    %1530 = vrot.lane.b32.xlu0 %v365, 111
    %v1531 = vpop.permute.xlu0 %1530
    %1532 = vrot.lane.b32.xlu0 %v369, 111
    %v1533 = vpop.permute.xlu0 %1532
    %1534 = vrot.lane.b32.xlu0 %v373, 111
    %v1535 = vpop.permute.xlu0 %1534
    %1536 = vrot.lane.b32.xlu0 %v377, 111
    %v1537 = vpop.permute.xlu0 %1536
    %1538 = vrot.lane.b32.xlu0 %v381, 111
    %v1539 = vpop.permute.xlu0 %1538
    %1540 = vrot.lane.b32.xlu0 %v385, 111
    %v1541 = vpop.permute.xlu0 %1540
    %1542 = vrot.lane.b32.xlu0 %v389, 111
    %v1543 = vpop.permute.xlu0 %1542
    %1544 = vrot.lane.b32.xlu0 %v362, 111
    %v1545 = vpop.permute.xlu0 %1544
    %1546 = vrot.lane.b32.xlu0 %v366, 111
    %v1547 = vpop.permute.xlu0 %1546
    %1548 = vrot.lane.b32.xlu0 %v370, 111
    %v1549 = vpop.permute.xlu0 %1548
    %1550 = vrot.lane.b32.xlu0 %v374, 111
    %v1551 = vpop.permute.xlu0 %1550
    %1552 = vrot.lane.b32.xlu0 %v378, 111
    %v1553 = vpop.permute.xlu0 %1552
    %1554 = vrot.lane.b32.xlu0 %v382, 111
    %v1555 = vpop.permute.xlu0 %1554
    %1556 = vrot.lane.b32.xlu0 %v386, 111
    %v1557 = vpop.permute.xlu0 %1556
    %1558 = vrot.lane.b32.xlu0 %v390, 111
    %v1559 = vpop.permute.xlu0 %1558
    %1560 = vrot.lane.b32.xlu0 %v363, 111
    %v1561 = vpop.permute.xlu0 %1560
    %1562 = vrot.lane.b32.xlu0 %v367, 111
    %v1563 = vpop.permute.xlu0 %1562
    %1564 = vrot.lane.b32.xlu0 %v371, 111
    %v1565 = vpop.permute.xlu0 %1564
    %1566 = vrot.lane.b32.xlu0 %v375, 111
    %v1567 = vpop.permute.xlu0 %1566
    %1568 = vrot.lane.b32.xlu0 %v379, 111
    %v1569 = vpop.permute.xlu0 %1568
    %1570 = vrot.lane.b32.xlu0 %v383, 111
    %v1571 = vpop.permute.xlu0 %1570
    %1572 = vrot.lane.b32.xlu0 %v387, 111
    %v1573 = vpop.permute.xlu0 %1572
    %1574 = vrot.lane.b32.xlu0 %v391, 111
    %v1575 = vpop.permute.xlu0 %1574
    %vm1576 = vcmp.lt.s32.totalorder %v457, 111
    %v1577 = vsel %vm1576, %v1545, %v1561
    %v1578 = vsel %vm1576, %v1547, %v1563
    %v1579 = vsel %vm1576, %v1549, %v1565
    %v1580 = vsel %vm1576, %v1551, %v1567
    %v1581 = vsel %vm1576, %v1553, %v1569
    %v1582 = vsel %vm1576, %v1555, %v1571
    %v1583 = vsel %vm1576, %v1557, %v1573
    %v1584 = vsel %vm1576, %v1559, %v1575
    %v1585 = vsel %vm1576, %v1529, %v1545
    %v1586 = vsel %vm1576, %v1531, %v1547
    %v1587 = vsel %vm1576, %v1533, %v1549
    %v1588 = vsel %vm1576, %v1535, %v1551
    %v1589 = vsel %vm1576, %v1537, %v1553
    %v1590 = vsel %vm1576, %v1539, %v1555
    %v1591 = vsel %vm1576, %v1541, %v1557
    %v1592 = vsel %vm1576, %v1543, %v1559
    %v1593 = vsel %vm1576, %v1513, %v1529
    %v1594 = vsel %vm1576, %v1515, %v1531
    %v1595 = vsel %vm1576, %v1517, %v1533
    %v1596 = vsel %vm1576, %v1519, %v1535
    %v1597 = vsel %vm1576, %v1521, %v1537
    %v1598 = vsel %vm1576, %v1523, %v1539
    %v1599 = vsel %vm1576, %v1525, %v1541
    %v1600 = vsel %vm1576, %v1527, %v1543
    %v1601 = vsel %vm1576, %v1561, %v1513
    %v1602 = vsel %vm1576, %v1563, %v1515
    %v1603 = vsel %vm1576, %v1565, %v1517
    %v1604 = vsel %vm1576, %v1567, %v1519
    %v1605 = vsel %vm1576, %v1569, %v1521
    %v1606 = vsel %vm1576, %v1571, %v1523
    %v1607 = vsel %vm1576, %v1573, %v1525
    %v1608 = vsel %vm1576, %v1575, %v1527
    %s1609 = scalar_lea.vmem %s1, 32
    %v1610 = vld [vmem:[%s1609] ss:$8 sm:$0xf]
    %v1612 = vlaneseq
    %v1613 = vshrl.u32 %v1612, 7
    %v1614 = vsub.s32 0, %v1613
    %v1615 = vrot.slane %v1610, %v1614
    %v1616 = vlaneseq
    %v1617 = vshrl.u32 %v1616, 7
    %v1618 = vsub.s32 1, %v1617
    %v1619 = vrot.slane %v1610, %v1618
    %v1620 = vlaneseq
    %v1621 = vshrl.u32 %v1620, 7
    %v1622 = vsub.s32 2, %v1621
    %v1623 = vrot.slane %v1610, %v1622
    %v1624 = vlaneseq
    %v1625 = vshrl.u32 %v1624, 7
    %v1626 = vsub.s32 3, %v1625
    %v1627 = vrot.slane %v1610, %v1626
    %v1632 = vmul.f32 %v1593, %v1615
    %v1633 = vmul.f32 %v1585, %v1619
    %v1634 = vmul.f32 %v1577, %v1623
    %v1635 = vmul.f32 %v1601, %v1627
    %v1636 = vmul.f32 %v1594, %v1615
    %v1637 = vmul.f32 %v1586, %v1619
    %v1638 = vmul.f32 %v1578, %v1623
    %v1639 = vmul.f32 %v1602, %v1627
    %v1640 = vmul.f32 %v1595, %v1615
    %v1641 = vmul.f32 %v1587, %v1619
    %v1642 = vmul.f32 %v1579, %v1623
    %v1643 = vmul.f32 %v1603, %v1627
    %v1644 = vmul.f32 %v1596, %v1615
    %v1645 = vmul.f32 %v1588, %v1619
    %v1646 = vmul.f32 %v1580, %v1623
    %v1647 = vmul.f32 %v1604, %v1627
    %v1648 = vmul.f32 %v1597, %v1615
    %v1649 = vmul.f32 %v1589, %v1619
    %v1650 = vmul.f32 %v1581, %v1623
    %v1651 = vmul.f32 %v1605, %v1627
    %v1652 = vmul.f32 %v1598, %v1615
    %v1653 = vmul.f32 %v1590, %v1619
    %v1654 = vmul.f32 %v1582, %v1623
    %v1655 = vmul.f32 %v1606, %v1627
    %v1656 = vmul.f32 %v1599, %v1615
    %v1657 = vmul.f32 %v1591, %v1619
    %v1658 = vmul.f32 %v1583, %v1623
    %v1659 = vmul.f32 %v1607, %v1627
    %v1660 = vmul.f32 %v1600, %v1615
    %v1661 = vmul.f32 %v1592, %v1619
    %v1662 = vmul.f32 %v1584, %v1623
    %v1663 = vmul.f32 %v1608, %v1627
    %v1664 = vld [vmem:[%s4] sm:$0xff]
    %v1665 = vld [vmem:[%s4 + $0x8] sm:$0xff]
    %v1666 = vld [vmem:[%s4 + $0x10] sm:$0xff]
    %v1667 = vld [vmem:[%s4 + $0x18] sm:$0xff]
    %v1668 = vld [vmem:[%s4 + $0x20] sm:$0xff]
    %v1669 = vld [vmem:[%s4 + $0x28] sm:$0xff]
    %v1670 = vld [vmem:[%s4 + $0x30] sm:$0xff]
    %v1671 = vld [vmem:[%s4 + $0x38] sm:$0xff]
    %v1672 = vld [vmem:[%s4 + $0x40] sm:$0xff]
    %v1673 = vld [vmem:[%s4 + $0x48] sm:$0xff]
    %v1674 = vld [vmem:[%s4 + $0x50] sm:$0xff]
    %v1675 = vld [vmem:[%s4 + $0x58] sm:$0xff]
    %v1676 = vld [vmem:[%s4 + $0x60] sm:$0xff]
    %v1677 = vld [vmem:[%s4 + $0x68] sm:$0xff]
    %v1678 = vld [vmem:[%s4 + $0x70] sm:$0xff]
    %v1679 = vld [vmem:[%s4 + $0x78] sm:$0xff]
    %v1680 = vld [vmem:[%s4 + $0x80] sm:$0xff]
    %v1681 = vld [vmem:[%s4 + $0x88] sm:$0xff]
    %v1682 = vld [vmem:[%s4 + $0x90] sm:$0xff]
    %v1683 = vld [vmem:[%s4 + $0x98] sm:$0xff]
    %v1684 = vld [vmem:[%s4 + $0xa0] sm:$0xff]
    %v1685 = vld [vmem:[%s4 + $0xa8] sm:$0xff]
    %v1686 = vld [vmem:[%s4 + $0xb0] sm:$0xff]
    %v1687 = vld [vmem:[%s4 + $0xb8] sm:$0xff]
    %v1688 = vld [vmem:[%s4 + $0xc0] sm:$0xff]
    %v1689 = vld [vmem:[%s4 + $0xc8] sm:$0xff]
    %v1690 = vld [vmem:[%s4 + $0xd0] sm:$0xff]
    %v1691 = vld [vmem:[%s4 + $0xd8] sm:$0xff]
    %v1692 = vld [vmem:[%s4 + $0xe0] sm:$0xff]
    %v1693 = vld [vmem:[%s4 + $0xe8] sm:$0xff]
    %v1694 = vld [vmem:[%s4 + $0xf0] sm:$0xff]
    %v1695 = vld [vmem:[%s4 + $0xf8] sm:$0xff]
    %v1696 = vld [vmem:[%s4 + $0x100] sm:$0xff]
    %v1697 = vld [vmem:[%s4 + $0x108] sm:$0xff]
    %v1698 = vld [vmem:[%s4 + $0x110] sm:$0xff]
    %v1699 = vld [vmem:[%s4 + $0x118] sm:$0xff]
    %v1700 = vld [vmem:[%s4 + $0x120] sm:$0xff]
    %v1701 = vld [vmem:[%s4 + $0x128] sm:$0xff]
    %v1702 = vld [vmem:[%s4 + $0x130] sm:$0xff]
    %v1703 = vld [vmem:[%s4 + $0x138] sm:$0xff]
    %v1704 = vld [vmem:[%s4 + $0x140] sm:$0xff]
    %v1705 = vld [vmem:[%s4 + $0x148] sm:$0xff]
    %v1706 = vld [vmem:[%s4 + $0x150] sm:$0xff]
    %v1707 = vld [vmem:[%s4 + $0x158] sm:$0xff]
    %v1708 = vld [vmem:[%s4 + $0x160] sm:$0xff]
    %v1709 = vld [vmem:[%s4 + $0x168] sm:$0xff]
    %v1710 = vld [vmem:[%s4 + $0x170] sm:$0xff]
    %v1711 = vld [vmem:[%s4 + $0x178] sm:$0xff]
    %v1712 = vld [vmem:[%s4 + $0x180] sm:$0xff]
    %v1713 = vld [vmem:[%s4 + $0x188] sm:$0xff]
    %v1714 = vld [vmem:[%s4 + $0x190] sm:$0xff]
    %v1715 = vld [vmem:[%s4 + $0x198] sm:$0xff]
    %v1716 = vld [vmem:[%s4 + $0x1a0] sm:$0xff]
    %v1717 = vld [vmem:[%s4 + $0x1a8] sm:$0xff]
    %v1718 = vld [vmem:[%s4 + $0x1b0] sm:$0xff]
    %v1719 = vld [vmem:[%s4 + $0x1b8] sm:$0xff]
    %v1720 = vld [vmem:[%s4 + $0x1c0] sm:$0xff]
    %v1721 = vld [vmem:[%s4 + $0x1c8] sm:$0xff]
    %v1722 = vld [vmem:[%s4 + $0x1d0] sm:$0xff]
    %v1723 = vld [vmem:[%s4 + $0x1d8] sm:$0xff]
    %v1724 = vld [vmem:[%s4 + $0x1e0] sm:$0xff]
    %v1725 = vld [vmem:[%s4 + $0x1e8] sm:$0xff]
    %v1726 = vld [vmem:[%s4 + $0x1f0] sm:$0xff]
    %v1727 = vld [vmem:[%s4 + $0x1f8] sm:$0xff]
    %v1728 = vld [vmem:[%s4 + $0x200] sm:$0xff]
    %v1729 = vld [vmem:[%s4 + $0x208] sm:$0xff]
    %v1730 = vld [vmem:[%s4 + $0x210] sm:$0xff]
    %v1731 = vld [vmem:[%s4 + $0x218] sm:$0xff]
    %v1732 = vld [vmem:[%s4 + $0x220] sm:$0xff]
    %v1733 = vld [vmem:[%s4 + $0x228] sm:$0xff]
    %v1734 = vld [vmem:[%s4 + $0x230] sm:$0xff]
    %v1735 = vld [vmem:[%s4 + $0x238] sm:$0xff]
    %v1736 = vld [vmem:[%s4 + $0x240] sm:$0xff]
    %v1737 = vld [vmem:[%s4 + $0x248] sm:$0xff]
    %v1738 = vld [vmem:[%s4 + $0x250] sm:$0xff]
    %v1739 = vld [vmem:[%s4 + $0x258] sm:$0xff]
    %v1740 = vld [vmem:[%s4 + $0x260] sm:$0xff]
    %v1741 = vld [vmem:[%s4 + $0x268] sm:$0xff]
    %v1742 = vld [vmem:[%s4 + $0x270] sm:$0xff]
    %v1743 = vld [vmem:[%s4 + $0x278] sm:$0xff]
    %v1744 = vld [vmem:[%s5] sm:$0xff]
    %v1745 = vld [vmem:[%s5 + $0x8] sm:$0xff]
    %v1746 = vld [vmem:[%s5 + $0x10] sm:$0xff]
    %v1747 = vld [vmem:[%s5 + $0x18] sm:$0xff]
    %v1748 = vld [vmem:[%s5 + $0x20] sm:$0xff]
    %v1749 = vld [vmem:[%s5 + $0x28] sm:$0xff]
    %v1750 = vld [vmem:[%s5 + $0x30] sm:$0xff]
    %v1751 = vld [vmem:[%s5 + $0x38] sm:$0xff]
    %v1752 = vld [vmem:[%s5 + $0x40] sm:$0xff]
    %v1753 = vld [vmem:[%s5 + $0x48] sm:$0xff]
    %v1754 = vld [vmem:[%s5 + $0x50] sm:$0xff]
    %v1755 = vld [vmem:[%s5 + $0x58] sm:$0xff]
    %v1756 = vld [vmem:[%s5 + $0x60] sm:$0xff]
    %v1757 = vld [vmem:[%s5 + $0x68] sm:$0xff]
    %v1758 = vld [vmem:[%s5 + $0x70] sm:$0xff]
    %v1759 = vld [vmem:[%s5 + $0x78] sm:$0xff]
    %1761 = vset.pattern.permute.xlu0 0
    %1762 = vperm.xlu0 %1761, %v1744
    %v1763 = vpop.permute.xlu0 %1762
    %1766 = vset.pattern.permute.xlu0 0
    %1767 = vperm.xlu0 %1766, %v1745
    %v1768 = vpop.permute.xlu0 %1767
    %1771 = vset.pattern.permute.xlu0 0
    %1772 = vperm.xlu0 %1771, %v1746
    %v1773 = vpop.permute.xlu0 %1772
    %1776 = vset.pattern.permute.xlu0 0
    %1777 = vperm.xlu0 %1776, %v1747
    %v1778 = vpop.permute.xlu0 %1777
    %1781 = vset.pattern.permute.xlu0 0
    %1782 = vperm.xlu0 %1781, %v1748
    %v1783 = vpop.permute.xlu0 %1782
    %1786 = vset.pattern.permute.xlu0 0
    %1787 = vperm.xlu0 %1786, %v1749
    %v1788 = vpop.permute.xlu0 %1787
    %1791 = vset.pattern.permute.xlu0 0
    %1792 = vperm.xlu0 %1791, %v1750
    %v1793 = vpop.permute.xlu0 %1792
    %1796 = vset.pattern.permute.xlu0 0
    %1797 = vperm.xlu0 %1796, %v1751
    %v1798 = vpop.permute.xlu0 %1797
    %1801 = vset.pattern.permute.xlu0 0
    %1802 = vperm.xlu0 %1801, %v1752
    %v1803 = vpop.permute.xlu0 %1802
    %1806 = vset.pattern.permute.xlu0 0
    %1807 = vperm.xlu0 %1806, %v1753
    %v1808 = vpop.permute.xlu0 %1807
    %1811 = vset.pattern.permute.xlu0 0
    %1812 = vperm.xlu0 %1811, %v1754
    %v1813 = vpop.permute.xlu0 %1812
    %1816 = vset.pattern.permute.xlu0 0
    %1817 = vperm.xlu0 %1816, %v1755
    %v1818 = vpop.permute.xlu0 %1817
    %1821 = vset.pattern.permute.xlu0 0
    %1822 = vperm.xlu0 %1821, %v1756
    %v1823 = vpop.permute.xlu0 %1822
    %1826 = vset.pattern.permute.xlu0 0
    %1827 = vperm.xlu0 %1826, %v1757
    %v1828 = vpop.permute.xlu0 %1827
    %1831 = vset.pattern.permute.xlu0 0
    %1832 = vperm.xlu0 %1831, %v1758
    %v1833 = vpop.permute.xlu0 %1832
    %1836 = vset.pattern.permute.xlu0 0
    %1837 = vperm.xlu0 %1836, %v1759
    %v1838 = vpop.permute.xlu0 %1837
    %vm1840 = vcmask 523264
    %v1842 = vsel %vm1840, %v1668, 0
    %v1845 = vsel %vm1840, %v1673, 0
    %v1848 = vsel %vm1840, %v1678, 0
    %v1851 = vsel %vm1840, %v1683, 0
    %v1854 = vsel %vm1840, %v1688, 0
    %v1857 = vsel %vm1840, %v1693, 0
    %v1860 = vsel %vm1840, %v1698, 0
    %v1863 = vsel %vm1840, %v1703, 0
    %v1866 = vsel %vm1840, %v1708, 0
    %v1869 = vsel %vm1840, %v1713, 0
    %v1872 = vsel %vm1840, %v1718, 0
    %v1875 = vsel %vm1840, %v1723, 0
    %v1878 = vsel %vm1840, %v1728, 0
    %v1881 = vsel %vm1840, %v1733, 0
    %v1884 = vsel %vm1840, %v1738, 0
    %v1887 = vsel %vm1840, %v1743, 0
    %1889 = vmatprep.subr.mxu0 %v694
    %1890 = vmatpush1.msra.mxu0 %v693
    %1891 = vmatprep.subr.mxu0 %v690
    %1892 = vmatpush1.msra.mxu0 %v689
    %1893 = vmatprep.subr.mxu0 %v686
    %1894 = vmatpush1.msra.mxu0 %v685
    %1895 = vmatprep.subr.mxu0 %v682
    %1896 = vmatpush1.msra.mxu0 %v681
    %1897 = vmatprep.subr.mxu0 %v678
    %1898 = vmatpush1.msra.mxu0 %v677
    %1899 = vmatprep.subr.mxu0 %v674
    %1900 = vmatpush1.msra.mxu0 %v673
    %1901 = vmatprep.subr.mxu0 %v670
    %1902 = vmatpush1.msra.mxu0 %v669
    %1903 = vmatprep.subr.mxu0 %v666
    %1904 = vmatpush1.msra.mxu0 %v665
    %1905 = vmatprep.subr.mxu0 %v542
    %1906 = vmatpush1.msra.mxu0 %v541
    %1907 = vmatprep.subr.mxu0 %v538
    %1908 = vmatpush1.msra.mxu0 %v537
    %1909 = vmatprep.subr.mxu0 %v534
    %1910 = vmatpush1.msra.mxu0 %v533
    %1911 = vmatprep.subr.mxu0 %v530
    %1912 = vmatpush1.msra.mxu0 %v529
    %1913 = vmatprep.subr.mxu0 %v526
    %1914 = vmatpush1.msra.mxu0 %v525
    %1915 = vmatprep.subr.mxu0 %v522
    %1916 = vmatpush1.msra.mxu0 %v521
    %1917 = vmatprep.subr.mxu0 %v518
    %1918 = vmatpush1.msra.mxu0 %v517
    %1919 = vmatprep.subr.mxu0 %v514
    %1920 = vmatpush1.msra.mxu0 %v513
    %1921 = vmatprep.subr.mxu0 %v998
    %1922 = vmatpush2.msra.mxu0 %v997
    %1923 = vmatprep.subr.mxu0 %v994
    %1924 = vmatpush2.msra.mxu0 %v993
    %1925 = vmatprep.subr.mxu0 %v990
    %1926 = vmatpush2.msra.mxu0 %v989
    %1927 = vmatprep.subr.mxu0 %v986
    %1928 = vmatpush2.msra.mxu0 %v985
    %1929 = vmatprep.subr.mxu0 %v982
    %1930 = vmatpush2.msra.mxu0 %v981
    %1931 = vmatprep.subr.mxu0 %v978
    %1932 = vmatpush2.msra.mxu0 %v977
    %1933 = vmatprep.subr.mxu0 %v974
    %1934 = vmatpush2.msra.mxu0 %v973
    %1935 = vmatprep.subr.mxu0 %v970
    %1936 = vmatpush2.msra.mxu0 %v969
    %1937 = vmatprep.subr.mxu0 %v846
    %1938 = vmatpush2.msra.mxu0 %v845
    %1939 = vmatprep.subr.mxu0 %v842
    %1940 = vmatpush2.msra.mxu0 %v841
    %1941 = vmatprep.subr.mxu0 %v838
    %1942 = vmatpush2.msra.mxu0 %v837
    %1943 = vmatprep.subr.mxu0 %v834
    %1944 = vmatpush2.msra.mxu0 %v833
    %1945 = vmatprep.subr.mxu0 %v830
    %1946 = vmatpush2.msra.mxu0 %v829
    %1947 = vmatprep.subr.mxu0 %v826
    %1948 = vmatpush2.msra.mxu0 %v825
    %1949 = vmatprep.subr.mxu0 %v822
    %1950 = vmatpush2.msra.mxu0 %v821
    %1951 = vmatprep.subr.mxu0 %v818
    %1952 = vmatpush2.msra.mxu0 %v817
    %1953 = vmatprep.mubr.f32.mxu0 %v1665
    %1954 = vmatmul.mubr.f32.gmra.mxu0 %v1664
    %v1955 = vpop.f32.mrf.mxu0
    %v1956 = vadd.f32 %v1763, %v1955
    %v1957 = vpop.f32.mrf.mxu0
    %v1958 = vadd.f32 %v1763, %v1957
    %1959 = vmatprep.mubr.f32.mxu0 %v1670
    %1960 = vmatmul.mubr.f32.gmra.mxu0 %v1669
    %v1961 = vpop.f32.mrf.mxu0
    %v1962 = vadd.f32 %v1768, %v1961
    %v1963 = vpop.f32.mrf.mxu0
    %v1964 = vadd.f32 %v1768, %v1963
    %1965 = vmatprep.mubr.f32.mxu0 %v1675
    %1966 = vmatmul.mubr.f32.gmra.mxu0 %v1674
    %v1967 = vpop.f32.mrf.mxu0
    %v1968 = vadd.f32 %v1773, %v1967
    %v1969 = vpop.f32.mrf.mxu0
    %v1970 = vadd.f32 %v1773, %v1969
    %1971 = vmatprep.mubr.f32.mxu0 %v1680
    %1972 = vmatmul.mubr.f32.gmra.mxu0 %v1679
    %v1973 = vpop.f32.mrf.mxu0
    %v1974 = vadd.f32 %v1778, %v1973
    %v1975 = vpop.f32.mrf.mxu0
    %v1976 = vadd.f32 %v1778, %v1975
    %1977 = vmatprep.mubr.f32.mxu0 %v1685
    %1978 = vmatmul.mubr.f32.gmra.mxu0 %v1684
    %v1979 = vpop.f32.mrf.mxu0
    %v1980 = vadd.f32 %v1783, %v1979
    %v1981 = vpop.f32.mrf.mxu0
    %v1982 = vadd.f32 %v1783, %v1981
    %1983 = vmatprep.mubr.f32.mxu0 %v1690
    %1984 = vmatmul.mubr.f32.gmra.mxu0 %v1689
    %v1985 = vpop.f32.mrf.mxu0
    %v1986 = vadd.f32 %v1788, %v1985
    %v1987 = vpop.f32.mrf.mxu0
    %v1988 = vadd.f32 %v1788, %v1987
    %1989 = vmatprep.mubr.f32.mxu0 %v1695
    %1990 = vmatmul.mubr.f32.gmra.mxu0 %v1694
    %v1991 = vpop.f32.mrf.mxu0
    %v1992 = vadd.f32 %v1793, %v1991
    %v1993 = vpop.f32.mrf.mxu0
    %v1994 = vadd.f32 %v1793, %v1993
    %1995 = vmatprep.mubr.f32.mxu0 %v1700
    %1996 = vmatmul.mubr.f32.gmra.mxu0 %v1699
    %v1997 = vpop.f32.mrf.mxu0
    %v1998 = vadd.f32 %v1798, %v1997
    %v1999 = vpop.f32.mrf.mxu0
    %v2000 = vadd.f32 %v1798, %v1999
    %2001 = vmatprep.mubr.f32.mxu0 %v1705
    %2002 = vmatmul.mubr.f32.gmra.mxu0 %v1704
    %v2003 = vpop.f32.mrf.mxu0
    %v2004 = vadd.f32 %v1803, %v2003
    %v2005 = vpop.f32.mrf.mxu0
    %v2006 = vadd.f32 %v1803, %v2005
    %2007 = vmatprep.mubr.f32.mxu0 %v1710
    %2008 = vmatmul.mubr.f32.gmra.mxu0 %v1709
    %v2009 = vpop.f32.mrf.mxu0
    %v2010 = vadd.f32 %v1808, %v2009
    %v2011 = vpop.f32.mrf.mxu0
    %v2012 = vadd.f32 %v1808, %v2011
    %2013 = vmatprep.mubr.f32.mxu0 %v1715
    %2014 = vmatmul.mubr.f32.gmra.mxu0 %v1714
    %v2015 = vpop.f32.mrf.mxu0
    %v2016 = vadd.f32 %v1813, %v2015
    %v2017 = vpop.f32.mrf.mxu0
    %v2018 = vadd.f32 %v1813, %v2017
    %2019 = vmatprep.mubr.f32.mxu0 %v1720
    %2020 = vmatmul.mubr.f32.gmra.mxu0 %v1719
    %v2021 = vpop.f32.mrf.mxu0
    %v2022 = vadd.f32 %v1818, %v2021
    %v2023 = vpop.f32.mrf.mxu0
    %v2024 = vadd.f32 %v1818, %v2023
    %2025 = vmatprep.mubr.f32.mxu0 %v1725
    %2026 = vmatmul.mubr.f32.gmra.mxu0 %v1724
    %v2027 = vpop.f32.mrf.mxu0
    %v2028 = vadd.f32 %v1823, %v2027
    %v2029 = vpop.f32.mrf.mxu0
    %v2030 = vadd.f32 %v1823, %v2029
    %2031 = vmatprep.mubr.f32.mxu0 %v1730
    %2032 = vmatmul.mubr.f32.gmra.mxu0 %v1729
    %v2033 = vpop.f32.mrf.mxu0
    %v2034 = vadd.f32 %v1828, %v2033
    %v2035 = vpop.f32.mrf.mxu0
    %v2036 = vadd.f32 %v1828, %v2035
    %2037 = vmatprep.mubr.f32.mxu0 %v1735
    %2038 = vmatmul.mubr.f32.gmra.mxu0 %v1734
    %v2039 = vpop.f32.mrf.mxu0
    %v2040 = vadd.f32 %v1833, %v2039
    %v2041 = vpop.f32.mrf.mxu0
    %v2042 = vadd.f32 %v1833, %v2041
    %2043 = vmatprep.mubr.f32.mxu0 %v1740
    %2044 = vmatmul.mubr.f32.gmra.mxu0 %v1739
    %v2045 = vpop.f32.mrf.mxu0
    %v2046 = vadd.f32 %v1838, %v2045
    %v2047 = vpop.f32.mrf.mxu0
    %v2048 = vadd.f32 %v1838, %v2047
    %2049 = vdwg.mxu0
    %2050 = vmatprep.subr.mxu0 %v1205
    %2051 = vmatpush1.msra.mxu0 %v1204
    %2052 = vmatprep.subr.mxu0 %v1201
    %2053 = vmatpush1.msra.mxu0 %v1200
    %2054 = vmatprep.subr.mxu0 %v1197
    %2055 = vmatpush1.msra.mxu0 %v1196
    %2056 = vmatprep.subr.mxu0 %v1193
    %2057 = vmatpush1.msra.mxu0 %v1192
    %2058 = vmatprep.subr.mxu0 %v1189
    %2059 = vmatpush1.msra.mxu0 %v1188
    %2060 = vmatprep.subr.mxu0 %v1185
    %2061 = vmatpush1.msra.mxu0 %v1184
    %2062 = vmatprep.subr.mxu0 %v1181
    %2063 = vmatpush1.msra.mxu0 %v1180
    %2064 = vmatprep.subr.mxu0 %v1177
    %2065 = vmatpush1.msra.mxu0 %v1176
    %2066 = vmatprep.subr.mxu0 %v1053
    %2067 = vmatpush1.msra.mxu0 %v1052
    %2068 = vmatprep.subr.mxu0 %v1049
    %2069 = vmatpush1.msra.mxu0 %v1048
    %2070 = vmatprep.subr.mxu0 %v1045
    %2071 = vmatpush1.msra.mxu0 %v1044
    %2072 = vmatprep.subr.mxu0 %v1041
    %2073 = vmatpush1.msra.mxu0 %v1040
    %2074 = vmatprep.subr.mxu0 %v1037
    %2075 = vmatpush1.msra.mxu0 %v1036
    %2076 = vmatprep.subr.mxu0 %v1033
    %2077 = vmatpush1.msra.mxu0 %v1032
    %2078 = vmatprep.subr.mxu0 %v1029
    %2079 = vmatpush1.msra.mxu0 %v1028
    %2080 = vmatprep.subr.mxu0 %v1025
    %2081 = vmatpush1.msra.mxu0 %v1024
    %2082 = vmatprep.subr.mxu0 %v1509
    %2083 = vmatpush2.msra.mxu0 %v1508
    %2084 = vmatprep.subr.mxu0 %v1505
    %2085 = vmatpush2.msra.mxu0 %v1504
    %2086 = vmatprep.subr.mxu0 %v1501
    %2087 = vmatpush2.msra.mxu0 %v1500
    %2088 = vmatprep.subr.mxu0 %v1497
    %2089 = vmatpush2.msra.mxu0 %v1496
    %2090 = vmatprep.subr.mxu0 %v1493
    %2091 = vmatpush2.msra.mxu0 %v1492
    %2092 = vmatprep.subr.mxu0 %v1489
    %2093 = vmatpush2.msra.mxu0 %v1488
    %2094 = vmatprep.subr.mxu0 %v1485
    %2095 = vmatpush2.msra.mxu0 %v1484
    %2096 = vmatprep.subr.mxu0 %v1481
    %2097 = vmatpush2.msra.mxu0 %v1480
    %2098 = vmatprep.subr.mxu0 %v1357
    %2099 = vmatpush2.msra.mxu0 %v1356
    %2100 = vmatprep.subr.mxu0 %v1353
    %2101 = vmatpush2.msra.mxu0 %v1352
    %2102 = vmatprep.subr.mxu0 %v1349
    %2103 = vmatpush2.msra.mxu0 %v1348
    %2104 = vmatprep.subr.mxu0 %v1345
    %2105 = vmatpush2.msra.mxu0 %v1344
    %2106 = vmatprep.subr.mxu0 %v1341
    %2107 = vmatpush2.msra.mxu0 %v1340
    %2108 = vmatprep.subr.mxu0 %v1337
    %2109 = vmatpush2.msra.mxu0 %v1336
    %2110 = vmatprep.subr.mxu0 %v1333
    %2111 = vmatpush2.msra.mxu0 %v1332
    %2112 = vmatprep.subr.mxu0 %v1329
    %2113 = vmatpush2.msra.mxu0 %v1328
    %2114 = vmatprep.mubr.f32.mxu0 %v1667
    %2115 = vmatmul.mubr.f32.gmra.mxu0 %v1666
    %v2116 = vpop.f32.mrf.mxu0
    %v2117 = vadd.f32 %v1956, %v2116
    %v2118 = vpop.f32.mrf.mxu0
    %v2119 = vadd.f32 %v1958, %v2118
    %2120 = vmatprep.mubr.f32.mxu0 %v1672
    %2121 = vmatmul.mubr.f32.gmra.mxu0 %v1671
    %v2122 = vpop.f32.mrf.mxu0
    %v2123 = vadd.f32 %v1962, %v2122
    %v2124 = vpop.f32.mrf.mxu0
    %v2125 = vadd.f32 %v1964, %v2124
    %2126 = vmatprep.mubr.f32.mxu0 %v1677
    %2127 = vmatmul.mubr.f32.gmra.mxu0 %v1676
    %v2128 = vpop.f32.mrf.mxu0
    %v2129 = vadd.f32 %v1968, %v2128
    %v2130 = vpop.f32.mrf.mxu0
    %v2131 = vadd.f32 %v1970, %v2130
    %2132 = vmatprep.mubr.f32.mxu0 %v1682
    %2133 = vmatmul.mubr.f32.gmra.mxu0 %v1681
    %v2134 = vpop.f32.mrf.mxu0
    %v2135 = vadd.f32 %v1974, %v2134
    %v2136 = vpop.f32.mrf.mxu0
    %v2137 = vadd.f32 %v1976, %v2136
    %2138 = vmatprep.mubr.f32.mxu0 %v1687
    %2139 = vmatmul.mubr.f32.gmra.mxu0 %v1686
    %v2140 = vpop.f32.mrf.mxu0
    %v2141 = vadd.f32 %v1980, %v2140
    %v2142 = vpop.f32.mrf.mxu0
    %v2143 = vadd.f32 %v1982, %v2142
    %2144 = vmatprep.mubr.f32.mxu0 %v1692
    %2145 = vmatmul.mubr.f32.gmra.mxu0 %v1691
    %v2146 = vpop.f32.mrf.mxu0
    %v2147 = vadd.f32 %v1986, %v2146
    %v2148 = vpop.f32.mrf.mxu0
    %v2149 = vadd.f32 %v1988, %v2148
    %2150 = vmatprep.mubr.f32.mxu0 %v1697
    %2151 = vmatmul.mubr.f32.gmra.mxu0 %v1696
    %v2152 = vpop.f32.mrf.mxu0
    %v2153 = vadd.f32 %v1992, %v2152
    %v2154 = vpop.f32.mrf.mxu0
    %v2155 = vadd.f32 %v1994, %v2154
    %2156 = vmatprep.mubr.f32.mxu0 %v1702
    %2157 = vmatmul.mubr.f32.gmra.mxu0 %v1701
    %v2158 = vpop.f32.mrf.mxu0
    %v2159 = vadd.f32 %v1998, %v2158
    %v2160 = vpop.f32.mrf.mxu0
    %v2161 = vadd.f32 %v2000, %v2160
    %2162 = vmatprep.mubr.f32.mxu0 %v1707
    %2163 = vmatmul.mubr.f32.gmra.mxu0 %v1706
    %v2164 = vpop.f32.mrf.mxu0
    %v2165 = vadd.f32 %v2004, %v2164
    %v2166 = vpop.f32.mrf.mxu0
    %v2167 = vadd.f32 %v2006, %v2166
    %2168 = vmatprep.mubr.f32.mxu0 %v1712
    %2169 = vmatmul.mubr.f32.gmra.mxu0 %v1711
    %v2170 = vpop.f32.mrf.mxu0
    %v2171 = vadd.f32 %v2010, %v2170
    %v2172 = vpop.f32.mrf.mxu0
    %v2173 = vadd.f32 %v2012, %v2172
    %2174 = vmatprep.mubr.f32.mxu0 %v1717
    %2175 = vmatmul.mubr.f32.gmra.mxu0 %v1716
    %v2176 = vpop.f32.mrf.mxu0
    %v2177 = vadd.f32 %v2016, %v2176
    %v2178 = vpop.f32.mrf.mxu0
    %v2179 = vadd.f32 %v2018, %v2178
    %2180 = vmatprep.mubr.f32.mxu0 %v1722
    %2181 = vmatmul.mubr.f32.gmra.mxu0 %v1721
    %v2182 = vpop.f32.mrf.mxu0
    %v2183 = vadd.f32 %v2022, %v2182
    %v2184 = vpop.f32.mrf.mxu0
    %v2185 = vadd.f32 %v2024, %v2184
    %2186 = vmatprep.mubr.f32.mxu0 %v1727
    %2187 = vmatmul.mubr.f32.gmra.mxu0 %v1726
    %v2188 = vpop.f32.mrf.mxu0
    %v2189 = vadd.f32 %v2028, %v2188
    %v2190 = vpop.f32.mrf.mxu0
    %v2191 = vadd.f32 %v2030, %v2190
    %2192 = vmatprep.mubr.f32.mxu0 %v1732
    %2193 = vmatmul.mubr.f32.gmra.mxu0 %v1731
    %v2194 = vpop.f32.mrf.mxu0
    %v2195 = vadd.f32 %v2034, %v2194
    %v2196 = vpop.f32.mrf.mxu0
    %v2197 = vadd.f32 %v2036, %v2196
    %2198 = vmatprep.mubr.f32.mxu0 %v1737
    %2199 = vmatmul.mubr.f32.gmra.mxu0 %v1736
    %v2200 = vpop.f32.mrf.mxu0
    %v2201 = vadd.f32 %v2040, %v2200
    %v2202 = vpop.f32.mrf.mxu0
    %v2203 = vadd.f32 %v2042, %v2202
    %2204 = vmatprep.mubr.f32.mxu0 %v1742
    %2205 = vmatmul.mubr.f32.gmra.mxu0 %v1741
    %v2206 = vpop.f32.mrf.mxu0
    %v2207 = vadd.f32 %v2046, %v2206
    %v2208 = vpop.f32.mrf.mxu0
    %v2209 = vadd.f32 %v2048, %v2208
    %2210 = vdwg.mxu0
    %2211 = vmatprep.subr.mxu0 0.0
    %2212 = vmatpush1.msra.mxu0 0.0
    %2213 = vmatprep.subr.mxu0 0.0
    %2214 = vmatpush1.msra.mxu0 0.0
    %2215 = vmatprep.subr.mxu0 0.0
    %2216 = vmatpush1.msra.mxu0 0.0
    %2217 = vmatprep.subr.mxu0 0.0
    %2218 = vmatpush1.msra.mxu0 0.0
    %2219 = vmatprep.subr.mxu0 0.0
    %2220 = vmatpush1.msra.mxu0 0.0
    %2221 = vmatprep.subr.mxu0 0.0
    %2222 = vmatpush1.msra.mxu0 0.0
    %2223 = vmatprep.subr.mxu0 0.0
    %2224 = vmatpush1.msra.mxu0 0.0
    %2225 = vmatprep.subr.mxu0 0.0
    %2226 = vmatpush1.msra.mxu0 0.0
    %2227 = vmatprep.subr.mxu0 %v1661
    %2228 = vmatpush1.msra.mxu0 %v1660
    %2229 = vmatprep.subr.mxu0 %v1657
    %2230 = vmatpush1.msra.mxu0 %v1656
    %2231 = vmatprep.subr.mxu0 %v1653
    %2232 = vmatpush1.msra.mxu0 %v1652
    %2233 = vmatprep.subr.mxu0 %v1649
    %2234 = vmatpush1.msra.mxu0 %v1648
    %2235 = vmatprep.subr.mxu0 %v1645
    %2236 = vmatpush1.msra.mxu0 %v1644
    %2237 = vmatprep.subr.mxu0 %v1641
    %2238 = vmatpush1.msra.mxu0 %v1640
    %2239 = vmatprep.subr.mxu0 %v1637
    %2240 = vmatpush1.msra.mxu0 %v1636
    %2241 = vmatprep.subr.mxu0 %v1633
    %2242 = vmatpush1.msra.mxu0 %v1632
    %2243 = vmatprep.subr.mxu0 0.0
    %2244 = vmatpush2.msra.mxu0 0.0
    %2245 = vmatprep.subr.mxu0 0.0
    %2246 = vmatpush2.msra.mxu0 0.0
    %2247 = vmatprep.subr.mxu0 0.0
    %2248 = vmatpush2.msra.mxu0 0.0
    %2249 = vmatprep.subr.mxu0 0.0
    %2250 = vmatpush2.msra.mxu0 0.0
    %2251 = vmatprep.subr.mxu0 0.0
    %2252 = vmatpush2.msra.mxu0 0.0
    %2253 = vmatprep.subr.mxu0 0.0
    %2254 = vmatpush2.msra.mxu0 0.0
    %2255 = vmatprep.subr.mxu0 0.0
    %2256 = vmatpush2.msra.mxu0 0.0
    %2257 = vmatprep.subr.mxu0 0.0
    %2258 = vmatpush2.msra.mxu0 0.0
    %2259 = vmatprep.subr.mxu0 0.0
    %2260 = vmatpush2.msra.mxu0 0.0
    %2261 = vmatprep.subr.mxu0 0.0
    %2262 = vmatpush2.msra.mxu0 0.0
    %2263 = vmatprep.subr.mxu0 0.0
    %2264 = vmatpush2.msra.mxu0 0.0
    %2265 = vmatprep.subr.mxu0 0.0
    %2266 = vmatpush2.msra.mxu0 0.0
    %2267 = vmatprep.subr.mxu0 0.0
    %2268 = vmatpush2.msra.mxu0 0.0
    %2269 = vmatprep.subr.mxu0 0.0
    %2270 = vmatpush2.msra.mxu0 0.0
    %2271 = vmatprep.subr.mxu0 0.0
    %2272 = vmatpush2.msra.mxu0 0.0
    %2273 = vmatprep.subr.mxu0 0.0
    %2274 = vmatpush2.msra.mxu0 0.0
    %2275 = vmatprep.mubr.f32.mxu0 0.0
    %2276 = vmatmul.mubr.f32.gmra.mxu0 %v1842
    %v2277 = vpop.f32.mrf.mxu0
    %v2278 = vadd.f32 %v2117, %v2277
    %v2279 = vpop.f32.mrf.mxu0
    %v2280 = vadd.f32 %v2119, %v2279
    %2281 = vmatprep.mubr.f32.mxu0 0.0
    %2282 = vmatmul.mubr.f32.gmra.mxu0 %v1845
    %v2283 = vpop.f32.mrf.mxu0
    %v2284 = vadd.f32 %v2123, %v2283
    %v2285 = vpop.f32.mrf.mxu0
    %v2286 = vadd.f32 %v2125, %v2285
    %2287 = vmatprep.mubr.f32.mxu0 0.0
    %2288 = vmatmul.mubr.f32.gmra.mxu0 %v1848
    %v2289 = vpop.f32.mrf.mxu0
    %v2290 = vadd.f32 %v2129, %v2289
    %v2291 = vpop.f32.mrf.mxu0
    %v2292 = vadd.f32 %v2131, %v2291
    %2293 = vmatprep.mubr.f32.mxu0 0.0
    %2294 = vmatmul.mubr.f32.gmra.mxu0 %v1851
    %v2295 = vpop.f32.mrf.mxu0
    %v2296 = vadd.f32 %v2135, %v2295
    %v2297 = vpop.f32.mrf.mxu0
    %v2298 = vadd.f32 %v2137, %v2297
    %2299 = vmatprep.mubr.f32.mxu0 0.0
    %2300 = vmatmul.mubr.f32.gmra.mxu0 %v1854
    %v2301 = vpop.f32.mrf.mxu0
    %v2302 = vadd.f32 %v2141, %v2301
    %v2303 = vpop.f32.mrf.mxu0
    %v2304 = vadd.f32 %v2143, %v2303
    %2305 = vmatprep.mubr.f32.mxu0 0.0
    %2306 = vmatmul.mubr.f32.gmra.mxu0 %v1857
    %v2307 = vpop.f32.mrf.mxu0
    %v2308 = vadd.f32 %v2147, %v2307
    %v2309 = vpop.f32.mrf.mxu0
    %v2310 = vadd.f32 %v2149, %v2309
    %2311 = vmatprep.mubr.f32.mxu0 0.0
    %2312 = vmatmul.mubr.f32.gmra.mxu0 %v1860
    %v2313 = vpop.f32.mrf.mxu0
    %v2314 = vadd.f32 %v2153, %v2313
    %v2315 = vpop.f32.mrf.mxu0
    %v2316 = vadd.f32 %v2155, %v2315
    %2317 = vmatprep.mubr.f32.mxu0 0.0
    %2318 = vmatmul.mubr.f32.gmra.mxu0 %v1863
    %v2319 = vpop.f32.mrf.mxu0
    %v2320 = vadd.f32 %v2159, %v2319
    %v2321 = vpop.f32.mrf.mxu0
    %v2322 = vadd.f32 %v2161, %v2321
    %2323 = vmatprep.mubr.f32.mxu0 0.0
    %2324 = vmatmul.mubr.f32.gmra.mxu0 %v1866
    %v2325 = vpop.f32.mrf.mxu0
    %v2326 = vadd.f32 %v2165, %v2325
    %v2327 = vpop.f32.mrf.mxu0
    %v2328 = vadd.f32 %v2167, %v2327
    %2329 = vmatprep.mubr.f32.mxu0 0.0
    %2330 = vmatmul.mubr.f32.gmra.mxu0 %v1869
    %v2331 = vpop.f32.mrf.mxu0
    %v2332 = vadd.f32 %v2171, %v2331
    %v2333 = vpop.f32.mrf.mxu0
    %v2334 = vadd.f32 %v2173, %v2333
    %2335 = vmatprep.mubr.f32.mxu0 0.0
    %2336 = vmatmul.mubr.f32.gmra.mxu0 %v1872
    %v2337 = vpop.f32.mrf.mxu0
    %v2338 = vadd.f32 %v2177, %v2337
    %v2339 = vpop.f32.mrf.mxu0
    %v2340 = vadd.f32 %v2179, %v2339
    %2341 = vmatprep.mubr.f32.mxu0 0.0
    %2342 = vmatmul.mubr.f32.gmra.mxu0 %v1875
    %v2343 = vpop.f32.mrf.mxu0
    %v2344 = vadd.f32 %v2183, %v2343
    %v2345 = vpop.f32.mrf.mxu0
    %v2346 = vadd.f32 %v2185, %v2345
    %2347 = vmatprep.mubr.f32.mxu0 0.0
    %2348 = vmatmul.mubr.f32.gmra.mxu0 %v1878
    %v2349 = vpop.f32.mrf.mxu0
    %v2350 = vadd.f32 %v2189, %v2349
    %v2351 = vpop.f32.mrf.mxu0
    %v2352 = vadd.f32 %v2191, %v2351
    %2353 = vmatprep.mubr.f32.mxu0 0.0
    %2354 = vmatmul.mubr.f32.gmra.mxu0 %v1881
    %v2355 = vpop.f32.mrf.mxu0
    %v2356 = vadd.f32 %v2195, %v2355
    %v2357 = vpop.f32.mrf.mxu0
    %v2358 = vadd.f32 %v2197, %v2357
    %2359 = vmatprep.mubr.f32.mxu0 0.0
    %2360 = vmatmul.mubr.f32.gmra.mxu0 %v1884
    %v2361 = vpop.f32.mrf.mxu0
    %v2362 = vadd.f32 %v2201, %v2361
    %v2363 = vpop.f32.mrf.mxu0
    %v2364 = vadd.f32 %v2203, %v2363
    %2365 = vmatprep.mubr.f32.mxu0 0.0
    %2366 = vmatmul.mubr.f32.gmra.mxu0 %v1887
    %v2367 = vpop.f32.mrf.mxu0
    %v2368 = vadd.f32 %v2207, %v2367
    %v2369 = vpop.f32.mrf.mxu0
    %v2370 = vadd.f32 %v2209, %v2369
    %2371 = vdwg.mxu0
    %2372 = vmatprep.subr.mxu0 %v696
    %2373 = vmatpush1.msra.mxu0 %v695
    %2374 = vmatprep.subr.mxu0 %v692
    %2375 = vmatpush1.msra.mxu0 %v691
    %2376 = vmatprep.subr.mxu0 %v688
    %2377 = vmatpush1.msra.mxu0 %v687
    %2378 = vmatprep.subr.mxu0 %v684
    %2379 = vmatpush1.msra.mxu0 %v683
    %2380 = vmatprep.subr.mxu0 %v680
    %2381 = vmatpush1.msra.mxu0 %v679
    %2382 = vmatprep.subr.mxu0 %v676
    %2383 = vmatpush1.msra.mxu0 %v675
    %2384 = vmatprep.subr.mxu0 %v672
    %2385 = vmatpush1.msra.mxu0 %v671
    %2386 = vmatprep.subr.mxu0 %v668
    %2387 = vmatpush1.msra.mxu0 %v667
    %2388 = vmatprep.subr.mxu0 %v544
    %2389 = vmatpush1.msra.mxu0 %v543
    %2390 = vmatprep.subr.mxu0 %v540
    %2391 = vmatpush1.msra.mxu0 %v539
    %2392 = vmatprep.subr.mxu0 %v536
    %2393 = vmatpush1.msra.mxu0 %v535
    %2394 = vmatprep.subr.mxu0 %v532
    %2395 = vmatpush1.msra.mxu0 %v531
    %2396 = vmatprep.subr.mxu0 %v528
    %2397 = vmatpush1.msra.mxu0 %v527
    %2398 = vmatprep.subr.mxu0 %v524
    %2399 = vmatpush1.msra.mxu0 %v523
    %2400 = vmatprep.subr.mxu0 %v520
    %2401 = vmatpush1.msra.mxu0 %v519
    %2402 = vmatprep.subr.mxu0 %v516
    %2403 = vmatpush1.msra.mxu0 %v515
    %2404 = vmatprep.subr.mxu0 %v1000
    %2405 = vmatpush2.msra.mxu0 %v999
    %2406 = vmatprep.subr.mxu0 %v996
    %2407 = vmatpush2.msra.mxu0 %v995
    %2408 = vmatprep.subr.mxu0 %v992
    %2409 = vmatpush2.msra.mxu0 %v991
    %2410 = vmatprep.subr.mxu0 %v988
    %2411 = vmatpush2.msra.mxu0 %v987
    %2412 = vmatprep.subr.mxu0 %v984
    %2413 = vmatpush2.msra.mxu0 %v983
    %2414 = vmatprep.subr.mxu0 %v980
    %2415 = vmatpush2.msra.mxu0 %v979
    %2416 = vmatprep.subr.mxu0 %v976
    %2417 = vmatpush2.msra.mxu0 %v975
    %2418 = vmatprep.subr.mxu0 %v972
    %2419 = vmatpush2.msra.mxu0 %v971
    %2420 = vmatprep.subr.mxu0 %v848
    %2421 = vmatpush2.msra.mxu0 %v847
    %2422 = vmatprep.subr.mxu0 %v844
    %2423 = vmatpush2.msra.mxu0 %v843
    %2424 = vmatprep.subr.mxu0 %v840
    %2425 = vmatpush2.msra.mxu0 %v839
    %2426 = vmatprep.subr.mxu0 %v836
    %2427 = vmatpush2.msra.mxu0 %v835
    %2428 = vmatprep.subr.mxu0 %v832
    %2429 = vmatpush2.msra.mxu0 %v831
    %2430 = vmatprep.subr.mxu0 %v828
    %2431 = vmatpush2.msra.mxu0 %v827
    %2432 = vmatprep.subr.mxu0 %v824
    %2433 = vmatpush2.msra.mxu0 %v823
    %2434 = vmatprep.subr.mxu0 %v820
    %2435 = vmatpush2.msra.mxu0 %v819
    %2436 = vmatprep.mubr.f32.mxu0 %v1665
    %2437 = vmatmul.mubr.f32.gmra.mxu0 %v1664
    %v2438 = vpop.f32.mrf.mxu0
    %v2439 = vadd.f32 %v1763, %v2438
    %v2440 = vpop.f32.mrf.mxu0
    %v2441 = vadd.f32 %v1763, %v2440
    %2442 = vmatprep.mubr.f32.mxu0 %v1670
    %2443 = vmatmul.mubr.f32.gmra.mxu0 %v1669
    %v2444 = vpop.f32.mrf.mxu0
    %v2445 = vadd.f32 %v1768, %v2444
    %v2446 = vpop.f32.mrf.mxu0
    %v2447 = vadd.f32 %v1768, %v2446
    %2448 = vmatprep.mubr.f32.mxu0 %v1675
    %2449 = vmatmul.mubr.f32.gmra.mxu0 %v1674
    %v2450 = vpop.f32.mrf.mxu0
    %v2451 = vadd.f32 %v1773, %v2450
    %v2452 = vpop.f32.mrf.mxu0
    %v2453 = vadd.f32 %v1773, %v2452
    %2454 = vmatprep.mubr.f32.mxu0 %v1680
    %2455 = vmatmul.mubr.f32.gmra.mxu0 %v1679
    %v2456 = vpop.f32.mrf.mxu0
    %v2457 = vadd.f32 %v1778, %v2456
    %v2458 = vpop.f32.mrf.mxu0
    %v2459 = vadd.f32 %v1778, %v2458
    %2460 = vmatprep.mubr.f32.mxu0 %v1685
    %2461 = vmatmul.mubr.f32.gmra.mxu0 %v1684
    %v2462 = vpop.f32.mrf.mxu0
    %v2463 = vadd.f32 %v1783, %v2462
    %v2464 = vpop.f32.mrf.mxu0
    %v2465 = vadd.f32 %v1783, %v2464
    %2466 = vmatprep.mubr.f32.mxu0 %v1690
    %2467 = vmatmul.mubr.f32.gmra.mxu0 %v1689
    %v2468 = vpop.f32.mrf.mxu0
    %v2469 = vadd.f32 %v1788, %v2468
    %v2470 = vpop.f32.mrf.mxu0
    %v2471 = vadd.f32 %v1788, %v2470
    %2472 = vmatprep.mubr.f32.mxu0 %v1695
    %2473 = vmatmul.mubr.f32.gmra.mxu0 %v1694
    %v2474 = vpop.f32.mrf.mxu0
    %v2475 = vadd.f32 %v1793, %v2474
    %v2476 = vpop.f32.mrf.mxu0
    %v2477 = vadd.f32 %v1793, %v2476
    %2478 = vmatprep.mubr.f32.mxu0 %v1700
    %2479 = vmatmul.mubr.f32.gmra.mxu0 %v1699
    %v2480 = vpop.f32.mrf.mxu0
    %v2481 = vadd.f32 %v1798, %v2480
    %v2482 = vpop.f32.mrf.mxu0
    %v2483 = vadd.f32 %v1798, %v2482
    %2484 = vmatprep.mubr.f32.mxu0 %v1705
    %2485 = vmatmul.mubr.f32.gmra.mxu0 %v1704
    %v2486 = vpop.f32.mrf.mxu0
    %v2487 = vadd.f32 %v1803, %v2486
    %v2488 = vpop.f32.mrf.mxu0
    %v2489 = vadd.f32 %v1803, %v2488
    %2490 = vmatprep.mubr.f32.mxu0 %v1710
    %2491 = vmatmul.mubr.f32.gmra.mxu0 %v1709
    %v2492 = vpop.f32.mrf.mxu0
    %v2493 = vadd.f32 %v1808, %v2492
    %v2494 = vpop.f32.mrf.mxu0
    %v2495 = vadd.f32 %v1808, %v2494
    %2496 = vmatprep.mubr.f32.mxu0 %v1715
    %2497 = vmatmul.mubr.f32.gmra.mxu0 %v1714
    %v2498 = vpop.f32.mrf.mxu0
    %v2499 = vadd.f32 %v1813, %v2498
    %v2500 = vpop.f32.mrf.mxu0
    %v2501 = vadd.f32 %v1813, %v2500
    %2502 = vmatprep.mubr.f32.mxu0 %v1720
    %2503 = vmatmul.mubr.f32.gmra.mxu0 %v1719
    %v2504 = vpop.f32.mrf.mxu0
    %v2505 = vadd.f32 %v1818, %v2504
    %v2506 = vpop.f32.mrf.mxu0
    %v2507 = vadd.f32 %v1818, %v2506
    %2508 = vmatprep.mubr.f32.mxu0 %v1725
    %2509 = vmatmul.mubr.f32.gmra.mxu0 %v1724
    %v2510 = vpop.f32.mrf.mxu0
    %v2511 = vadd.f32 %v1823, %v2510
    %v2512 = vpop.f32.mrf.mxu0
    %v2513 = vadd.f32 %v1823, %v2512
    %2514 = vmatprep.mubr.f32.mxu0 %v1730
    %2515 = vmatmul.mubr.f32.gmra.mxu0 %v1729
    %v2516 = vpop.f32.mrf.mxu0
    %v2517 = vadd.f32 %v1828, %v2516
    %v2518 = vpop.f32.mrf.mxu0
    %v2519 = vadd.f32 %v1828, %v2518
    %2520 = vmatprep.mubr.f32.mxu0 %v1735
    %2521 = vmatmul.mubr.f32.gmra.mxu0 %v1734
    %v2522 = vpop.f32.mrf.mxu0
    %v2523 = vadd.f32 %v1833, %v2522
    %v2524 = vpop.f32.mrf.mxu0
    %v2525 = vadd.f32 %v1833, %v2524
    %2526 = vmatprep.mubr.f32.mxu0 %v1740
    %2527 = vmatmul.mubr.f32.gmra.mxu0 %v1739
    %v2528 = vpop.f32.mrf.mxu0
    %v2529 = vadd.f32 %v1838, %v2528
    %v2530 = vpop.f32.mrf.mxu0
    %v2531 = vadd.f32 %v1838, %v2530
    %2532 = vdwg.mxu0
    %2533 = vmatprep.subr.mxu0 %v1207
    %2534 = vmatpush1.msra.mxu0 %v1206
    %2535 = vmatprep.subr.mxu0 %v1203
    %2536 = vmatpush1.msra.mxu0 %v1202
    %2537 = vmatprep.subr.mxu0 %v1199
    %2538 = vmatpush1.msra.mxu0 %v1198
    %2539 = vmatprep.subr.mxu0 %v1195
    %2540 = vmatpush1.msra.mxu0 %v1194
    %2541 = vmatprep.subr.mxu0 %v1191
    %2542 = vmatpush1.msra.mxu0 %v1190
    %2543 = vmatprep.subr.mxu0 %v1187
    %2544 = vmatpush1.msra.mxu0 %v1186
    %2545 = vmatprep.subr.mxu0 %v1183
    %2546 = vmatpush1.msra.mxu0 %v1182
    %2547 = vmatprep.subr.mxu0 %v1179
    %2548 = vmatpush1.msra.mxu0 %v1178
    %2549 = vmatprep.subr.mxu0 %v1055
    %2550 = vmatpush1.msra.mxu0 %v1054
    %2551 = vmatprep.subr.mxu0 %v1051
    %2552 = vmatpush1.msra.mxu0 %v1050
    %2553 = vmatprep.subr.mxu0 %v1047
    %2554 = vmatpush1.msra.mxu0 %v1046
    %2555 = vmatprep.subr.mxu0 %v1043
    %2556 = vmatpush1.msra.mxu0 %v1042
    %2557 = vmatprep.subr.mxu0 %v1039
    %2558 = vmatpush1.msra.mxu0 %v1038
    %2559 = vmatprep.subr.mxu0 %v1035
    %2560 = vmatpush1.msra.mxu0 %v1034
    %2561 = vmatprep.subr.mxu0 %v1031
    %2562 = vmatpush1.msra.mxu0 %v1030
    %2563 = vmatprep.subr.mxu0 %v1027
    %2564 = vmatpush1.msra.mxu0 %v1026
    %2565 = vmatprep.subr.mxu0 %v1511
    %2566 = vmatpush2.msra.mxu0 %v1510
    %2567 = vmatprep.subr.mxu0 %v1507
    %2568 = vmatpush2.msra.mxu0 %v1506
    %2569 = vmatprep.subr.mxu0 %v1503
    %2570 = vmatpush2.msra.mxu0 %v1502
    %2571 = vmatprep.subr.mxu0 %v1499
    %2572 = vmatpush2.msra.mxu0 %v1498
    %2573 = vmatprep.subr.mxu0 %v1495
    %2574 = vmatpush2.msra.mxu0 %v1494
    %2575 = vmatprep.subr.mxu0 %v1491
    %2576 = vmatpush2.msra.mxu0 %v1490
    %2577 = vmatprep.subr.mxu0 %v1487
    %2578 = vmatpush2.msra.mxu0 %v1486
    %2579 = vmatprep.subr.mxu0 %v1483
    %2580 = vmatpush2.msra.mxu0 %v1482
    %2581 = vmatprep.subr.mxu0 %v1359
    %2582 = vmatpush2.msra.mxu0 %v1358
    %2583 = vmatprep.subr.mxu0 %v1355
    %2584 = vmatpush2.msra.mxu0 %v1354
    %2585 = vmatprep.subr.mxu0 %v1351
    %2586 = vmatpush2.msra.mxu0 %v1350
    %2587 = vmatprep.subr.mxu0 %v1347
    %2588 = vmatpush2.msra.mxu0 %v1346
    %2589 = vmatprep.subr.mxu0 %v1343
    %2590 = vmatpush2.msra.mxu0 %v1342
    %2591 = vmatprep.subr.mxu0 %v1339
    %2592 = vmatpush2.msra.mxu0 %v1338
    %2593 = vmatprep.subr.mxu0 %v1335
    %2594 = vmatpush2.msra.mxu0 %v1334
    %2595 = vmatprep.subr.mxu0 %v1331
    %2596 = vmatpush2.msra.mxu0 %v1330
    %2597 = vmatprep.mubr.f32.mxu0 %v1667
    %2598 = vmatmul.mubr.f32.gmra.mxu0 %v1666
    %v2599 = vpop.f32.mrf.mxu0
    %v2600 = vadd.f32 %v2439, %v2599
    %v2601 = vpop.f32.mrf.mxu0
    %v2602 = vadd.f32 %v2441, %v2601
    %2603 = vmatprep.mubr.f32.mxu0 %v1672
    %2604 = vmatmul.mubr.f32.gmra.mxu0 %v1671
    %v2605 = vpop.f32.mrf.mxu0
    %v2606 = vadd.f32 %v2445, %v2605
    %v2607 = vpop.f32.mrf.mxu0
    %v2608 = vadd.f32 %v2447, %v2607
    %2609 = vmatprep.mubr.f32.mxu0 %v1677
    %2610 = vmatmul.mubr.f32.gmra.mxu0 %v1676
    %v2611 = vpop.f32.mrf.mxu0
    %v2612 = vadd.f32 %v2451, %v2611
    %v2613 = vpop.f32.mrf.mxu0
    %v2614 = vadd.f32 %v2453, %v2613
    %2615 = vmatprep.mubr.f32.mxu0 %v1682
    %2616 = vmatmul.mubr.f32.gmra.mxu0 %v1681
    %v2617 = vpop.f32.mrf.mxu0
    %v2618 = vadd.f32 %v2457, %v2617
    %v2619 = vpop.f32.mrf.mxu0
    %v2620 = vadd.f32 %v2459, %v2619
    %2621 = vmatprep.mubr.f32.mxu0 %v1687
    %2622 = vmatmul.mubr.f32.gmra.mxu0 %v1686
    %v2623 = vpop.f32.mrf.mxu0
    %v2624 = vadd.f32 %v2463, %v2623
    %v2625 = vpop.f32.mrf.mxu0
    %v2626 = vadd.f32 %v2465, %v2625
    %2627 = vmatprep.mubr.f32.mxu0 %v1692
    %2628 = vmatmul.mubr.f32.gmra.mxu0 %v1691
    %v2629 = vpop.f32.mrf.mxu0
    %v2630 = vadd.f32 %v2469, %v2629
    %v2631 = vpop.f32.mrf.mxu0
    %v2632 = vadd.f32 %v2471, %v2631
    %2633 = vmatprep.mubr.f32.mxu0 %v1697
    %2634 = vmatmul.mubr.f32.gmra.mxu0 %v1696
    %v2635 = vpop.f32.mrf.mxu0
    %v2636 = vadd.f32 %v2475, %v2635
    %v2637 = vpop.f32.mrf.mxu0
    %v2638 = vadd.f32 %v2477, %v2637
    %2639 = vmatprep.mubr.f32.mxu0 %v1702
    %2640 = vmatmul.mubr.f32.gmra.mxu0 %v1701
    %v2641 = vpop.f32.mrf.mxu0
    %v2642 = vadd.f32 %v2481, %v2641
    %v2643 = vpop.f32.mrf.mxu0
    %v2644 = vadd.f32 %v2483, %v2643
    %2645 = vmatprep.mubr.f32.mxu0 %v1707
    %2646 = vmatmul.mubr.f32.gmra.mxu0 %v1706
    %v2647 = vpop.f32.mrf.mxu0
    %v2648 = vadd.f32 %v2487, %v2647
    %v2649 = vpop.f32.mrf.mxu0
    %v2650 = vadd.f32 %v2489, %v2649
    %2651 = vmatprep.mubr.f32.mxu0 %v1712
    %2652 = vmatmul.mubr.f32.gmra.mxu0 %v1711
    %v2653 = vpop.f32.mrf.mxu0
    %v2654 = vadd.f32 %v2493, %v2653
    %v2655 = vpop.f32.mrf.mxu0
    %v2656 = vadd.f32 %v2495, %v2655
    %2657 = vmatprep.mubr.f32.mxu0 %v1717
    %2658 = vmatmul.mubr.f32.gmra.mxu0 %v1716
    %v2659 = vpop.f32.mrf.mxu0
    %v2660 = vadd.f32 %v2499, %v2659
    %v2661 = vpop.f32.mrf.mxu0
    %v2662 = vadd.f32 %v2501, %v2661
    %2663 = vmatprep.mubr.f32.mxu0 %v1722
    %2664 = vmatmul.mubr.f32.gmra.mxu0 %v1721
    %v2665 = vpop.f32.mrf.mxu0
    %v2666 = vadd.f32 %v2505, %v2665
    %v2667 = vpop.f32.mrf.mxu0
    %v2668 = vadd.f32 %v2507, %v2667
    %2669 = vmatprep.mubr.f32.mxu0 %v1727
    %2670 = vmatmul.mubr.f32.gmra.mxu0 %v1726
    %v2671 = vpop.f32.mrf.mxu0
    %v2672 = vadd.f32 %v2511, %v2671
    %v2673 = vpop.f32.mrf.mxu0
    %v2674 = vadd.f32 %v2513, %v2673
    %2675 = vmatprep.mubr.f32.mxu0 %v1732
    %2676 = vmatmul.mubr.f32.gmra.mxu0 %v1731
    %v2677 = vpop.f32.mrf.mxu0
    %v2678 = vadd.f32 %v2517, %v2677
    %v2679 = vpop.f32.mrf.mxu0
    %v2680 = vadd.f32 %v2519, %v2679
    %2681 = vmatprep.mubr.f32.mxu0 %v1737
    %2682 = vmatmul.mubr.f32.gmra.mxu0 %v1736
    %v2683 = vpop.f32.mrf.mxu0
    %v2684 = vadd.f32 %v2523, %v2683
    %v2685 = vpop.f32.mrf.mxu0
    %v2686 = vadd.f32 %v2525, %v2685
    %2687 = vmatprep.mubr.f32.mxu0 %v1742
    %2688 = vmatmul.mubr.f32.gmra.mxu0 %v1741
    %v2689 = vpop.f32.mrf.mxu0
    %v2690 = vadd.f32 %v2529, %v2689
    %v2691 = vpop.f32.mrf.mxu0
    %v2692 = vadd.f32 %v2531, %v2691
    %2693 = vdwg.mxu0
    %2694 = vmatprep.subr.mxu0 0.0
    %2695 = vmatpush1.msra.mxu0 0.0
    %2696 = vmatprep.subr.mxu0 0.0
    %2697 = vmatpush1.msra.mxu0 0.0
    %2698 = vmatprep.subr.mxu0 0.0
    %2699 = vmatpush1.msra.mxu0 0.0
    %2700 = vmatprep.subr.mxu0 0.0
    %2701 = vmatpush1.msra.mxu0 0.0
    %2702 = vmatprep.subr.mxu0 0.0
    %2703 = vmatpush1.msra.mxu0 0.0
    %2704 = vmatprep.subr.mxu0 0.0
    %2705 = vmatpush1.msra.mxu0 0.0
    %2706 = vmatprep.subr.mxu0 0.0
    %2707 = vmatpush1.msra.mxu0 0.0
    %2708 = vmatprep.subr.mxu0 0.0
    %2709 = vmatpush1.msra.mxu0 0.0
    %2710 = vmatprep.subr.mxu0 %v1663
    %2711 = vmatpush1.msra.mxu0 %v1662
    %2712 = vmatprep.subr.mxu0 %v1659
    %2713 = vmatpush1.msra.mxu0 %v1658
    %2714 = vmatprep.subr.mxu0 %v1655
    %2715 = vmatpush1.msra.mxu0 %v1654
    %2716 = vmatprep.subr.mxu0 %v1651
    %2717 = vmatpush1.msra.mxu0 %v1650
    %2718 = vmatprep.subr.mxu0 %v1647
    %2719 = vmatpush1.msra.mxu0 %v1646
    %2720 = vmatprep.subr.mxu0 %v1643
    %2721 = vmatpush1.msra.mxu0 %v1642
    %2722 = vmatprep.subr.mxu0 %v1639
    %2723 = vmatpush1.msra.mxu0 %v1638
    %2724 = vmatprep.subr.mxu0 %v1635
    %2725 = vmatpush1.msra.mxu0 %v1634
    %2726 = vmatprep.subr.mxu0 0.0
    %2727 = vmatpush2.msra.mxu0 0.0
    %2728 = vmatprep.subr.mxu0 0.0
    %2729 = vmatpush2.msra.mxu0 0.0
    %2730 = vmatprep.subr.mxu0 0.0
    %2731 = vmatpush2.msra.mxu0 0.0
    %2732 = vmatprep.subr.mxu0 0.0
    %2733 = vmatpush2.msra.mxu0 0.0
    %2734 = vmatprep.subr.mxu0 0.0
    %2735 = vmatpush2.msra.mxu0 0.0
    %2736 = vmatprep.subr.mxu0 0.0
    %2737 = vmatpush2.msra.mxu0 0.0
    %2738 = vmatprep.subr.mxu0 0.0
    %2739 = vmatpush2.msra.mxu0 0.0
    %2740 = vmatprep.subr.mxu0 0.0
    %2741 = vmatpush2.msra.mxu0 0.0
    %2742 = vmatprep.subr.mxu0 0.0
    %2743 = vmatpush2.msra.mxu0 0.0
    %2744 = vmatprep.subr.mxu0 0.0
    %2745 = vmatpush2.msra.mxu0 0.0
    %2746 = vmatprep.subr.mxu0 0.0
    %2747 = vmatpush2.msra.mxu0 0.0
    %2748 = vmatprep.subr.mxu0 0.0
    %2749 = vmatpush2.msra.mxu0 0.0
    %2750 = vmatprep.subr.mxu0 0.0
    %2751 = vmatpush2.msra.mxu0 0.0
    %2752 = vmatprep.subr.mxu0 0.0
    %2753 = vmatpush2.msra.mxu0 0.0
    %2754 = vmatprep.subr.mxu0 0.0
    %2755 = vmatpush2.msra.mxu0 0.0
    %2756 = vmatprep.subr.mxu0 0.0
    %2757 = vmatpush2.msra.mxu0 0.0
    %2758 = vmatprep.mubr.f32.mxu0 0.0
    %2759 = vmatmul.mubr.f32.gmra.mxu0 %v1842
    %v2760 = vpop.f32.mrf.mxu0
    %v2761 = vadd.f32 %v2600, %v2760
    %v2762 = vpop.f32.mrf.mxu0
    %v2763 = vadd.f32 %v2602, %v2762
    %2764 = vmatprep.mubr.f32.mxu0 0.0
    %2765 = vmatmul.mubr.f32.gmra.mxu0 %v1845
    %v2766 = vpop.f32.mrf.mxu0
    %v2767 = vadd.f32 %v2606, %v2766
    %v2768 = vpop.f32.mrf.mxu0
    %v2769 = vadd.f32 %v2608, %v2768
    %2770 = vmatprep.mubr.f32.mxu0 0.0
    %2771 = vmatmul.mubr.f32.gmra.mxu0 %v1848
    %v2772 = vpop.f32.mrf.mxu0
    %v2773 = vadd.f32 %v2612, %v2772
    %v2774 = vpop.f32.mrf.mxu0
    %v2775 = vadd.f32 %v2614, %v2774
    %2776 = vmatprep.mubr.f32.mxu0 0.0
    %2777 = vmatmul.mubr.f32.gmra.mxu0 %v1851
    %v2778 = vpop.f32.mrf.mxu0
    %v2779 = vadd.f32 %v2618, %v2778
    %v2780 = vpop.f32.mrf.mxu0
    %v2781 = vadd.f32 %v2620, %v2780
    %2782 = vmatprep.mubr.f32.mxu0 0.0
    %2783 = vmatmul.mubr.f32.gmra.mxu0 %v1854
    %v2784 = vpop.f32.mrf.mxu0
    %v2785 = vadd.f32 %v2624, %v2784
    %v2786 = vpop.f32.mrf.mxu0
    %v2787 = vadd.f32 %v2626, %v2786
    %2788 = vmatprep.mubr.f32.mxu0 0.0
    %2789 = vmatmul.mubr.f32.gmra.mxu0 %v1857
    %v2790 = vpop.f32.mrf.mxu0
    %v2791 = vadd.f32 %v2630, %v2790
    %v2792 = vpop.f32.mrf.mxu0
    %v2793 = vadd.f32 %v2632, %v2792
    %2794 = vmatprep.mubr.f32.mxu0 0.0
    %2795 = vmatmul.mubr.f32.gmra.mxu0 %v1860
    %v2796 = vpop.f32.mrf.mxu0
    %v2797 = vadd.f32 %v2636, %v2796
    %v2798 = vpop.f32.mrf.mxu0
    %v2799 = vadd.f32 %v2638, %v2798
    %2800 = vmatprep.mubr.f32.mxu0 0.0
    %2801 = vmatmul.mubr.f32.gmra.mxu0 %v1863
    %v2802 = vpop.f32.mrf.mxu0
    %v2803 = vadd.f32 %v2642, %v2802
    %v2804 = vpop.f32.mrf.mxu0
    %v2805 = vadd.f32 %v2644, %v2804
    %2806 = vmatprep.mubr.f32.mxu0 0.0
    %2807 = vmatmul.mubr.f32.gmra.mxu0 %v1866
    %v2808 = vpop.f32.mrf.mxu0
    %v2809 = vadd.f32 %v2648, %v2808
    %v2810 = vpop.f32.mrf.mxu0
    %v2811 = vadd.f32 %v2650, %v2810
    %2812 = vmatprep.mubr.f32.mxu0 0.0
    %2813 = vmatmul.mubr.f32.gmra.mxu0 %v1869
    %v2814 = vpop.f32.mrf.mxu0
    %v2815 = vadd.f32 %v2654, %v2814
    %v2816 = vpop.f32.mrf.mxu0
    %v2817 = vadd.f32 %v2656, %v2816
    %2818 = vmatprep.mubr.f32.mxu0 0.0
    %2819 = vmatmul.mubr.f32.gmra.mxu0 %v1872
    %v2820 = vpop.f32.mrf.mxu0
    %v2821 = vadd.f32 %v2660, %v2820
    %v2822 = vpop.f32.mrf.mxu0
    %v2823 = vadd.f32 %v2662, %v2822
    %2824 = vmatprep.mubr.f32.mxu0 0.0
    %2825 = vmatmul.mubr.f32.gmra.mxu0 %v1875
    %v2826 = vpop.f32.mrf.mxu0
    %v2827 = vadd.f32 %v2666, %v2826
    %v2828 = vpop.f32.mrf.mxu0
    %v2829 = vadd.f32 %v2668, %v2828
    %2830 = vmatprep.mubr.f32.mxu0 0.0
    %2831 = vmatmul.mubr.f32.gmra.mxu0 %v1878
    %v2832 = vpop.f32.mrf.mxu0
    %v2833 = vadd.f32 %v2672, %v2832
    %v2834 = vpop.f32.mrf.mxu0
    %v2835 = vadd.f32 %v2674, %v2834
    %2836 = vmatprep.mubr.f32.mxu0 0.0
    %2837 = vmatmul.mubr.f32.gmra.mxu0 %v1881
    %v2838 = vpop.f32.mrf.mxu0
    %v2839 = vadd.f32 %v2678, %v2838
    %v2840 = vpop.f32.mrf.mxu0
    %v2841 = vadd.f32 %v2680, %v2840
    %2842 = vmatprep.mubr.f32.mxu0 0.0
    %2843 = vmatmul.mubr.f32.gmra.mxu0 %v1884
    %v2844 = vpop.f32.mrf.mxu0
    %v2845 = vadd.f32 %v2684, %v2844
    %v2846 = vpop.f32.mrf.mxu0
    %v2847 = vadd.f32 %v2686, %v2846
    %2848 = vmatprep.mubr.f32.mxu0 0.0
    %2849 = vmatmul.mubr.f32.gmra.mxu0 %v1887
    %v2850 = vpop.f32.mrf.mxu0
    %v2851 = vadd.f32 %v2690, %v2850
    %v2852 = vpop.f32.mrf.mxu0
    %v2853 = vadd.f32 %v2692, %v2852
    %2854 = vdwg.mxu0
    %v2855 = vmax.f32 %v2278, 0.0
    %v2856 = vmax.f32 %v2280, 0.0
    %v2857 = vmax.f32 %v2761, 0.0
    %v2858 = vmax.f32 %v2763, 0.0
    %v2859 = vmax.f32 %v2284, 0.0
    %v2860 = vmax.f32 %v2286, 0.0
    %v2861 = vmax.f32 %v2767, 0.0
    %v2862 = vmax.f32 %v2769, 0.0
    %v2863 = vmax.f32 %v2290, 0.0
    %v2864 = vmax.f32 %v2292, 0.0
    %v2865 = vmax.f32 %v2773, 0.0
    %v2866 = vmax.f32 %v2775, 0.0
    %v2867 = vmax.f32 %v2296, 0.0
    %v2868 = vmax.f32 %v2298, 0.0
    %v2869 = vmax.f32 %v2779, 0.0
    %v2870 = vmax.f32 %v2781, 0.0
    %v2871 = vmax.f32 %v2302, 0.0
    %v2872 = vmax.f32 %v2304, 0.0
    %v2873 = vmax.f32 %v2785, 0.0
    %v2874 = vmax.f32 %v2787, 0.0
    %v2875 = vmax.f32 %v2308, 0.0
    %v2876 = vmax.f32 %v2310, 0.0
    %v2877 = vmax.f32 %v2791, 0.0
    %v2878 = vmax.f32 %v2793, 0.0
    %v2879 = vmax.f32 %v2314, 0.0
    %v2880 = vmax.f32 %v2316, 0.0
    %v2881 = vmax.f32 %v2797, 0.0
    %v2882 = vmax.f32 %v2799, 0.0
    %v2883 = vmax.f32 %v2320, 0.0
    %v2884 = vmax.f32 %v2322, 0.0
    %v2885 = vmax.f32 %v2803, 0.0
    %v2886 = vmax.f32 %v2805, 0.0
    %v2887 = vmax.f32 %v2326, 0.0
    %v2888 = vmax.f32 %v2328, 0.0
    %v2889 = vmax.f32 %v2809, 0.0
    %v2890 = vmax.f32 %v2811, 0.0
    %v2891 = vmax.f32 %v2332, 0.0
    %v2892 = vmax.f32 %v2334, 0.0
    %v2893 = vmax.f32 %v2815, 0.0
    %v2894 = vmax.f32 %v2817, 0.0
    %v2895 = vmax.f32 %v2338, 0.0
    %v2896 = vmax.f32 %v2340, 0.0
    %v2897 = vmax.f32 %v2821, 0.0
    %v2898 = vmax.f32 %v2823, 0.0
    %v2899 = vmax.f32 %v2344, 0.0
    %v2900 = vmax.f32 %v2346, 0.0
    %v2901 = vmax.f32 %v2827, 0.0
    %v2902 = vmax.f32 %v2829, 0.0
    %v2903 = vmax.f32 %v2350, 0.0
    %v2904 = vmax.f32 %v2352, 0.0
    %v2905 = vmax.f32 %v2833, 0.0
    %v2906 = vmax.f32 %v2835, 0.0
    %v2907 = vmax.f32 %v2356, 0.0
    %v2908 = vmax.f32 %v2358, 0.0
    %v2909 = vmax.f32 %v2839, 0.0
    %v2910 = vmax.f32 %v2841, 0.0
    %v2911 = vmax.f32 %v2362, 0.0
    %v2912 = vmax.f32 %v2364, 0.0
    %v2913 = vmax.f32 %v2845, 0.0
    %v2914 = vmax.f32 %v2847, 0.0
    %v2915 = vmax.f32 %v2368, 0.0
    %v2916 = vmax.f32 %v2370, 0.0
    %v2917 = vmax.f32 %v2851, 0.0
    %v2918 = vmax.f32 %v2853, 0.0
    %v2919 = vld [vmem:[%s6] sm:$0xff]
    %v2920 = vld [vmem:[%s6 + $0x8] sm:$0xff]
    %v2921 = vld [vmem:[%s6 + $0x10] sm:$0xff]
    %v2922 = vld [vmem:[%s6 + $0x18] sm:$0xff]
    %v2923 = vld [vmem:[%s6 + $0x20] sm:$0xff]
    %v2924 = vld [vmem:[%s6 + $0x28] sm:$0xff]
    %v2925 = vld [vmem:[%s6 + $0x30] sm:$0xff]
    %v2926 = vld [vmem:[%s6 + $0x38] sm:$0xff]
    %v2927 = vld [vmem:[%s6 + $0x40] sm:$0xff]
    %v2928 = vld [vmem:[%s6 + $0x48] sm:$0xff]
    %v2929 = vld [vmem:[%s6 + $0x50] sm:$0xff]
    %v2930 = vld [vmem:[%s6 + $0x58] sm:$0xff]
    %v2931 = vld [vmem:[%s6 + $0x60] sm:$0xff]
    %v2932 = vld [vmem:[%s6 + $0x68] sm:$0xff]
    %v2933 = vld [vmem:[%s6 + $0x70] sm:$0xff]
    %v2934 = vld [vmem:[%s6 + $0x78] sm:$0xff]
    %2936 = vset.pattern.permute.xlu0 0
    %2937 = vperm.xlu0 %2936, %v2919
    %v2938 = vpop.permute.xlu0 %2937
    %2941 = vset.pattern.permute.xlu0 0
    %2942 = vperm.xlu0 %2941, %v2920
    %v2943 = vpop.permute.xlu0 %2942
    %2946 = vset.pattern.permute.xlu0 0
    %2947 = vperm.xlu0 %2946, %v2921
    %v2948 = vpop.permute.xlu0 %2947
    %2951 = vset.pattern.permute.xlu0 0
    %2952 = vperm.xlu0 %2951, %v2922
    %v2953 = vpop.permute.xlu0 %2952
    %2956 = vset.pattern.permute.xlu0 0
    %2957 = vperm.xlu0 %2956, %v2923
    %v2958 = vpop.permute.xlu0 %2957
    %2961 = vset.pattern.permute.xlu0 0
    %2962 = vperm.xlu0 %2961, %v2924
    %v2963 = vpop.permute.xlu0 %2962
    %2966 = vset.pattern.permute.xlu0 0
    %2967 = vperm.xlu0 %2966, %v2925
    %v2968 = vpop.permute.xlu0 %2967
    %2971 = vset.pattern.permute.xlu0 0
    %2972 = vperm.xlu0 %2971, %v2926
    %v2973 = vpop.permute.xlu0 %2972
    %2976 = vset.pattern.permute.xlu0 0
    %2977 = vperm.xlu0 %2976, %v2927
    %v2978 = vpop.permute.xlu0 %2977
    %2981 = vset.pattern.permute.xlu0 0
    %2982 = vperm.xlu0 %2981, %v2928
    %v2983 = vpop.permute.xlu0 %2982
    %2986 = vset.pattern.permute.xlu0 0
    %2987 = vperm.xlu0 %2986, %v2929
    %v2988 = vpop.permute.xlu0 %2987
    %2991 = vset.pattern.permute.xlu0 0
    %2992 = vperm.xlu0 %2991, %v2930
    %v2993 = vpop.permute.xlu0 %2992
    %2996 = vset.pattern.permute.xlu0 0
    %2997 = vperm.xlu0 %2996, %v2931
    %v2998 = vpop.permute.xlu0 %2997
    %3001 = vset.pattern.permute.xlu0 0
    %3002 = vperm.xlu0 %3001, %v2932
    %v3003 = vpop.permute.xlu0 %3002
    %3006 = vset.pattern.permute.xlu0 0
    %3007 = vperm.xlu0 %3006, %v2933
    %v3008 = vpop.permute.xlu0 %3007
    %3011 = vset.pattern.permute.xlu0 0
    %3012 = vperm.xlu0 %3011, %v2934
    %v3013 = vpop.permute.xlu0 %3012
    %v3015 = vmul.f32 %v2855, %v2938
    %v3016 = vmul.f32 %v2856, %v2938
    %v3017 = vmul.f32 %v2857, %v2938
    %v3018 = vmul.f32 %v2858, %v2938
    %v3019 = vmul.f32 %v2859, %v2943
    %v3020 = vmul.f32 %v2860, %v2943
    %v3021 = vmul.f32 %v2861, %v2943
    %v3022 = vmul.f32 %v2862, %v2943
    %v3023 = vmul.f32 %v2863, %v2948
    %v3024 = vmul.f32 %v2864, %v2948
    %v3025 = vmul.f32 %v2865, %v2948
    %v3026 = vmul.f32 %v2866, %v2948
    %v3027 = vmul.f32 %v2867, %v2953
    %v3028 = vmul.f32 %v2868, %v2953
    %v3029 = vmul.f32 %v2869, %v2953
    %v3030 = vmul.f32 %v2870, %v2953
    %v3031 = vmul.f32 %v2871, %v2958
    %v3032 = vmul.f32 %v2872, %v2958
    %v3033 = vmul.f32 %v2873, %v2958
    %v3034 = vmul.f32 %v2874, %v2958
    %v3035 = vmul.f32 %v2875, %v2963
    %v3036 = vmul.f32 %v2876, %v2963
    %v3037 = vmul.f32 %v2877, %v2963
    %v3038 = vmul.f32 %v2878, %v2963
    %v3039 = vmul.f32 %v2879, %v2968
    %v3040 = vmul.f32 %v2880, %v2968
    %v3041 = vmul.f32 %v2881, %v2968
    %v3042 = vmul.f32 %v2882, %v2968
    %v3043 = vmul.f32 %v2883, %v2973
    %v3044 = vmul.f32 %v2884, %v2973
    %v3045 = vmul.f32 %v2885, %v2973
    %v3046 = vmul.f32 %v2886, %v2973
    %v3047 = vmul.f32 %v2887, %v2978
    %v3048 = vmul.f32 %v2888, %v2978
    %v3049 = vmul.f32 %v2889, %v2978
    %v3050 = vmul.f32 %v2890, %v2978
    %v3051 = vmul.f32 %v2891, %v2983
    %v3052 = vmul.f32 %v2892, %v2983
    %v3053 = vmul.f32 %v2893, %v2983
    %v3054 = vmul.f32 %v2894, %v2983
    %v3055 = vmul.f32 %v2895, %v2988
    %v3056 = vmul.f32 %v2896, %v2988
    %v3057 = vmul.f32 %v2897, %v2988
    %v3058 = vmul.f32 %v2898, %v2988
    %v3059 = vmul.f32 %v2899, %v2993
    %v3060 = vmul.f32 %v2900, %v2993
    %v3061 = vmul.f32 %v2901, %v2993
    %v3062 = vmul.f32 %v2902, %v2993
    %v3063 = vmul.f32 %v2903, %v2998
    %v3064 = vmul.f32 %v2904, %v2998
    %v3065 = vmul.f32 %v2905, %v2998
    %v3066 = vmul.f32 %v2906, %v2998
    %v3067 = vmul.f32 %v2907, %v3003
    %v3068 = vmul.f32 %v2908, %v3003
    %v3069 = vmul.f32 %v2909, %v3003
    %v3070 = vmul.f32 %v2910, %v3003
    %v3071 = vmul.f32 %v2911, %v3008
    %v3072 = vmul.f32 %v2912, %v3008
    %v3073 = vmul.f32 %v2913, %v3008
    %v3074 = vmul.f32 %v2914, %v3008
    %v3075 = vmul.f32 %v2915, %v3013
    %v3076 = vmul.f32 %v2916, %v3013
    %v3077 = vmul.f32 %v2917, %v3013
    %v3078 = vmul.f32 %v2918, %v3013
    %v3079 = vadd.f32 %v3015, %v3019
    %v3080 = vadd.f32 %v3079, %v3023
    %v3081 = vadd.f32 %v3080, %v3027
    %v3082 = vadd.f32 %v3081, %v3031
    %v3083 = vadd.f32 %v3082, %v3035
    %v3084 = vadd.f32 %v3083, %v3039
    %v3085 = vadd.f32 %v3084, %v3043
    %v3086 = vadd.f32 %v3085, %v3047
    %v3087 = vadd.f32 %v3086, %v3051
    %v3088 = vadd.f32 %v3087, %v3055
    %v3089 = vadd.f32 %v3088, %v3059
    %v3090 = vadd.f32 %v3089, %v3063
    %v3091 = vadd.f32 %v3090, %v3067
    %v3092 = vadd.f32 %v3091, %v3071
    %v3093 = vadd.f32 %v3092, %v3075
    %v3094 = vrot.slane %v3093, 4
    %v3095 = vadd.f32 %v3093, %v3094
    %v3096 = vrot.slane %v3095, 2
    %v3097 = vadd.f32 %v3095, %v3096
    %v3098 = vrot.slane %v3097, 1
    %v3099 = vadd.f32 %v3097, %v3098
    %v3100 = vadd.f32 %v3016, %v3020
    %v3101 = vadd.f32 %v3100, %v3024
    %v3102 = vadd.f32 %v3101, %v3028
    %v3103 = vadd.f32 %v3102, %v3032
    %v3104 = vadd.f32 %v3103, %v3036
    %v3105 = vadd.f32 %v3104, %v3040
    %v3106 = vadd.f32 %v3105, %v3044
    %v3107 = vadd.f32 %v3106, %v3048
    %v3108 = vadd.f32 %v3107, %v3052
    %v3109 = vadd.f32 %v3108, %v3056
    %v3110 = vadd.f32 %v3109, %v3060
    %v3111 = vadd.f32 %v3110, %v3064
    %v3112 = vadd.f32 %v3111, %v3068
    %v3113 = vadd.f32 %v3112, %v3072
    %v3114 = vadd.f32 %v3113, %v3076
    %v3115 = vrot.slane %v3114, 4
    %v3116 = vadd.f32 %v3114, %v3115
    %v3117 = vrot.slane %v3116, 2
    %v3118 = vadd.f32 %v3116, %v3117
    %v3119 = vrot.slane %v3118, 1
    %v3120 = vadd.f32 %v3118, %v3119
    %v3121 = vadd.f32 %v3017, %v3021
    %v3122 = vadd.f32 %v3121, %v3025
    %v3123 = vadd.f32 %v3122, %v3029
    %v3124 = vadd.f32 %v3123, %v3033
    %v3125 = vadd.f32 %v3124, %v3037
    %v3126 = vadd.f32 %v3125, %v3041
    %v3127 = vadd.f32 %v3126, %v3045
    %v3128 = vadd.f32 %v3127, %v3049
    %v3129 = vadd.f32 %v3128, %v3053
    %v3130 = vadd.f32 %v3129, %v3057
    %v3131 = vadd.f32 %v3130, %v3061
    %v3132 = vadd.f32 %v3131, %v3065
    %v3133 = vadd.f32 %v3132, %v3069
    %v3134 = vadd.f32 %v3133, %v3073
    %v3135 = vadd.f32 %v3134, %v3077
    %v3136 = vrot.slane %v3135, 4
    %v3137 = vadd.f32 %v3135, %v3136
    %v3138 = vrot.slane %v3137, 2
    %v3139 = vadd.f32 %v3137, %v3138
    %v3140 = vrot.slane %v3139, 1
    %v3141 = vadd.f32 %v3139, %v3140
    %v3142 = vadd.f32 %v3018, %v3022
    %v3143 = vadd.f32 %v3142, %v3026
    %v3144 = vadd.f32 %v3143, %v3030
    %v3145 = vadd.f32 %v3144, %v3034
    %v3146 = vadd.f32 %v3145, %v3038
    %v3147 = vadd.f32 %v3146, %v3042
    %v3148 = vadd.f32 %v3147, %v3046
    %v3149 = vadd.f32 %v3148, %v3050
    %v3150 = vadd.f32 %v3149, %v3054
    %v3151 = vadd.f32 %v3150, %v3058
    %v3152 = vadd.f32 %v3151, %v3062
    %v3153 = vadd.f32 %v3152, %v3066
    %v3154 = vadd.f32 %v3153, %v3070
    %v3155 = vadd.f32 %v3154, %v3074
    %v3156 = vadd.f32 %v3155, %v3078
    %v3157 = vrot.slane %v3156, 4
    %v3158 = vadd.f32 %v3156, %v3157
    %v3159 = vrot.slane %v3158, 2
    %v3160 = vadd.f32 %v3158, %v3159
    %v3161 = vrot.slane %v3160, 1
    %v3162 = vadd.f32 %v3160, %v3161
    %v3163 = vld [vmem:[#allocation2] sm:$0x1]
    %3165 = vset.pattern.permute.xlu0 0
    %3166 = vperm.xlu0 %3165, %v3163
    %v3167 = vpop.permute.xlu0 %3166
    %v3169 = vlaneseq
    %v3170 = vshrl.u32 %v3169, 7
    %v3171 = vsub.s32 0, %v3170
    %v3172 = vrot.slane %v3167, %v3171
    %v3173 = vadd.f32 %v3099, %v3172
    %v3174 = vadd.f32 %v3120, %v3172
    %v3175 = vadd.f32 %v3141, %v3172
    %v3176 = vadd.f32 %v3162, %v3172
    %v3177 = vxor.u32 %v3173, 2147483648
    %v3178 = vxor.u32 %v3174, 2147483648
    %v3179 = vxor.u32 %v3175, 2147483648
    %v3180 = vxor.u32 %v3176, 2147483648
    %v3181 = vmul.f32 %v3177, 1.442695
    %v3182 = vpow.pop %v3181
    %v3183 = vmul.f32 %v3178, 1.442695
    %v3184 = vpow.pop %v3183
    %v3185 = vmul.f32 %v3179, 1.442695
    %v3186 = vpow.pop %v3185
    %v3187 = vmul.f32 %v3180, 1.442695
    %v3188 = vpow.pop %v3187
    %v3189 = vadd.f32 %v3182, 1.0
    %v3190 = vadd.f32 %v3184, 1.0
    %v3191 = vadd.f32 %v3186, 1.0
    %v3192 = vadd.f32 %v3188, 1.0
    %v3193 = vrcp.pop %v3189
    %v3194 = vmul.f32 1.0, %v3193
    %v3195 = vrcp.pop %v3190
    %v3196 = vmul.f32 1.0, %v3195
    %v3197 = vrcp.pop %v3191
    %v3198 = vmul.f32 1.0, %v3197
    %v3199 = vrcp.pop %v3192
    %v3200 = vmul.f32 1.0, %v3199
    %v3205 = vcombine.low %v3194, %v3196
    %v3206 = vcombine.low %v3198, %v3200
    %v3208 = vunpack.c.l.s4 1966171168
    %v3209 = vunpack.c.0.s8 %v3208
    %v3210 = vlaneseq
    %v3211 = vshrl.u32 %v3210, 7
    %v3212 = vsub.s32 %v3209, %v3211
    %v3213 = vrot.slane %v3205, %v3212
    %v3215 = vunpack.c.l.s4 1966171168
    %v3216 = vunpack.c.0.s8 %v3215
    %v3217 = vlaneseq
    %v3218 = vshrl.u32 %v3217, 7
    %v3219 = vsub.s32 %v3216, %v3218
    %v3220 = vrot.slane %v3206, %v3219
    %v3221 = vcombine.low %v3213, %v3220
    %v3223 = vunpack.c.l.s4 1966171168
    %v3224 = vunpack.c.0.s8 %v3223
    %v3225 = vlaneseq
    %v3226 = vshrl.u32 %v3225, 7
    %v3227 = vsub.s32 %v3224, %v3226
    %v3228 = vrot.slane %v3221, %v3227
    %v3230 = vlaneseq
    %vm3231 = vcmp.ge.s32.totalorder %v3230, 0
    %vm3232 = vcmp.lt.s32.totalorder %v3230, 512
    %vm3233 = vmand %vm3231, %vm3232
    %3234 = vst.msk [vmem:[#allocation3] sm:$0xf] %vm3233, %v3228
    // Predicated region
    $region34: #{tpu_custom_call.1} parent=1 // pred_check
      _
    $region35: #{tpu_custom_call.1} parent=1 // pred_check_branch
      %3236 = sbr.rel (0) target = $region37
    $region36: #{tpu_custom_call.1} parent=1 // pred_region
      %s3238 = ssub.s32 64, 64
      %3239 = vsyncadd [#allocation4], %s3238
      %s3241 = sshll.u32 [#allocation3], 4
      %s3242 = int_to_ptr.vmem [resolvable:$true] %s3241
      %3244 = dma.vmem_to_hbm [thread:$0]  %s3242, 64, %s8, [#allocation4]
    $region37: #{tpu_custom_call.1} parent=1 // pred_fallthru
      _
    // Predicated region
    $region38: #{tpu_custom_call.1} parent=1 // pred_check
      _
    $region39: #{tpu_custom_call.1} parent=1 // pred_check_branch
      %3246 = sbr.rel (0) target = $region41
    $region40: #{tpu_custom_call.1} parent=1 // pred_region
      %3247 = dma.done [#allocation4], 64
    $region41: #{tpu_custom_call.1} parent=1 // pred_fallthru
      _
    %3248 = vsyncpa [#allocation4], 1

</llo_original>
